<compile_context>
chip_gen: v6e
topology: v6e:2x2x1
jax: 0.10.0
libtpu: 0.0.40
codegen_flags: <defaults>
</compile_context>

<pallas_src>
import functools

import jax
import jax.numpy as jnp
from jax import lax
from jax.experimental import pallas as pl
from jax.experimental.pallas import tpu as pltpu

# ---- module hyperparameters (the PyTorch file's globals, self-consistent with
#      the forward's reshapes) ------------------------------------------------
NUM_TRANSMIT  = 8            # Conv1d input channels == x.shape[2]
KERNEL_SIZE   = 7
STRIDE        = 4
PADDING       = 3
time_channels = [16, 4]      # A * time_channels[-1] == NUM_TRANSMIT
dropout       = 0.1          # identity at inference
EMB_SIZE      = 32
BN_EPS        = 1e-5

B, A, T = 2, 2, 64           # input x: (B, A, NUM_TRANSMIT, T)


def conv_out_len(L, K, stride, pad):
    return (L + 2 * pad - K) // stride + 1


# derived lengths of the conv stack (structure is fixed by the module spec)
L1 = conv_out_len(T, KERNEL_SIZE, STRIDE, PADDING)   # 16  (conv1: K=7, s=4, p=3)
L2 = conv_out_len(L1, 2, 2, 1)                       # 9   (conv2: K=2, s=2, p=1)
L3 = conv_out_len(L2, 3, 1, 1)                       # 9   (conv3: K=3, s=1, p=1)
SIG_OUT_SIZE = L3

assert A * time_channels[-1] == NUM_TRANSMIT
assert L1 % 2 == 0 and L2 == L1 // 2 + 1 and L3 == L2


# --------------------------- Pallas kernel ----------------------------------
def _band(rows, cols, k):
    """Band matrix M[r, c] = 1.0 iff c == r + k (2-D iota + compare; VPU only)."""
    r = lax.broadcasted_iota(jnp.int32, (rows, cols), 0)
    c = lax.broadcasted_iota(jnp.int32, (rows, cols), 1)
    return (c == r + k).astype(jnp.float32)


def _signal_reduce_kernel(pe_ref, po_ref, w1_ref, w2_ref, w3_ref, fcw_ref,
                          bias_ref, fcb_ref, o_ref, *, n_group, l_half, c1, c3, l2):
    """Whole SignalReduce forward; all intermediates live in VMEM/vregs.

    pe/po : (n_group*l_half, K*Cin) im2col rows of conv1 for even/odd positions
    w1/w2/w3 : BN-folded conv weights in [k*cin+ci, co] layout
    fcw : (EMB, SIG_OUT)   fcb : (EMB, 1)   bias pack: rows = b1, b2, b3(+pad)
    o_ref : (n_group, EMB, c3)  -- final Linear output, transposed per group
    """
    f32 = jnp.float32
    bp = bias_ref[...]                  # (4, c1)
    b1 = bp[0:1, :]                     # (1, 16)
    b2 = bp[1:2, :]                     # (1, 16)
    b3 = bp[2:3, 0:c3]                  # (1, 4)
    w1 = w1_ref[...]                    # (56, 16)
    w2 = w2_ref[...]                    # (32, 16)
    w3 = w3_ref[...]                    # (48, 4)
    fcw = fcw_ref[...]                  # (32, 9)
    fcb = fcb_ref[...]                  # (32, 1)

    # ---- conv1 (+ folded BN) + ReLU, split by even/odd output position ------
    h1e = jnp.maximum(jnp.dot(pe_ref[...], w1, preferred_element_type=f32) + b1, 0.0)
    h1o = jnp.maximum(jnp.dot(po_ref[...], w1, preferred_element_type=f32) + b1, 0.0)

    # ---- conv2 taps (K=2, stride=2, pad=1): tap0 hits h1[2r-1], tap1 h1[2r] --
    a_all = jnp.dot(h1o, w2[0:c1, :], preferred_element_type=f32)        # (32, 16)
    b_all = jnp.dot(h1e, w2[c1:2 * c1, :], preferred_element_type=f32)   # (32, 16)

    # Row-shift band matrices (replace unaligned concats/pads with MXU matmuls).
    sa  = _band(l2, l_half, -1)     # out row r <- tap0 row r-1   (zero at r=0)
    sb  = _band(l2, l_half, 0)      # out row r <- tap1 row r     (zero at r=l2-1)
    sdn = _band(l2, l2, -1)         # conv3 left-neighbour shift
    sup = _band(l2, l2, 1)          # conv3 right-neighbour shift

    for n in range(n_group):        # static unroll (n_group = 4); 8-row aligned slices
        an = a_all[n * l_half:(n + 1) * l_half, :]                       # (8, 16)
        bn = b_all[n * l_half:(n + 1) * l_half, :]                       # (8, 16)
        o2 = jnp.maximum(jnp.dot(sa, an, preferred_element_type=f32)
                         + jnp.dot(sb, bn, preferred_element_type=f32)
                         + b2, 0.0)                                       # (9, 16)

        # conv3 (K=3, stride=1, pad=1) + folded BN + ReLU
        p0 = jnp.dot(sdn, jnp.dot(o2, w3[0:c1, :], preferred_element_type=f32),
                     preferred_element_type=f32)
        p1 = jnp.dot(o2, w3[c1:2 * c1, :], preferred_element_type=f32)
        p2 = jnp.dot(sup, jnp.dot(o2, w3[2 * c1:3 * c1, :], preferred_element_type=f32),
                     preferred_element_type=f32)
        o3 = jnp.maximum(p0 + p1 + p2 + b3, 0.0)                          # (9, 4)

        # final Linear, computed transposed: (EMB, 9) @ (9, 4) -> (EMB, 4)
        o_ref[n] = (jnp.dot(fcw, o3, preferred_element_type=f32) + fcb).astype(o_ref.dtype)


def fused_signal_reduce(pe, po, params):
    """One pallas_call running conv1..conv3 + Linear; returns (B*A, EMB, C3)."""
    c1, c3 = time_channels[0], time_channels[1]
    l_half = L1 // 2
    n_group = pe.shape[0] // l_half

    operands = (pe, po, params["w1"], params["w2"], params["w3"],
                params["fc_w"], params["bpack"], params["fc_b"])

    # advisory cost estimate (helps XLA schedule around the tiny custom call)
    rows = pe.shape[0] + po.shape[0]
    macs = rows * pe.shape[1] * c1                          # conv1
    macs += rows * c1 * c1                                  # conv2 taps
    macs += n_group * (2 * L2 * l_half * c1)                # conv2 row shifts
    macs += n_group * (3 * L2 * c1 * c3 + 2 * L2 * L2 * c3) # conv3 taps + shifts
    macs += n_group * EMB_SIZE * L2 * c3                    # fc
    out_size = n_group * EMB_SIZE * c3
    bytes_accessed = 4 * (sum(int(op.size) for op in operands) + out_size)

    kernel = functools.partial(_signal_reduce_kernel, n_group=n_group,
                               l_half=l_half, c1=c1, c3=c3, l2=L2)
    return pl.pallas_call(
        kernel,
        out_shape=jax.ShapeDtypeStruct((n_group, EMB_SIZE, c3), jnp.float32),
        grid=(1,),  # tiny problem: a single full-array block (few KB of VMEM)
        in_specs=[pl.BlockSpec(op.shape, lambda i, nd=op.ndim: (0,) * nd)
                  for op in operands],
        out_specs=pl.BlockSpec((n_group, EMB_SIZE, c3), lambda i: (0, 0, 0)),
        compiler_params=pltpu.CompilerParams(dimension_semantics=("arbitrary",)),
        cost_estimate=pl.CostEstimate(flops=2 * macs, transcendentals=0,
                                      bytes_accessed=int(bytes_accessed)),
    )(*operands)


# --------------------------- parameter init ---------------------------------
def _uniform(key, shape, bound):
    return jax.random.uniform(key, shape, jnp.float32, -bound, bound)


def conv_configs():
    cfgs = [
        (NUM_TRANSMIT, time_channels[0], KERNEL_SIZE, STRIDE, PADDING),
        (time_channels[0], time_channels[0], 2, 2, 1),
    ]
    for i in range(1, len(time_channels)):
        cfgs.append((time_channels[i - 1], time_channels[i], 3, 1, 1))
    return cfgs


def init_params(key):
    layers = []
    for li, (cin, cout, k, s, p) in enumerate(conv_configs()):
        kw, kb, kg, kbe = jax.random.split(jax.random.fold_in(key, li), 4)
        bound = 1.0 / (cin * k) ** 0.5
        w = _uniform(kw, (cout, cin, k), bound)            # PyTorch Conv1d layout
        b = _uniform(kb, (cout,), bound)
        gamma = 1.0 + 0.1 * _uniform(kg, (cout,), 1.0)     # BatchNorm1d weight
        beta = 0.1 * _uniform(kbe, (cout,), 1.0)           # BatchNorm1d bias
        mean = jnp.zeros((cout,), jnp.float32)             # running stats (eval)
        var = jnp.ones((cout,), jnp.float32)
        scale = gamma / jnp.sqrt(var + BN_EPS)
        bias = (b - mean) * scale + beta                   # conv bias + BN folded
        # [k*cin + ci, co] layout, BN scale folded into the weight columns (exact)
        w2 = jnp.transpose(w, (2, 1, 0)).reshape(k * cin, cout) * scale[None, :]
        layers.append(dict(w=w2, b=bias))

    klw, klb = jax.random.split(jax.random.fold_in(key, 1000), 2)
    lbound = 1.0 / SIG_OUT_SIZE ** 0.5
    fc_w = _uniform(klw, (EMB_SIZE, SIG_OUT_SIZE), lbound)  # native (EMB, SIG) layout
    fc_b = _uniform(klb, (EMB_SIZE,), lbound)

    # pack the small per-layer biases into one VMEM tile: rows = b1, b2, b3(+0 pad)
    bpack = jnp.zeros((4, time_channels[0]), jnp.float32)
    bpack = bpack.at[0, :].set(layers[0]["b"])
    bpack = bpack.at[1, :].set(layers[1]["b"])
    bpack = bpack.at[2, :time_channels[1]].set(layers[2]["b"])

    return dict(w1=layers[0]["w"], w2=layers[1]["w"], w3=layers[2]["w"],
                fc_w=fc_w, fc_b=fc_b.reshape(EMB_SIZE, 1), bpack=bpack)


# --------------------------- forward pass ------------------------------------
def signal_reduce_forward(x, params):
    # x: (B, A, NUM_TRANSMIT, T)  -- PyTorch: x.view(B*A, C, T) in NCL
    Bb, Aa, C, Tt = x.shape
    n_group = Bb * Aa

    # Input layout plumbing (only XLA-side per-forward work): NCL -> NLC, pad,
    # im2col for conv1 split into even/odd output positions (makes the stride-2
    # conv2 contiguous inside the kernel).
    h = jnp.transpose(x.reshape(n_group, C, Tt), (0, 2, 1))          # (4, 64, 8)
    xp = jnp.pad(h, ((0, 0), (PADDING, PADDING), (0, 0)))            # (4, 70, 8)
    l1 = conv_out_len(Tt, KERNEL_SIZE, STRIDE, PADDING)
    cols = [xp[:, k: k + STRIDE * (l1 - 1) + 1: STRIDE, :] for k in range(KERNEL_SIZE)]
    patches = jnp.concatenate(cols, axis=-1)                         # (4, 16, 56)
    pe = patches[:, 0::2, :].reshape(n_group * (l1 // 2), KERNEL_SIZE * C)
    po = patches[:, 1::2, :].reshape(n_group * (l1 // 2), KERNEL_SIZE * C)

    out3 = fused_signal_reduce(pe, po, params)                       # (4, 32, 4)

    # TODO(synk): Dropout is identity (eval); train-mode dropout / batch-stat BN not implemented.
    # (B*A, EMB, C3) -> (B*A, C3, EMB) -> (B, NUM_TRANSMIT, EMB)  (matches torch's .view order)
    return jnp.transpose(out3, (0, 2, 1)).reshape(Bb, NUM_TRANSMIT, EMB_SIZE)


# --------------------------- main --------------------------------------------
if __name__ == "__main__":
    key = jax.random.PRNGKey(0)
    kx, kp = jax.random.split(key)
    params = init_params(kp)
    x = jax.random.normal(kx, (B, A, NUM_TRANSMIT, T), jnp.float32)

    fwd = jax.jit(signal_reduce_forward)
    y = fwd(x, params)
    jax.block_until_ready(y)
    assert y.shape == (B, NUM_TRANSMIT, EMB_SIZE), y.shape
    print("KERNEL_OK")
</pallas_src>

<mosaic_0001>
module attributes {stable_mosaic.version = 11 : i64} {
  func.func @_signal_reduce_kernel(%arg0: i32, %arg1: memref<32x56xf32, #tpu.memory_space<vmem>>, %arg2: memref<32x56xf32, #tpu.memory_space<vmem>>, %arg3: memref<56x16xf32, #tpu.memory_space<vmem>>, %arg4: memref<32x16xf32, #tpu.memory_space<vmem>>, %arg5: memref<48x4xf32, #tpu.memory_space<vmem>>, %arg6: memref<32x9xf32, #tpu.memory_space<vmem>>, %arg7: memref<4x16xf32, #tpu.memory_space<vmem>>, %arg8: memref<32x1xf32, #tpu.memory_space<vmem>>, %arg9: memref<4x32x4xf32, #tpu.memory_space<vmem>>) attributes {dimension_semantics = [#tpu.dimension_semantics<arbitrary>], iteration_bounds = array<i64: 1>, scalar_prefetch = 0 : i64, scratch_operands = 0 : i64, tpu.core_type = #tpu.core_type<tc>, window_params = [{pipeline_mode = #tpu.pipeline_mode<synchronous>, transform_indices = @transform_0, window_bounds = array<i64: 32, 56>}, {pipeline_mode = #tpu.pipeline_mode<synchronous>, transform_indices = @transform_1, window_bounds = array<i64: 32, 56>}, {pipeline_mode = #tpu.pipeline_mode<synchronous>, transform_indices = @transform_2, window_bounds = array<i64: 56, 16>}, {pipeline_mode = #tpu.pipeline_mode<synchronous>, transform_indices = @transform_3, window_bounds = array<i64: 32, 16>}, {pipeline_mode = #tpu.pipeline_mode<synchronous>, transform_indices = @transform_4, window_bounds = array<i64: 48, 4>}, {pipeline_mode = #tpu.pipeline_mode<synchronous>, transform_indices = @transform_5, window_bounds = array<i64: 32, 9>}, {pipeline_mode = #tpu.pipeline_mode<synchronous>, transform_indices = @transform_6, window_bounds = array<i64: 4, 16>}, {pipeline_mode = #tpu.pipeline_mode<synchronous>, transform_indices = @transform_7, window_bounds = array<i64: 32, 1>}, {pipeline_mode = #tpu.pipeline_mode<synchronous>, transform_indices = @transform_8, window_bounds = array<i64: 4, 32, 4>}]} {
    %c0 = arith.constant 0 : index
    %c0_0 = arith.constant 0 : index
    %0 = vector.load %arg7[%c0, %c0_0] : memref<4x16xf32, #tpu.memory_space<vmem>>, vector<4x16xf32>
    %1 = vector.extract_strided_slice %0 {offsets = [0, 0], sizes = [1, 16], strides = [1, 1]} : vector<4x16xf32> to vector<1x16xf32>
    %2 = vector.extract_strided_slice %0 {offsets = [1, 0], sizes = [1, 16], strides = [1, 1]} : vector<4x16xf32> to vector<1x16xf32>
    %3 = vector.extract_strided_slice %0 {offsets = [2, 0], sizes = [1, 4], strides = [1, 1]} : vector<4x16xf32> to vector<1x4xf32>
    %c0_1 = arith.constant 0 : index
    %c0_2 = arith.constant 0 : index
    %4 = vector.load %arg3[%c0_1, %c0_2] : memref<56x16xf32, #tpu.memory_space<vmem>>, vector<56x16xf32>
    %c0_3 = arith.constant 0 : index
    %c0_4 = arith.constant 0 : index
    %5 = vector.load %arg4[%c0_3, %c0_4] : memref<32x16xf32, #tpu.memory_space<vmem>>, vector<32x16xf32>
    %c0_5 = arith.constant 0 : index
    %c0_6 = arith.constant 0 : index
    %6 = vector.load %arg5[%c0_5, %c0_6] : memref<48x4xf32, #tpu.memory_space<vmem>>, vector<48x4xf32>
    %c0_7 = arith.constant 0 : index
    %c0_8 = arith.constant 0 : index
    %7 = vector.load %arg6[%c0_7, %c0_8] : memref<32x9xf32, #tpu.memory_space<vmem>>, vector<32x9xf32>
    %c0_9 = arith.constant 0 : index
    %c0_10 = arith.constant 0 : index
    %8 = vector.load %arg8[%c0_9, %c0_10] : memref<32x1xf32, #tpu.memory_space<vmem>>, vector<32x1xf32>
    %c0_11 = arith.constant 0 : index
    %c0_12 = arith.constant 0 : index
    %9 = vector.load %arg1[%c0_11, %c0_12] : memref<32x56xf32, #tpu.memory_space<vmem>>, vector<32x56xf32>
    %cst = arith.constant dense<0.000000e+00> : vector<32x16xf32>
    %10 = tpu.matmul %9, %4, %cst {dimension_numbers = #tpu.dot_dimension_numbers<[1], [0], [0], [1], [0, 0, 1, 1], [], []>} : vector<32x56xf32>, vector<56x16xf32>, vector<32x16xf32> -> vector<32x16xf32>
    %11 = vector.broadcast %1 : vector<1x16xf32> to vector<32x16xf32>
    %12 = arith.addf %10, %11 : vector<32x16xf32>
    %cst_13 = arith.constant 0.000000e+00 : f32
    %13 = vector.broadcast %cst_13 : f32 to vector<32x16xf32>
    %14 = arith.maximumf %12, %13 : vector<32x16xf32>
    %c0_14 = arith.constant 0 : index
    %c0_15 = arith.constant 0 : index
    %15 = vector.load %arg2[%c0_14, %c0_15] : memref<32x56xf32, #tpu.memory_space<vmem>>, vector<32x56xf32>
    %cst_16 = arith.constant dense<0.000000e+00> : vector<32x16xf32>
    %16 = tpu.matmul %15, %4, %cst_16 {dimension_numbers = #tpu.dot_dimension_numbers<[1], [0], [0], [1], [0, 0, 1, 1], [], []>} : vector<32x56xf32>, vector<56x16xf32>, vector<32x16xf32> -> vector<32x16xf32>
    %17 = vector.broadcast %1 : vector<1x16xf32> to vector<32x16xf32>
    %18 = arith.addf %16, %17 : vector<32x16xf32>
    %cst_17 = arith.constant 0.000000e+00 : f32
    %19 = vector.broadcast %cst_17 : f32 to vector<32x16xf32>
    %20 = arith.maximumf %18, %19 : vector<32x16xf32>
    %21 = vector.extract_strided_slice %5 {offsets = [0, 0], sizes = [16, 16], strides = [1, 1]} : vector<32x16xf32> to vector<16x16xf32>
    %cst_18 = arith.constant dense<0.000000e+00> : vector<32x16xf32>
    %22 = tpu.matmul %20, %21, %cst_18 {dimension_numbers = #tpu.dot_dimension_numbers<[1], [0], [0], [1], [0, 0, 1, 1], [], []>} : vector<32x16xf32>, vector<16x16xf32>, vector<32x16xf32> -> vector<32x16xf32>
    %23 = vector.extract_strided_slice %5 {offsets = [16, 0], sizes = [16, 16], strides = [1, 1]} : vector<32x16xf32> to vector<16x16xf32>
    %cst_19 = arith.constant dense<0.000000e+00> : vector<32x16xf32>
    %24 = tpu.matmul %14, %23, %cst_19 {dimension_numbers = #tpu.dot_dimension_numbers<[1], [0], [0], [1], [0, 0, 1, 1], [], []>} : vector<32x16xf32>, vector<16x16xf32>, vector<32x16xf32> -> vector<32x16xf32>
    %25 = tpu.iota {dimensions = array<i32: 0>} : vector<9x8xi32>
    %26 = tpu.iota {dimensions = array<i32: 1>} : vector<9x8xi32>
    %c-1_i32 = arith.constant -1 : i32
    %27 = vector.broadcast %c-1_i32 : i32 to vector<9x8xi32>
    %28 = arith.addi %25, %27 : vector<9x8xi32>
    %29 = arith.cmpi eq, %26, %28 : vector<9x8xi32>
    %30 = arith.extui %29 : vector<9x8xi1> to vector<9x8xi32>
    %31 = arith.sitofp %30 : vector<9x8xi32> to vector<9x8xf32>
    %32 = tpu.iota {dimensions = array<i32: 0>} : vector<9x8xi32>
    %33 = tpu.iota {dimensions = array<i32: 1>} : vector<9x8xi32>
    %c0_i32 = arith.constant 0 : i32
    %34 = vector.broadcast %c0_i32 : i32 to vector<9x8xi32>
    %35 = arith.addi %32, %34 : vector<9x8xi32>
    %36 = arith.cmpi eq, %33, %35 : vector<9x8xi32>
    %37 = arith.extui %36 : vector<9x8xi1> to vector<9x8xi32>
    %38 = arith.sitofp %37 : vector<9x8xi32> to vector<9x8xf32>
    %39 = tpu.iota {dimensions = array<i32: 0>} : vector<9x9xi32>
    %40 = tpu.iota {dimensions = array<i32: 1>} : vector<9x9xi32>
    %c-1_i32_20 = arith.constant -1 : i32
    %41 = vector.broadcast %c-1_i32_20 : i32 to vector<9x9xi32>
    %42 = arith.addi %39, %41 : vector<9x9xi32>
    %43 = arith.cmpi eq, %40, %42 : vector<9x9xi32>
    %44 = arith.extui %43 : vector<9x9xi1> to vector<9x9xi32>
    %45 = arith.sitofp %44 : vector<9x9xi32> to vector<9x9xf32>
    %46 = tpu.iota {dimensions = array<i32: 0>} : vector<9x9xi32>
    %47 = tpu.iota {dimensions = array<i32: 1>} : vector<9x9xi32>
    %c1_i32 = arith.constant 1 : i32
    %48 = vector.broadcast %c1_i32 : i32 to vector<9x9xi32>
    %49 = arith.addi %46, %48 : vector<9x9xi32>
    %50 = arith.cmpi eq, %47, %49 : vector<9x9xi32>
    %51 = arith.extui %50 : vector<9x9xi1> to vector<9x9xi32>
    %52 = arith.sitofp %51 : vector<9x9xi32> to vector<9x9xf32>
    %53 = vector.extract_strided_slice %22 {offsets = [0, 0], sizes = [8, 16], strides = [1, 1]} : vector<32x16xf32> to vector<8x16xf32>
    %54 = vector.extract_strided_slice %24 {offsets = [0, 0], sizes = [8, 16], strides = [1, 1]} : vector<32x16xf32> to vector<8x16xf32>
    %cst_21 = arith.constant dense<0.000000e+00> : vector<9x16xf32>
    %55 = tpu.matmul %31, %53, %cst_21 {dimension_numbers = #tpu.dot_dimension_numbers<[1], [0], [0], [1], [0, 0, 1, 1], [], []>} : vector<9x8xf32>, vector<8x16xf32>, vector<9x16xf32> -> vector<9x16xf32>
    %cst_22 = arith.constant dense<0.000000e+00> : vector<9x16xf32>
    %56 = tpu.matmul %38, %54, %cst_22 {dimension_numbers = #tpu.dot_dimension_numbers<[1], [0], [0], [1], [0, 0, 1, 1], [], []>} : vector<9x8xf32>, vector<8x16xf32>, vector<9x16xf32> -> vector<9x16xf32>
    %57 = arith.addf %55, %56 : vector<9x16xf32>
    %58 = vector.broadcast %2 : vector<1x16xf32> to vector<9x16xf32>
    %59 = arith.addf %57, %58 : vector<9x16xf32>
    %cst_23 = arith.constant 0.000000e+00 : f32
    %60 = vector.broadcast %cst_23 : f32 to vector<9x16xf32>
    %61 = arith.maximumf %59, %60 : vector<9x16xf32>
    %62 = vector.extract_strided_slice %6 {offsets = [0, 0], sizes = [16, 4], strides = [1, 1]} : vector<48x4xf32> to vector<16x4xf32>
    %cst_24 = arith.constant dense<0.000000e+00> : vector<9x4xf32>
    %63 = tpu.matmul %61, %62, %cst_24 {dimension_numbers = #tpu.dot_dimension_numbers<[1], [0], [0], [1], [0, 0, 1, 1], [], []>} : vector<9x16xf32>, vector<16x4xf32>, vector<9x4xf32> -> vector<9x4xf32>
    %cst_25 = arith.constant dense<0.000000e+00> : vector<9x4xf32>
    %64 = tpu.matmul %45, %63, %cst_25 {dimension_numbers = #tpu.dot_dimension_numbers<[1], [0], [0], [1], [0, 0, 1, 1], [], []>} : vector<9x9xf32>, vector<9x4xf32>, vector<9x4xf32> -> vector<9x4xf32>
    %65 = vector.extract_strided_slice %6 {offsets = [16, 0], sizes = [16, 4], strides = [1, 1]} : vector<48x4xf32> to vector<16x4xf32>
    %cst_26 = arith.constant dense<0.000000e+00> : vector<9x4xf32>
    %66 = tpu.matmul %61, %65, %cst_26 {dimension_numbers = #tpu.dot_dimension_numbers<[1], [0], [0], [1], [0, 0, 1, 1], [], []>} : vector<9x16xf32>, vector<16x4xf32>, vector<9x4xf32> -> vector<9x4xf32>
    %67 = vector.extract_strided_slice %6 {offsets = [32, 0], sizes = [16, 4], strides = [1, 1]} : vector<48x4xf32> to vector<16x4xf32>
    %cst_27 = arith.constant dense<0.000000e+00> : vector<9x4xf32>
    %68 = tpu.matmul %61, %67, %cst_27 {dimension_numbers = #tpu.dot_dimension_numbers<[1], [0], [0], [1], [0, 0, 1, 1], [], []>} : vector<9x16xf32>, vector<16x4xf32>, vector<9x4xf32> -> vector<9x4xf32>
    %cst_28 = arith.constant dense<0.000000e+00> : vector<9x4xf32>
    %69 = tpu.matmul %52, %68, %cst_28 {dimension_numbers = #tpu.dot_dimension_numbers<[1], [0], [0], [1], [0, 0, 1, 1], [], []>} : vector<9x9xf32>, vector<9x4xf32>, vector<9x4xf32> -> vector<9x4xf32>
    %70 = arith.addf %64, %66 : vector<9x4xf32>
    %71 = arith.addf %70, %69 : vector<9x4xf32>
    %72 = vector.broadcast %3 : vector<1x4xf32> to vector<9x4xf32>
    %73 = arith.addf %71, %72 : vector<9x4xf32>
    %cst_29 = arith.constant 0.000000e+00 : f32
    %74 = vector.broadcast %cst_29 : f32 to vector<9x4xf32>
    %75 = arith.maximumf %73, %74 : vector<9x4xf32>
    %cst_30 = arith.constant dense<0.000000e+00> : vector<32x4xf32>
    %76 = tpu.matmul %7, %75, %cst_30 {dimension_numbers = #tpu.dot_dimension_numbers<[1], [0], [0], [1], [0, 0, 1, 1], [], []>} : vector<32x9xf32>, vector<9x4xf32>, vector<32x4xf32> -> vector<32x4xf32>
    %77 = vector.broadcast %8 : vector<32x1xf32> to vector<32x4xf32>
    %78 = arith.addf %76, %77 : vector<32x4xf32>
    %c0_31 = arith.constant 0 : index
    %c0_32 = arith.constant 0 : index
    %c0_33 = arith.constant 0 : index
    %79 = vector.load %arg9[%c0_31, %c0_32, %c0_33] : memref<4x32x4xf32, #tpu.memory_space<vmem>>, vector<1x32x4xf32>
    %80 = vector.shape_cast %79 : vector<1x32x4xf32> to vector<32x4xf32>
    %81 = vector.shape_cast %78 : vector<32x4xf32> to vector<1x32x4xf32>
    tpu.vector_store %arg9[%c0_31, %c0_32, %c0_33], %81 {strides = array<i32>} : memref<4x32x4xf32, #tpu.memory_space<vmem>>, vector<1x32x4xf32>,
    %82 = vector.extract_strided_slice %22 {offsets = [8, 0], sizes = [8, 16], strides = [1, 1]} : vector<32x16xf32> to vector<8x16xf32>
    %83 = vector.extract_strided_slice %24 {offsets = [8, 0], sizes = [8, 16], strides = [1, 1]} : vector<32x16xf32> to vector<8x16xf32>
    %cst_34 = arith.constant dense<0.000000e+00> : vector<9x16xf32>
    %84 = tpu.matmul %31, %82, %cst_34 {dimension_numbers = #tpu.dot_dimension_numbers<[1], [0], [0], [1], [0, 0, 1, 1], [], []>} : vector<9x8xf32>, vector<8x16xf32>, vector<9x16xf32> -> vector<9x16xf32>
    %cst_35 = arith.constant dense<0.000000e+00> : vector<9x16xf32>
    %85 = tpu.matmul %38, %83, %cst_35 {dimension_numbers = #tpu.dot_dimension_numbers<[1], [0], [0], [1], [0, 0, 1, 1], [], []>} : vector<9x8xf32>, vector<8x16xf32>, vector<9x16xf32> -> vector<9x16xf32>
    %86 = arith.addf %84, %85 : vector<9x16xf32>
    %87 = vector.broadcast %2 : vector<1x16xf32> to vector<9x16xf32>
    %88 = arith.addf %86, %87 : vector<9x16xf32>
    %cst_36 = arith.constant 0.000000e+00 : f32
    %89 = vector.broadcast %cst_36 : f32 to vector<9x16xf32>
    %90 = arith.maximumf %88, %89 : vector<9x16xf32>
    %91 = vector.extract_strided_slice %6 {offsets = [0, 0], sizes = [16, 4], strides = [1, 1]} : vector<48x4xf32> to vector<16x4xf32>
    %cst_37 = arith.constant dense<0.000000e+00> : vector<9x4xf32>
    %92 = tpu.matmul %90, %91, %cst_37 {dimension_numbers = #tpu.dot_dimension_numbers<[1], [0], [0], [1], [0, 0, 1, 1], [], []>} : vector<9x16xf32>, vector<16x4xf32>, vector<9x4xf32> -> vector<9x4xf32>
    %cst_38 = arith.constant dense<0.000000e+00> : vector<9x4xf32>
    %93 = tpu.matmul %45, %92, %cst_38 {dimension_numbers = #tpu.dot_dimension_numbers<[1], [0], [0], [1], [0, 0, 1, 1], [], []>} : vector<9x9xf32>, vector<9x4xf32>, vector<9x4xf32> -> vector<9x4xf32>
    %94 = vector.extract_strided_slice %6 {offsets = [16, 0], sizes = [16, 4], strides = [1, 1]} : vector<48x4xf32> to vector<16x4xf32>
    %cst_39 = arith.constant dense<0.000000e+00> : vector<9x4xf32>
    %95 = tpu.matmul %90, %94, %cst_39 {dimension_numbers = #tpu.dot_dimension_numbers<[1], [0], [0], [1], [0, 0, 1, 1], [], []>} : vector<9x16xf32>, vector<16x4xf32>, vector<9x4xf32> -> vector<9x4xf32>
    %96 = vector.extract_strided_slice %6 {offsets = [32, 0], sizes = [16, 4], strides = [1, 1]} : vector<48x4xf32> to vector<16x4xf32>
    %cst_40 = arith.constant dense<0.000000e+00> : vector<9x4xf32>
    %97 = tpu.matmul %90, %96, %cst_40 {dimension_numbers = #tpu.dot_dimension_numbers<[1], [0], [0], [1], [0, 0, 1, 1], [], []>} : vector<9x16xf32>, vector<16x4xf32>, vector<9x4xf32> -> vector<9x4xf32>
    %cst_41 = arith.constant dense<0.000000e+00> : vector<9x4xf32>
    %98 = tpu.matmul %52, %97, %cst_41 {dimension_numbers = #tpu.dot_dimension_numbers<[1], [0], [0], [1], [0, 0, 1, 1], [], []>} : vector<9x9xf32>, vector<9x4xf32>, vector<9x4xf32> -> vector<9x4xf32>
    %99 = arith.addf %93, %95 : vector<9x4xf32>
    %100 = arith.addf %99, %98 : vector<9x4xf32>
    %101 = vector.broadcast %3 : vector<1x4xf32> to vector<9x4xf32>
    %102 = arith.addf %100, %101 : vector<9x4xf32>
    %cst_42 = arith.constant 0.000000e+00 : f32
    %103 = vector.broadcast %cst_42 : f32 to vector<9x4xf32>
    %104 = arith.maximumf %102, %103 : vector<9x4xf32>
    %cst_43 = arith.constant dense<0.000000e+00> : vector<32x4xf32>
    %105 = tpu.matmul %7, %104, %cst_43 {dimension_numbers = #tpu.dot_dimension_numbers<[1], [0], [0], [1], [0, 0, 1, 1], [], []>} : vector<32x9xf32>, vector<9x4xf32>, vector<32x4xf32> -> vector<32x4xf32>
    %106 = vector.broadcast %8 : vector<32x1xf32> to vector<32x4xf32>
    %107 = arith.addf %105, %106 : vector<32x4xf32>
    %c1 = arith.constant 1 : index
    %c0_44 = arith.constant 0 : index
    %c0_45 = arith.constant 0 : index
    %108 = vector.load %arg9[%c1, %c0_44, %c0_45] : memref<4x32x4xf32, #tpu.memory_space<vmem>>, vector<1x32x4xf32>
    %109 = vector.shape_cast %108 : vector<1x32x4xf32> to vector<32x4xf32>
    %110 = vector.shape_cast %107 : vector<32x4xf32> to vector<1x32x4xf32>
    tpu.vector_store %arg9[%c1, %c0_44, %c0_45], %110 {strides = array<i32>} : memref<4x32x4xf32, #tpu.memory_space<vmem>>, vector<1x32x4xf32>,
    %111 = vector.extract_strided_slice %22 {offsets = [16, 0], sizes = [8, 16], strides = [1, 1]} : vector<32x16xf32> to vector<8x16xf32>
    %112 = vector.extract_strided_slice %24 {offsets = [16, 0], sizes = [8, 16], strides = [1, 1]} : vector<32x16xf32> to vector<8x16xf32>
    %cst_46 = arith.constant dense<0.000000e+00> : vector<9x16xf32>
    %113 = tpu.matmul %31, %111, %cst_46 {dimension_numbers = #tpu.dot_dimension_numbers<[1], [0], [0], [1], [0, 0, 1, 1], [], []>} : vector<9x8xf32>, vector<8x16xf32>, vector<9x16xf32> -> vector<9x16xf32>
    %cst_47 = arith.constant dense<0.000000e+00> : vector<9x16xf32>
    %114 = tpu.matmul %38, %112, %cst_47 {dimension_numbers = #tpu.dot_dimension_numbers<[1], [0], [0], [1], [0, 0, 1, 1], [], []>} : vector<9x8xf32>, vector<8x16xf32>, vector<9x16xf32> -> vector<9x16xf32>
    %115 = arith.addf %113, %114 : vector<9x16xf32>
    %116 = vector.broadcast %2 : vector<1x16xf32> to vector<9x16xf32>
    %117 = arith.addf %115, %116 : vector<9x16xf32>
    %cst_48 = arith.constant 0.000000e+00 : f32
    %118 = vector.broadcast %cst_48 : f32 to vector<9x16xf32>
    %119 = arith.maximumf %117, %118 : vector<9x16xf32>
    %120 = vector.extract_strided_slice %6 {offsets = [0, 0], sizes = [16, 4], strides = [1, 1]} : vector<48x4xf32> to vector<16x4xf32>
    %cst_49 = arith.constant dense<0.000000e+00> : vector<9x4xf32>
    %121 = tpu.matmul %119, %120, %cst_49 {dimension_numbers = #tpu.dot_dimension_numbers<[1], [0], [0], [1], [0, 0, 1, 1], [], []>} : vector<9x16xf32>, vector<16x4xf32>, vector<9x4xf32> -> vector<9x4xf32>
    %cst_50 = arith.constant dense<0.000000e+00> : vector<9x4xf32>
    %122 = tpu.matmul %45, %121, %cst_50 {dimension_numbers = #tpu.dot_dimension_numbers<[1], [0], [0], [1], [0, 0, 1, 1], [], []>} : vector<9x9xf32>, vector<9x4xf32>, vector<9x4xf32> -> vector<9x4xf32>
    %123 = vector.extract_strided_slice %6 {offsets = [16, 0], sizes = [16, 4], strides = [1, 1]} : vector<48x4xf32> to vector<16x4xf32>
    %cst_51 = arith.constant dense<0.000000e+00> : vector<9x4xf32>
    %124 = tpu.matmul %119, %123, %cst_51 {dimension_numbers = #tpu.dot_dimension_numbers<[1], [0], [0], [1], [0, 0, 1, 1], [], []>} : vector<9x16xf32>, vector<16x4xf32>, vector<9x4xf32> -> vector<9x4xf32>
    %125 = vector.extract_strided_slice %6 {offsets = [32, 0], sizes = [16, 4], strides = [1, 1]} : vector<48x4xf32> to vector<16x4xf32>
    %cst_52 = arith.constant dense<0.000000e+00> : vector<9x4xf32>
    %126 = tpu.matmul %119, %125, %cst_52 {dimension_numbers = #tpu.dot_dimension_numbers<[1], [0], [0], [1], [0, 0, 1, 1], [], []>} : vector<9x16xf32>, vector<16x4xf32>, vector<9x4xf32> -> vector<9x4xf32>
    %cst_53 = arith.constant dense<0.000000e+00> : vector<9x4xf32>
    %127 = tpu.matmul %52, %126, %cst_53 {dimension_numbers = #tpu.dot_dimension_numbers<[1], [0], [0], [1], [0, 0, 1, 1], [], []>} : vector<9x9xf32>, vector<9x4xf32>, vector<9x4xf32> -> vector<9x4xf32>
    %128 = arith.addf %122, %124 : vector<9x4xf32>
    %129 = arith.addf %128, %127 : vector<9x4xf32>
    %130 = vector.broadcast %3 : vector<1x4xf32> to vector<9x4xf32>
    %131 = arith.addf %129, %130 : vector<9x4xf32>
    %cst_54 = arith.constant 0.000000e+00 : f32
    %132 = vector.broadcast %cst_54 : f32 to vector<9x4xf32>
    %133 = arith.maximumf %131, %132 : vector<9x4xf32>
    %cst_55 = arith.constant dense<0.000000e+00> : vector<32x4xf32>
    %134 = tpu.matmul %7, %133, %cst_55 {dimension_numbers = #tpu.dot_dimension_numbers<[1], [0], [0], [1], [0, 0, 1, 1], [], []>} : vector<32x9xf32>, vector<9x4xf32>, vector<32x4xf32> -> vector<32x4xf32>
    %135 = vector.broadcast %8 : vector<32x1xf32> to vector<32x4xf32>
    %136 = arith.addf %134, %135 : vector<32x4xf32>
    %c2 = arith.constant 2 : index
    %c0_56 = arith.constant 0 : index
    %c0_57 = arith.constant 0 : index
    %137 = vector.load %arg9[%c2, %c0_56, %c0_57] : memref<4x32x4xf32, #tpu.memory_space<vmem>>, vector<1x32x4xf32>
    %138 = vector.shape_cast %137 : vector<1x32x4xf32> to vector<32x4xf32>
    %139 = vector.shape_cast %136 : vector<32x4xf32> to vector<1x32x4xf32>
    tpu.vector_store %arg9[%c2, %c0_56, %c0_57], %139 {strides = array<i32>} : memref<4x32x4xf32, #tpu.memory_space<vmem>>, vector<1x32x4xf32>,
    %140 = vector.extract_strided_slice %22 {offsets = [24, 0], sizes = [8, 16], strides = [1, 1]} : vector<32x16xf32> to vector<8x16xf32>
    %141 = vector.extract_strided_slice %24 {offsets = [24, 0], sizes = [8, 16], strides = [1, 1]} : vector<32x16xf32> to vector<8x16xf32>
    %cst_58 = arith.constant dense<0.000000e+00> : vector<9x16xf32>
    %142 = tpu.matmul %31, %140, %cst_58 {dimension_numbers = #tpu.dot_dimension_numbers<[1], [0], [0], [1], [0, 0, 1, 1], [], []>} : vector<9x8xf32>, vector<8x16xf32>, vector<9x16xf32> -> vector<9x16xf32>
    %cst_59 = arith.constant dense<0.000000e+00> : vector<9x16xf32>
    %143 = tpu.matmul %38, %141, %cst_59 {dimension_numbers = #tpu.dot_dimension_numbers<[1], [0], [0], [1], [0, 0, 1, 1], [], []>} : vector<9x8xf32>, vector<8x16xf32>, vector<9x16xf32> -> vector<9x16xf32>
    %144 = arith.addf %142, %143 : vector<9x16xf32>
    %145 = vector.broadcast %2 : vector<1x16xf32> to vector<9x16xf32>
    %146 = arith.addf %144, %145 : vector<9x16xf32>
    %cst_60 = arith.constant 0.000000e+00 : f32
    %147 = vector.broadcast %cst_60 : f32 to vector<9x16xf32>
    %148 = arith.maximumf %146, %147 : vector<9x16xf32>
    %149 = vector.extract_strided_slice %6 {offsets = [0, 0], sizes = [16, 4], strides = [1, 1]} : vector<48x4xf32> to vector<16x4xf32>
    %cst_61 = arith.constant dense<0.000000e+00> : vector<9x4xf32>
    %150 = tpu.matmul %148, %149, %cst_61 {dimension_numbers = #tpu.dot_dimension_numbers<[1], [0], [0], [1], [0, 0, 1, 1], [], []>} : vector<9x16xf32>, vector<16x4xf32>, vector<9x4xf32> -> vector<9x4xf32>
    %cst_62 = arith.constant dense<0.000000e+00> : vector<9x4xf32>
    %151 = tpu.matmul %45, %150, %cst_62 {dimension_numbers = #tpu.dot_dimension_numbers<[1], [0], [0], [1], [0, 0, 1, 1], [], []>} : vector<9x9xf32>, vector<9x4xf32>, vector<9x4xf32> -> vector<9x4xf32>
    %152 = vector.extract_strided_slice %6 {offsets = [16, 0], sizes = [16, 4], strides = [1, 1]} : vector<48x4xf32> to vector<16x4xf32>
    %cst_63 = arith.constant dense<0.000000e+00> : vector<9x4xf32>
    %153 = tpu.matmul %148, %152, %cst_63 {dimension_numbers = #tpu.dot_dimension_numbers<[1], [0], [0], [1], [0, 0, 1, 1], [], []>} : vector<9x16xf32>, vector<16x4xf32>, vector<9x4xf32> -> vector<9x4xf32>
    %154 = vector.extract_strided_slice %6 {offsets = [32, 0], sizes = [16, 4], strides = [1, 1]} : vector<48x4xf32> to vector<16x4xf32>
    %cst_64 = arith.constant dense<0.000000e+00> : vector<9x4xf32>
    %155 = tpu.matmul %148, %154, %cst_64 {dimension_numbers = #tpu.dot_dimension_numbers<[1], [0], [0], [1], [0, 0, 1, 1], [], []>} : vector<9x16xf32>, vector<16x4xf32>, vector<9x4xf32> -> vector<9x4xf32>
    %cst_65 = arith.constant dense<0.000000e+00> : vector<9x4xf32>
    %156 = tpu.matmul %52, %155, %cst_65 {dimension_numbers = #tpu.dot_dimension_numbers<[1], [0], [0], [1], [0, 0, 1, 1], [], []>} : vector<9x9xf32>, vector<9x4xf32>, vector<9x4xf32> -> vector<9x4xf32>
    %157 = arith.addf %151, %153 : vector<9x4xf32>
    %158 = arith.addf %157, %156 : vector<9x4xf32>
    %159 = vector.broadcast %3 : vector<1x4xf32> to vector<9x4xf32>
    %160 = arith.addf %158, %159 : vector<9x4xf32>
    %cst_66 = arith.constant 0.000000e+00 : f32
    %161 = vector.broadcast %cst_66 : f32 to vector<9x4xf32>
    %162 = arith.maximumf %160, %161 : vector<9x4xf32>
    %cst_67 = arith.constant dense<0.000000e+00> : vector<32x4xf32>
    %163 = tpu.matmul %7, %162, %cst_67 {dimension_numbers = #tpu.dot_dimension_numbers<[1], [0], [0], [1], [0, 0, 1, 1], [], []>} : vector<32x9xf32>, vector<9x4xf32>, vector<32x4xf32> -> vector<32x4xf32>
    %164 = vector.broadcast %8 : vector<32x1xf32> to vector<32x4xf32>
    %165 = arith.addf %163, %164 : vector<32x4xf32>
    %c3 = arith.constant 3 : index
    %c0_68 = arith.constant 0 : index
    %c0_69 = arith.constant 0 : index
    %166 = vector.load %arg9[%c3, %c0_68, %c0_69] : memref<4x32x4xf32, #tpu.memory_space<vmem>>, vector<1x32x4xf32>
    %167 = vector.shape_cast %166 : vector<1x32x4xf32> to vector<32x4xf32>
    %168 = vector.shape_cast %165 : vector<32x4xf32> to vector<1x32x4xf32>
    tpu.vector_store %arg9[%c3, %c0_68, %c0_69], %168 {strides = array<i32>} : memref<4x32x4xf32, #tpu.memory_space<vmem>>, vector<1x32x4xf32>,
    return
  }
  func.func @transform_0(%arg0: i32) -> (i32, i32) {
    %c0_i32 = arith.constant 0 : i32
    %c0_i32_0 = arith.constant 0 : i32
    %c0_i32_1 = arith.constant 0 : i32
    return %c0_i32, %c0_i32_0 : i32, i32
  }
  func.func @transform_1(%arg0: i32) -> (i32, i32) {
    %c0_i32 = arith.constant 0 : i32
    %c0_i32_0 = arith.constant 0 : i32
    %c0_i32_1 = arith.constant 0 : i32
    return %c0_i32, %c0_i32_0 : i32, i32
  }
  func.func @transform_2(%arg0: i32) -> (i32, i32) {
    %c0_i32 = arith.constant 0 : i32
    %c0_i32_0 = arith.constant 0 : i32
    %c0_i32_1 = arith.constant 0 : i32
    return %c0_i32, %c0_i32_0 : i32, i32
  }
  func.func @transform_3(%arg0: i32) -> (i32, i32) {
    %c0_i32 = arith.constant 0 : i32
    %c0_i32_0 = arith.constant 0 : i32
    %c0_i32_1 = arith.constant 0 : i32
    return %c0_i32, %c0_i32_0 : i32, i32
  }
  func.func @transform_4(%arg0: i32) -> (i32, i32) {
    %c0_i32 = arith.constant 0 : i32
    %c0_i32_0 = arith.constant 0 : i32
    %c0_i32_1 = arith.constant 0 : i32
    return %c0_i32, %c0_i32_0 : i32, i32
  }
  func.func @transform_5(%arg0: i32) -> (i32, i32) {
    %c0_i32 = arith.constant 0 : i32
    %c0_i32_0 = arith.constant 0 : i32
    %c0_i32_1 = arith.constant 0 : i32
    return %c0_i32, %c0_i32_0 : i32, i32
  }
  func.func @transform_6(%arg0: i32) -> (i32, i32) {
    %c0_i32 = arith.constant 0 : i32
    %c0_i32_0 = arith.constant 0 : i32
    %c0_i32_1 = arith.constant 0 : i32
    return %c0_i32, %c0_i32_0 : i32, i32
  }
  func.func @transform_7(%arg0: i32) -> (i32, i32) {
    %c0_i32 = arith.constant 0 : i32
    %c0_i32_0 = arith.constant 0 : i32
    %c0_i32_1 = arith.constant 0 : i32
    return %c0_i32, %c0_i32_0 : i32, i32
  }
  func.func @transform_8(%arg0: i32) -> (i32, i32, i32) {
    %c0_i32 = arith.constant 0 : i32
    %c0_i32_0 = arith.constant 0 : i32
    %c0_i32_1 = arith.constant 0 : i32
    %c0_i32_2 = arith.constant 0 : i32
    return %c0_i32, %c0_i32_0, %c0_i32_1 : i32, i32, i32
  }
}

</mosaic_0001>

<llo_original>
// kernel: signal_reduce_forward.1
$region0: #{signal_reduce_forward.1}
  #allocation0 [shape = 'u32[]', space=smem, size = 0x4, offset = 0x4, fixed_abs, tag = 'smem constant byte address 0x4 - core index']
  #allocation1 [shape = 'u32[144,128]{1,0:T(1,128)}', space=vmem, size = 0x12000, scoped, tag = 'internal scratch']
  %s0 = inlined_call_operand.vmem [shape: f32[32,56], index: 0, kind: input, shape index: {}]
  %s1 = inlined_call_operand.vmem [shape: f32[32,56], index: 1, kind: input, shape index: {}]
  %s2 = inlined_call_operand.vmem [shape: f32[56,16], index: 2, kind: input, shape index: {}]
  %s3 = inlined_call_operand.vmem [shape: f32[32,16], index: 3, kind: input, shape index: {}]
  %s4 = inlined_call_operand.vmem [shape: f32[48,4], index: 4, kind: input, shape index: {}]
  %s5 = inlined_call_operand.vmem [shape: f32[32,9], index: 5, kind: input, shape index: {}]
  %s6 = inlined_call_operand.vmem [shape: f32[4,16], index: 6, kind: input, shape index: {}]
  %s7 = inlined_call_operand.vmem [shape: f32[32,1], index: 7, kind: input, shape index: {}]
  %s8 = inlined_call_operand.vmem [shape: f32[4,32,4], index: 8, kind: output, shape index: {}]
  %s9 = sld [smem:[#allocation0]]
  $region42: #{signal_reduce_forward.1} parent=0
    _
  %s11 = ssub.s32 1, %s9
  %s12 = scalar_select 0, %s11, %s9
  // Predicated region
  $region2: #{signal_reduce_forward.1} parent=0 // pred_check
    _
  $region3: #{signal_reduce_forward.1} parent=0 // pred_check_branch
    %14 = sbr.rel (0) target = $region5
  $region4: #{signal_reduce_forward.1} parent=0 // pred_region
    _
  $region5: #{signal_reduce_forward.1} parent=0 // pred_fallthru
    _
  // Predicated region
  $region6: #{signal_reduce_forward.1} parent=0 // pred_check
    _
  $region7: #{signal_reduce_forward.1} parent=0 // pred_check_branch
    %16 = sbr.rel (0) target = $region9
  $region8: #{signal_reduce_forward.1} parent=0 // pred_region
    _
  $region9: #{signal_reduce_forward.1} parent=0 // pred_fallthru
    _
  // Predicated region
  $region10: #{signal_reduce_forward.1} parent=0 // pred_check
    _
  $region11: #{signal_reduce_forward.1} parent=0 // pred_check_branch
    %18 = sbr.rel (0) target = $region13
  $region12: #{signal_reduce_forward.1} parent=0 // pred_region
    _
  $region13: #{signal_reduce_forward.1} parent=0 // pred_fallthru
    _
  // Predicated region
  $region14: #{signal_reduce_forward.1} parent=0 // pred_check
    _
  $region15: #{signal_reduce_forward.1} parent=0 // pred_check_branch
    %20 = sbr.rel (0) target = $region17
  $region16: #{signal_reduce_forward.1} parent=0 // pred_region
    _
  $region17: #{signal_reduce_forward.1} parent=0 // pred_fallthru
    _
  // Predicated region
  $region18: #{signal_reduce_forward.1} parent=0 // pred_check
    _
  $region19: #{signal_reduce_forward.1} parent=0 // pred_check_branch
    %22 = sbr.rel (0) target = $region21
  $region20: #{signal_reduce_forward.1} parent=0 // pred_region
    _
  $region21: #{signal_reduce_forward.1} parent=0 // pred_fallthru
    _
  // Predicated region
  $region22: #{signal_reduce_forward.1} parent=0 // pred_check
    _
  $region23: #{signal_reduce_forward.1} parent=0 // pred_check_branch
    %24 = sbr.rel (0) target = $region25
  $region24: #{signal_reduce_forward.1} parent=0 // pred_region
    _
  $region25: #{signal_reduce_forward.1} parent=0 // pred_fallthru
    _
  // Predicated region
  $region26: #{signal_reduce_forward.1} parent=0 // pred_check
    _
  $region27: #{signal_reduce_forward.1} parent=0 // pred_check_branch
    %26 = sbr.rel (0) target = $region29
  $region28: #{signal_reduce_forward.1} parent=0 // pred_region
    _
  $region29: #{signal_reduce_forward.1} parent=0 // pred_fallthru
    _
  // Predicated region
  $region30: #{signal_reduce_forward.1} parent=0 // pred_check
    _
  $region31: #{signal_reduce_forward.1} parent=0 // pred_check_branch
    %28 = sbr.rel (0) target = $region33
  $region32: #{signal_reduce_forward.1} parent=0 // pred_region
    _
  $region33: #{signal_reduce_forward.1} parent=0 // pred_fallthru
    _
  %v29 = vld [vmem:[%s6] sm:$0xf]
  %v30 = vld [vmem:[%s2] sm:$0xff]
  %v31 = vld [vmem:[%s2 + $0x8] sm:$0xff]
  %v32 = vld [vmem:[%s2 + $0x10] sm:$0xff]
  %v33 = vld [vmem:[%s2 + $0x18] sm:$0xff]
  %v34 = vld [vmem:[%s2 + $0x20] sm:$0xff]
  %v35 = vld [vmem:[%s2 + $0x28] sm:$0xff]
  %v36 = vld [vmem:[%s2 + $0x30] sm:$0xff]
  %v37 = vld [vmem:[%s3] sm:$0xff]
  %v38 = vld [vmem:[%s3 + $0x8] sm:$0xff]
  %v39 = vld [vmem:[%s3 + $0x10] sm:$0xff]
  %v40 = vld [vmem:[%s3 + $0x18] sm:$0xff]
  %v41 = vld [vmem:[%s4] sm:$0xff]
  %v42 = vld [vmem:[%s4 + $0x8] sm:$0xff]
  %v43 = vld [vmem:[%s4 + $0x10] sm:$0xff]
  %v44 = vld [vmem:[%s4 + $0x18] sm:$0xff]
  %v45 = vld [vmem:[%s4 + $0x20] sm:$0xff]
  %v46 = vld [vmem:[%s4 + $0x28] sm:$0xff]
  %v47 = vld [vmem:[%s5] sm:$0xff]
  %v48 = vld [vmem:[%s5 + $0x8] sm:$0xff]
  %v49 = vld [vmem:[%s5 + $0x10] sm:$0xff]
  %v50 = vld [vmem:[%s5 + $0x18] sm:$0xff]
  %v51 = vld [vmem:[%s7] sm:$0xff]
  %v52 = vld [vmem:[%s7 + $0x8] sm:$0xff]
  %v53 = vld [vmem:[%s7 + $0x10] sm:$0xff]
  %v54 = vld [vmem:[%s7 + $0x18] sm:$0xff]
  %v55 = vld [vmem:[%s0] sm:$0xff]
  %v56 = vld [vmem:[%s0 + $0x8] sm:$0xff]
  %v57 = vld [vmem:[%s0 + $0x10] sm:$0xff]
  %v58 = vld [vmem:[%s0 + $0x18] sm:$0xff]
  %v59 = vlaneseq
  %v60 = vshrl.u32 %v59, 7
  %v61 = vsub.s32 0, %v60
  %v62 = vrot.slane %v29, %v61
  %vm63 = vcmask 457728
  %v65 = vsel %vm63, %v55, 0
  %v68 = vsel %vm63, %v56, 0
  %v71 = vsel %vm63, %v57, 0
  %v74 = vsel %vm63, %v58, 0
  %76 = vmatprep.subr.mxu0 0.0
  %77 = vmatpush1.msra.mxu0 0.0
  %78 = vmatprep.subr.mxu0 0.0
  %79 = vmatpush1.msra.mxu0 0.0
  %80 = vmatprep.subr.mxu0 0.0
  %81 = vmatpush1.msra.mxu0 0.0
  %82 = vmatprep.subr.mxu0 0.0
  %83 = vmatpush1.msra.mxu0 0.0
  %84 = vmatprep.subr.mxu0 0.0
  %85 = vmatpush1.msra.mxu0 0.0
  %86 = vmatprep.subr.mxu0 0.0
  %87 = vmatpush1.msra.mxu0 0.0
  %88 = vmatprep.subr.mxu0 0.0
  %89 = vmatpush1.msra.mxu0 0.0
  %90 = vmatprep.subr.mxu0 0.0
  %91 = vmatpush1.msra.mxu0 0.0
  %92 = vmatprep.subr.mxu0 0.0
  %93 = vmatpush1.msra.mxu0 0.0
  %94 = vmatprep.subr.mxu0 0.0
  %95 = vmatpush1.msra.mxu0 %v36
  %96 = vmatprep.subr.mxu0 0.0
  %97 = vmatpush1.msra.mxu0 %v35
  %98 = vmatprep.subr.mxu0 0.0
  %99 = vmatpush1.msra.mxu0 %v34
  %100 = vmatprep.subr.mxu0 0.0
  %101 = vmatpush1.msra.mxu0 %v33
  %102 = vmatprep.subr.mxu0 0.0
  %103 = vmatpush1.msra.mxu0 %v32
  %104 = vmatprep.subr.mxu0 0.0
  %105 = vmatpush1.msra.mxu0 %v31
  %106 = vmatprep.subr.mxu0 0.0
  %107 = vmatpush1.msra.mxu0 %v30
  %108 = vmatprep.subr.mxu0 0.0
  %109 = vmatpush2.msra.mxu0 0.0
  %110 = vmatprep.subr.mxu0 0.0
  %111 = vmatpush2.msra.mxu0 0.0
  %112 = vmatprep.subr.mxu0 0.0
  %113 = vmatpush2.msra.mxu0 0.0
  %114 = vmatprep.subr.mxu0 0.0
  %115 = vmatpush2.msra.mxu0 0.0
  %116 = vmatprep.subr.mxu0 0.0
  %117 = vmatpush2.msra.mxu0 0.0
  %118 = vmatprep.subr.mxu0 0.0
  %119 = vmatpush2.msra.mxu0 0.0
  %120 = vmatprep.subr.mxu0 0.0
  %121 = vmatpush2.msra.mxu0 0.0
  %122 = vmatprep.subr.mxu0 0.0
  %123 = vmatpush2.msra.mxu0 0.0
  %124 = vmatprep.subr.mxu0 0.0
  %125 = vmatpush2.msra.mxu0 0.0
  %126 = vmatprep.subr.mxu0 0.0
  %127 = vmatpush2.msra.mxu0 0.0
  %128 = vmatprep.subr.mxu0 0.0
  %129 = vmatpush2.msra.mxu0 0.0
  %130 = vmatprep.subr.mxu0 0.0
  %131 = vmatpush2.msra.mxu0 0.0
  %132 = vmatprep.subr.mxu0 0.0
  %133 = vmatpush2.msra.mxu0 0.0
  %134 = vmatprep.subr.mxu0 0.0
  %135 = vmatpush2.msra.mxu0 0.0
  %136 = vmatprep.subr.mxu0 0.0
  %137 = vmatpush2.msra.mxu0 0.0
  %138 = vmatprep.subr.mxu0 0.0
  %139 = vmatpush2.msra.mxu0 0.0
  %140 = vmatprep.mubr.f32.mxu0 0.0
  %141 = vmatmul.mubr.f32.gmra.mxu0 %v65
  %v142 = vpop.f32.mrf.mxu0
  %v143 = vadd.f32 %v62, %v142
  %v144 = vpop.f32.mrf.mxu0
  %145 = vmatprep.mubr.f32.mxu0 0.0
  %146 = vmatmul.mubr.f32.gmra.mxu0 %v68
  %v147 = vpop.f32.mrf.mxu0
  %v148 = vadd.f32 %v62, %v147
  %v149 = vpop.f32.mrf.mxu0
  %150 = vmatprep.mubr.f32.mxu0 0.0
  %151 = vmatmul.mubr.f32.gmra.mxu0 %v71
  %v152 = vpop.f32.mrf.mxu0
  %v153 = vadd.f32 %v62, %v152
  %v154 = vpop.f32.mrf.mxu0
  %155 = vmatprep.mubr.f32.mxu0 0.0
  %156 = vmatmul.mubr.f32.gmra.mxu0 %v74
  %v157 = vpop.f32.mrf.mxu0
  %v158 = vadd.f32 %v62, %v157
  %v159 = vpop.f32.mrf.mxu0
  %160 = vdwg.mxu0
  %v161 = vmax.f32 %v143, 0.0
  %v162 = vmax.f32 %v148, 0.0
  %v163 = vmax.f32 %v153, 0.0
  %v164 = vmax.f32 %v158, 0.0
  %v165 = vld [vmem:[%s1] sm:$0xff]
  %v166 = vld [vmem:[%s1 + $0x8] sm:$0xff]
  %v167 = vld [vmem:[%s1 + $0x10] sm:$0xff]
  %v168 = vld [vmem:[%s1 + $0x18] sm:$0xff]
  %v170 = vsel %vm63, %v165, 0
  %v173 = vsel %vm63, %v166, 0
  %v176 = vsel %vm63, %v167, 0
  %v179 = vsel %vm63, %v168, 0
  %181 = vmatprep.subr.mxu0 0.0
  %182 = vmatpush1.msra.mxu0 0.0
  %183 = vmatprep.subr.mxu0 0.0
  %184 = vmatpush1.msra.mxu0 0.0
  %185 = vmatprep.subr.mxu0 0.0
  %186 = vmatpush1.msra.mxu0 0.0
  %187 = vmatprep.subr.mxu0 0.0
  %188 = vmatpush1.msra.mxu0 0.0
  %189 = vmatprep.subr.mxu0 0.0
  %190 = vmatpush1.msra.mxu0 0.0
  %191 = vmatprep.subr.mxu0 0.0
  %192 = vmatpush1.msra.mxu0 0.0
  %193 = vmatprep.subr.mxu0 0.0
  %194 = vmatpush1.msra.mxu0 0.0
  %195 = vmatprep.subr.mxu0 0.0
  %196 = vmatpush1.msra.mxu0 0.0
  %197 = vmatprep.subr.mxu0 0.0
  %198 = vmatpush1.msra.mxu0 0.0
  %199 = vmatprep.subr.mxu0 0.0
  %200 = vmatpush1.msra.mxu0 %v36
  %201 = vmatprep.subr.mxu0 0.0
  %202 = vmatpush1.msra.mxu0 %v35
  %203 = vmatprep.subr.mxu0 0.0
  %204 = vmatpush1.msra.mxu0 %v34
  %205 = vmatprep.subr.mxu0 0.0
  %206 = vmatpush1.msra.mxu0 %v33
  %207 = vmatprep.subr.mxu0 0.0
  %208 = vmatpush1.msra.mxu0 %v32
  %209 = vmatprep.subr.mxu0 0.0
  %210 = vmatpush1.msra.mxu0 %v31
  %211 = vmatprep.subr.mxu0 0.0
  %212 = vmatpush1.msra.mxu0 %v30
  %213 = vmatprep.subr.mxu0 0.0
  %214 = vmatpush2.msra.mxu0 0.0
  %215 = vmatprep.subr.mxu0 0.0
  %216 = vmatpush2.msra.mxu0 0.0
  %217 = vmatprep.subr.mxu0 0.0
  %218 = vmatpush2.msra.mxu0 0.0
  %219 = vmatprep.subr.mxu0 0.0
  %220 = vmatpush2.msra.mxu0 0.0
  %221 = vmatprep.subr.mxu0 0.0
  %222 = vmatpush2.msra.mxu0 0.0
  %223 = vmatprep.subr.mxu0 0.0
  %224 = vmatpush2.msra.mxu0 0.0
  %225 = vmatprep.subr.mxu0 0.0
  %226 = vmatpush2.msra.mxu0 0.0
  %227 = vmatprep.subr.mxu0 0.0
  %228 = vmatpush2.msra.mxu0 0.0
  %229 = vmatprep.subr.mxu0 0.0
  %230 = vmatpush2.msra.mxu0 0.0
  %231 = vmatprep.subr.mxu0 0.0
  %232 = vmatpush2.msra.mxu0 0.0
  %233 = vmatprep.subr.mxu0 0.0
  %234 = vmatpush2.msra.mxu0 0.0
  %235 = vmatprep.subr.mxu0 0.0
  %236 = vmatpush2.msra.mxu0 0.0
  %237 = vmatprep.subr.mxu0 0.0
  %238 = vmatpush2.msra.mxu0 0.0
  %239 = vmatprep.subr.mxu0 0.0
  %240 = vmatpush2.msra.mxu0 0.0
  %241 = vmatprep.subr.mxu0 0.0
  %242 = vmatpush2.msra.mxu0 0.0
  %243 = vmatprep.subr.mxu0 0.0
  %244 = vmatpush2.msra.mxu0 0.0
  %245 = vmatprep.mubr.f32.mxu0 0.0
  %246 = vmatmul.mubr.f32.gmra.mxu0 %v170
  %v247 = vpop.f32.mrf.mxu0
  %v248 = vadd.f32 %v62, %v247
  %v249 = vpop.f32.mrf.mxu0
  %250 = vmatprep.mubr.f32.mxu0 0.0
  %251 = vmatmul.mubr.f32.gmra.mxu0 %v173
  %v252 = vpop.f32.mrf.mxu0
  %v253 = vadd.f32 %v62, %v252
  %v254 = vpop.f32.mrf.mxu0
  %255 = vmatprep.mubr.f32.mxu0 0.0
  %256 = vmatmul.mubr.f32.gmra.mxu0 %v176
  %v257 = vpop.f32.mrf.mxu0
  %v258 = vadd.f32 %v62, %v257
  %v259 = vpop.f32.mrf.mxu0
  %260 = vmatprep.mubr.f32.mxu0 0.0
  %261 = vmatmul.mubr.f32.gmra.mxu0 %v179
  %v262 = vpop.f32.mrf.mxu0
  %v263 = vadd.f32 %v62, %v262
  %v264 = vpop.f32.mrf.mxu0
  %265 = vdwg.mxu0
  %v266 = vmax.f32 %v248, 0.0
  %v267 = vmax.f32 %v253, 0.0
  %v268 = vmax.f32 %v258, 0.0
  %v269 = vmax.f32 %v263, 0.0
  %vm270 = vcmask 130048
  %v272 = vsel %vm270, %v266, 0
  %v275 = vsel %vm270, %v267, 0
  %v278 = vsel %vm270, %v268, 0
  %v281 = vsel %vm270, %v269, 0
  %283 = vmatprep.subr.mxu0 0.0
  %284 = vmatpush1.msra.mxu0 0.0
  %285 = vmatprep.subr.mxu0 0.0
  %286 = vmatpush1.msra.mxu0 0.0
  %287 = vmatprep.subr.mxu0 0.0
  %288 = vmatpush1.msra.mxu0 0.0
  %289 = vmatprep.subr.mxu0 0.0
  %290 = vmatpush1.msra.mxu0 0.0
  %291 = vmatprep.subr.mxu0 0.0
  %292 = vmatpush1.msra.mxu0 0.0
  %293 = vmatprep.subr.mxu0 0.0
  %294 = vmatpush1.msra.mxu0 0.0
  %295 = vmatprep.subr.mxu0 0.0
  %296 = vmatpush1.msra.mxu0 0.0
  %297 = vmatprep.subr.mxu0 0.0
  %298 = vmatpush1.msra.mxu0 0.0
  %299 = vmatprep.subr.mxu0 0.0
  %300 = vmatpush1.msra.mxu0 0.0
  %301 = vmatprep.subr.mxu0 0.0
  %302 = vmatpush1.msra.mxu0 0.0
  %303 = vmatprep.subr.mxu0 0.0
  %304 = vmatpush1.msra.mxu0 0.0
  %305 = vmatprep.subr.mxu0 0.0
  %306 = vmatpush1.msra.mxu0 0.0
  %307 = vmatprep.subr.mxu0 0.0
  %308 = vmatpush1.msra.mxu0 0.0
  %309 = vmatprep.subr.mxu0 0.0
  %310 = vmatpush1.msra.mxu0 0.0
  %311 = vmatprep.subr.mxu0 0.0
  %312 = vmatpush1.msra.mxu0 %v38
  %313 = vmatprep.subr.mxu0 0.0
  %314 = vmatpush1.msra.mxu0 %v37
  %315 = vmatprep.subr.mxu0 0.0
  %316 = vmatpush2.msra.mxu0 0.0
  %317 = vmatprep.subr.mxu0 0.0
  %318 = vmatpush2.msra.mxu0 0.0
  %319 = vmatprep.subr.mxu0 0.0
  %320 = vmatpush2.msra.mxu0 0.0
  %321 = vmatprep.subr.mxu0 0.0
  %322 = vmatpush2.msra.mxu0 0.0
  %323 = vmatprep.subr.mxu0 0.0
  %324 = vmatpush2.msra.mxu0 0.0
  %325 = vmatprep.subr.mxu0 0.0
  %326 = vmatpush2.msra.mxu0 0.0
  %327 = vmatprep.subr.mxu0 0.0
  %328 = vmatpush2.msra.mxu0 0.0
  %329 = vmatprep.subr.mxu0 0.0
  %330 = vmatpush2.msra.mxu0 0.0
  %331 = vmatprep.subr.mxu0 0.0
  %332 = vmatpush2.msra.mxu0 0.0
  %333 = vmatprep.subr.mxu0 0.0
  %334 = vmatpush2.msra.mxu0 0.0
  %335 = vmatprep.subr.mxu0 0.0
  %336 = vmatpush2.msra.mxu0 0.0
  %337 = vmatprep.subr.mxu0 0.0
  %338 = vmatpush2.msra.mxu0 0.0
  %339 = vmatprep.subr.mxu0 0.0
  %340 = vmatpush2.msra.mxu0 0.0
  %341 = vmatprep.subr.mxu0 0.0
  %342 = vmatpush2.msra.mxu0 0.0
  %343 = vmatprep.subr.mxu0 0.0
  %344 = vmatpush2.msra.mxu0 0.0
  %345 = vmatprep.subr.mxu0 0.0
  %346 = vmatpush2.msra.mxu0 0.0
  %347 = vmatprep.mubr.f32.mxu0 0.0
  %348 = vmatmul.mubr.f32.gmra.mxu0 %v272
  %v349 = vpop.f32.mrf.mxu0
  %v350 = vadd.f32 0.0, %v349
  %v351 = vpop.f32.mrf.mxu0
  %352 = vmatprep.mubr.f32.mxu0 0.0
  %353 = vmatmul.mubr.f32.gmra.mxu0 %v275
  %v354 = vpop.f32.mrf.mxu0
  %v355 = vadd.f32 0.0, %v354
  %v356 = vpop.f32.mrf.mxu0
  %357 = vmatprep.mubr.f32.mxu0 0.0
  %358 = vmatmul.mubr.f32.gmra.mxu0 %v278
  %v359 = vpop.f32.mrf.mxu0
  %v360 = vadd.f32 0.0, %v359
  %v361 = vpop.f32.mrf.mxu0
  %362 = vmatprep.mubr.f32.mxu0 0.0
  %363 = vmatmul.mubr.f32.gmra.mxu0 %v281
  %v364 = vpop.f32.mrf.mxu0
  %v365 = vadd.f32 0.0, %v364
  %v366 = vpop.f32.mrf.mxu0
  %367 = vdwg.mxu0
  %v369 = vsel %vm270, %v161, 0
  %v372 = vsel %vm270, %v162, 0
  %v375 = vsel %vm270, %v163, 0
  %v378 = vsel %vm270, %v164, 0
  %380 = vmatprep.subr.mxu0 0.0
  %381 = vmatpush1.msra.mxu0 0.0
  %382 = vmatprep.subr.mxu0 0.0
  %383 = vmatpush1.msra.mxu0 0.0
  %384 = vmatprep.subr.mxu0 0.0
  %385 = vmatpush1.msra.mxu0 0.0
  %386 = vmatprep.subr.mxu0 0.0
  %387 = vmatpush1.msra.mxu0 0.0
  %388 = vmatprep.subr.mxu0 0.0
  %389 = vmatpush1.msra.mxu0 0.0
  %390 = vmatprep.subr.mxu0 0.0
  %391 = vmatpush1.msra.mxu0 0.0
  %392 = vmatprep.subr.mxu0 0.0
  %393 = vmatpush1.msra.mxu0 0.0
  %394 = vmatprep.subr.mxu0 0.0
  %395 = vmatpush1.msra.mxu0 0.0
  %396 = vmatprep.subr.mxu0 0.0
  %397 = vmatpush1.msra.mxu0 0.0
  %398 = vmatprep.subr.mxu0 0.0
  %399 = vmatpush1.msra.mxu0 0.0
  %400 = vmatprep.subr.mxu0 0.0
  %401 = vmatpush1.msra.mxu0 0.0
  %402 = vmatprep.subr.mxu0 0.0
  %403 = vmatpush1.msra.mxu0 0.0
  %404 = vmatprep.subr.mxu0 0.0
  %405 = vmatpush1.msra.mxu0 0.0
  %406 = vmatprep.subr.mxu0 0.0
  %407 = vmatpush1.msra.mxu0 0.0
  %408 = vmatprep.subr.mxu0 0.0
  %409 = vmatpush1.msra.mxu0 %v40
  %410 = vmatprep.subr.mxu0 0.0
  %411 = vmatpush1.msra.mxu0 %v39
  %412 = vmatprep.subr.mxu0 0.0
  %413 = vmatpush2.msra.mxu0 0.0
  %414 = vmatprep.subr.mxu0 0.0
  %415 = vmatpush2.msra.mxu0 0.0
  %416 = vmatprep.subr.mxu0 0.0
  %417 = vmatpush2.msra.mxu0 0.0
  %418 = vmatprep.subr.mxu0 0.0
  %419 = vmatpush2.msra.mxu0 0.0
  %420 = vmatprep.subr.mxu0 0.0
  %421 = vmatpush2.msra.mxu0 0.0
  %422 = vmatprep.subr.mxu0 0.0
  %423 = vmatpush2.msra.mxu0 0.0
  %424 = vmatprep.subr.mxu0 0.0
  %425 = vmatpush2.msra.mxu0 0.0
  %426 = vmatprep.subr.mxu0 0.0
  %427 = vmatpush2.msra.mxu0 0.0
  %428 = vmatprep.subr.mxu0 0.0
  %429 = vmatpush2.msra.mxu0 0.0
  %430 = vmatprep.subr.mxu0 0.0
  %431 = vmatpush2.msra.mxu0 0.0
  %432 = vmatprep.subr.mxu0 0.0
  %433 = vmatpush2.msra.mxu0 0.0
  %434 = vmatprep.subr.mxu0 0.0
  %435 = vmatpush2.msra.mxu0 0.0
  %436 = vmatprep.subr.mxu0 0.0
  %437 = vmatpush2.msra.mxu0 0.0
  %438 = vmatprep.subr.mxu0 0.0
  %439 = vmatpush2.msra.mxu0 0.0
  %440 = vmatprep.subr.mxu0 0.0
  %441 = vmatpush2.msra.mxu0 0.0
  %442 = vmatprep.subr.mxu0 0.0
  %443 = vmatpush2.msra.mxu0 0.0
  %444 = vmatprep.mubr.f32.mxu0 0.0
  %445 = vmatmul.mubr.f32.gmra.mxu0 %v369
  %v446 = vpop.f32.mrf.mxu0
  %v447 = vadd.f32 0.0, %v446
  %v448 = vpop.f32.mrf.mxu0
  %449 = vmatprep.mubr.f32.mxu0 0.0
  %450 = vmatmul.mubr.f32.gmra.mxu0 %v372
  %v451 = vpop.f32.mrf.mxu0
  %v452 = vadd.f32 0.0, %v451
  %v453 = vpop.f32.mrf.mxu0
  %454 = vmatprep.mubr.f32.mxu0 0.0
  %455 = vmatmul.mubr.f32.gmra.mxu0 %v375
  %v456 = vpop.f32.mrf.mxu0
  %v457 = vadd.f32 0.0, %v456
  %v458 = vpop.f32.mrf.mxu0
  %459 = vmatprep.mubr.f32.mxu0 0.0
  %460 = vmatmul.mubr.f32.gmra.mxu0 %v378
  %v461 = vpop.f32.mrf.mxu0
  %v462 = vadd.f32 0.0, %v461
  %v463 = vpop.f32.mrf.mxu0
  %464 = vdwg.mxu0
  %v465 = vlaneseq
  %v466 = vshrl.u32 %v465, 7
  %v467 = vadd.s32 %v466, 8
  %v468 = vlaneseq
  %v469 = vand.u32 %v468, 127
  %v470 = vadd.s32 %v466, 4294967295
  %v471 = vadd.s32 %v467, 4294967295
  %vm472 = vcmp.eq.s32.totalorder %v469, %v470
  %vm473 = vcmp.eq.s32.totalorder %v469, %v471
  %v474 = vsel %vm472, 1, 0
  %v475 = vsel %vm473, 1, 0
  %v476 = vcvt.s32.f32 %v474
  %v477 = vcvt.s32.f32 %v475
  %vm478 = vcmp.eq.s32.totalorder %v469, %v466
  %vm479 = vcmp.eq.s32.totalorder %v469, %v467
  %v480 = vsel %vm478, 1, 0
  %v481 = vsel %vm479, 1, 0
  %v482 = vcvt.s32.f32 %v480
  %v483 = vcvt.s32.f32 %v481
  %v484 = vadd.s32 %v466, 1
  %v485 = vadd.s32 %v467, 1
  %vm486 = vcmp.eq.s32.totalorder %v469, %v484
  %vm487 = vcmp.eq.s32.totalorder %v469, %v485
  %v488 = vsel %vm486, 1, 0
  %v489 = vsel %vm487, 1, 0
  %v490 = vcvt.s32.f32 %v488
  %v491 = vcvt.s32.f32 %v489
  %vm492 = vcmask 64512
  %v494 = vsel %vm492, %v482, 0
  %v497 = vsel %vm492, %v483, 0
  %499 = vmatprep.subr.mxu0 0.0
  %500 = vmatpush1.msra.mxu0 0.0
  %501 = vmatprep.subr.mxu0 0.0
  %502 = vmatpush1.msra.mxu0 0.0
  %503 = vmatprep.subr.mxu0 0.0
  %504 = vmatpush1.msra.mxu0 0.0
  %505 = vmatprep.subr.mxu0 0.0
  %506 = vmatpush1.msra.mxu0 0.0
  %507 = vmatprep.subr.mxu0 0.0
  %508 = vmatpush1.msra.mxu0 0.0
  %509 = vmatprep.subr.mxu0 0.0
  %510 = vmatpush1.msra.mxu0 0.0
  %511 = vmatprep.subr.mxu0 0.0
  %512 = vmatpush1.msra.mxu0 0.0
  %513 = vmatprep.subr.mxu0 0.0
  %514 = vmatpush1.msra.mxu0 0.0
  %515 = vmatprep.subr.mxu0 0.0
  %516 = vmatpush1.msra.mxu0 0.0
  %517 = vmatprep.subr.mxu0 0.0
  %518 = vmatpush1.msra.mxu0 0.0
  %519 = vmatprep.subr.mxu0 0.0
  %520 = vmatpush1.msra.mxu0 0.0
  %521 = vmatprep.subr.mxu0 0.0
  %522 = vmatpush1.msra.mxu0 0.0
  %523 = vmatprep.subr.mxu0 0.0
  %524 = vmatpush1.msra.mxu0 0.0
  %525 = vmatprep.subr.mxu0 0.0
  %526 = vmatpush1.msra.mxu0 0.0
  %527 = vmatprep.subr.mxu0 0.0
  %528 = vmatpush1.msra.mxu0 0.0
  %529 = vmatprep.subr.mxu0 0.0
  %530 = vmatpush1.msra.mxu0 %v447
  %531 = vmatprep.subr.mxu0 0.0
  %532 = vmatpush2.msra.mxu0 0.0
  %533 = vmatprep.subr.mxu0 0.0
  %534 = vmatpush2.msra.mxu0 0.0
  %535 = vmatprep.subr.mxu0 0.0
  %536 = vmatpush2.msra.mxu0 0.0
  %537 = vmatprep.subr.mxu0 0.0
  %538 = vmatpush2.msra.mxu0 0.0
  %539 = vmatprep.subr.mxu0 0.0
  %540 = vmatpush2.msra.mxu0 0.0
  %541 = vmatprep.subr.mxu0 0.0
  %542 = vmatpush2.msra.mxu0 0.0
  %543 = vmatprep.subr.mxu0 0.0
  %544 = vmatpush2.msra.mxu0 0.0
  %545 = vmatprep.subr.mxu0 0.0
  %546 = vmatpush2.msra.mxu0 0.0
  %547 = vmatprep.subr.mxu0 0.0
  %548 = vmatpush2.msra.mxu0 0.0
  %549 = vmatprep.subr.mxu0 0.0
  %550 = vmatpush2.msra.mxu0 0.0
  %551 = vmatprep.subr.mxu0 0.0
  %552 = vmatpush2.msra.mxu0 0.0
  %553 = vmatprep.subr.mxu0 0.0
  %554 = vmatpush2.msra.mxu0 0.0
  %555 = vmatprep.subr.mxu0 0.0
  %556 = vmatpush2.msra.mxu0 0.0
  %557 = vmatprep.subr.mxu0 0.0
  %558 = vmatpush2.msra.mxu0 0.0
  %559 = vmatprep.subr.mxu0 0.0
  %560 = vmatpush2.msra.mxu0 0.0
  %561 = vmatprep.subr.mxu0 0.0
  %562 = vmatpush2.msra.mxu0 0.0
  %563 = vmatprep.mubr.f32.mxu0 0.0
  %564 = vmatmul.mubr.f32.gmra.mxu0 %v494
  %v565 = vpop.f32.mrf.mxu0
  %v566 = vadd.f32 0.0, %v565
  %v567 = vpop.f32.mrf.mxu0
  %568 = vmatprep.mubr.f32.mxu0 0.0
  %569 = vmatmul.mubr.f32.gmra.mxu0 %v497
  %v570 = vpop.f32.mrf.mxu0
  %v571 = vadd.f32 0.0, %v570
  %v572 = vpop.f32.mrf.mxu0
  %573 = vdwg.mxu0
  %v575 = vsel %vm492, %v476, 0
  %v578 = vsel %vm492, %v477, 0
  %580 = vmatprep.subr.mxu0 0.0
  %581 = vmatpush1.msra.mxu0 0.0
  %582 = vmatprep.subr.mxu0 0.0
  %583 = vmatpush1.msra.mxu0 0.0
  %584 = vmatprep.subr.mxu0 0.0
  %585 = vmatpush1.msra.mxu0 0.0
  %586 = vmatprep.subr.mxu0 0.0
  %587 = vmatpush1.msra.mxu0 0.0
  %588 = vmatprep.subr.mxu0 0.0
  %589 = vmatpush1.msra.mxu0 0.0
  %590 = vmatprep.subr.mxu0 0.0
  %591 = vmatpush1.msra.mxu0 0.0
  %592 = vmatprep.subr.mxu0 0.0
  %593 = vmatpush1.msra.mxu0 0.0
  %594 = vmatprep.subr.mxu0 0.0
  %595 = vmatpush1.msra.mxu0 0.0
  %596 = vmatprep.subr.mxu0 0.0
  %597 = vmatpush1.msra.mxu0 0.0
  %598 = vmatprep.subr.mxu0 0.0
  %599 = vmatpush1.msra.mxu0 0.0
  %600 = vmatprep.subr.mxu0 0.0
  %601 = vmatpush1.msra.mxu0 0.0
  %602 = vmatprep.subr.mxu0 0.0
  %603 = vmatpush1.msra.mxu0 0.0
  %604 = vmatprep.subr.mxu0 0.0
  %605 = vmatpush1.msra.mxu0 0.0
  %606 = vmatprep.subr.mxu0 0.0
  %607 = vmatpush1.msra.mxu0 0.0
  %608 = vmatprep.subr.mxu0 0.0
  %609 = vmatpush1.msra.mxu0 0.0
  %610 = vmatprep.subr.mxu0 0.0
  %611 = vmatpush1.msra.mxu0 %v350
  %612 = vmatprep.subr.mxu0 0.0
  %613 = vmatpush2.msra.mxu0 0.0
  %614 = vmatprep.subr.mxu0 0.0
  %615 = vmatpush2.msra.mxu0 0.0
  %616 = vmatprep.subr.mxu0 0.0
  %617 = vmatpush2.msra.mxu0 0.0
  %618 = vmatprep.subr.mxu0 0.0
  %619 = vmatpush2.msra.mxu0 0.0
  %620 = vmatprep.subr.mxu0 0.0
  %621 = vmatpush2.msra.mxu0 0.0
  %622 = vmatprep.subr.mxu0 0.0
  %623 = vmatpush2.msra.mxu0 0.0
  %624 = vmatprep.subr.mxu0 0.0
  %625 = vmatpush2.msra.mxu0 0.0
  %626 = vmatprep.subr.mxu0 0.0
  %627 = vmatpush2.msra.mxu0 0.0
  %628 = vmatprep.subr.mxu0 0.0
  %629 = vmatpush2.msra.mxu0 0.0
  %630 = vmatprep.subr.mxu0 0.0
  %631 = vmatpush2.msra.mxu0 0.0
  %632 = vmatprep.subr.mxu0 0.0
  %633 = vmatpush2.msra.mxu0 0.0
  %634 = vmatprep.subr.mxu0 0.0
  %635 = vmatpush2.msra.mxu0 0.0
  %636 = vmatprep.subr.mxu0 0.0
  %637 = vmatpush2.msra.mxu0 0.0
  %638 = vmatprep.subr.mxu0 0.0
  %639 = vmatpush2.msra.mxu0 0.0
  %640 = vmatprep.subr.mxu0 0.0
  %641 = vmatpush2.msra.mxu0 0.0
  %642 = vmatprep.subr.mxu0 0.0
  %643 = vmatpush2.msra.mxu0 0.0
  %644 = vmatprep.mubr.f32.mxu0 0.0
  %645 = vmatmul.mubr.f32.gmra.mxu0 %v575
  %v646 = vpop.f32.mrf.mxu0
  %v647 = vadd.f32 %v566, %v646
  %v648 = vpop.f32.mrf.mxu0
  %649 = vmatprep.mubr.f32.mxu0 0.0
  %650 = vmatmul.mubr.f32.gmra.mxu0 %v578
  %v651 = vpop.f32.mrf.mxu0
  %v652 = vadd.f32 %v571, %v651
  %v653 = vpop.f32.mrf.mxu0
  %654 = vdwg.mxu0
  %v655 = vlaneseq
  %v656 = vshrl.u32 %v655, 7
  %v657 = vsub.s32 1, %v656
  %v658 = vrot.slane %v29, %v657
  %v659 = vadd.f32 %v647, %v658
  %v660 = vadd.f32 %v652, %v658
  %v661 = vmax.f32 %v659, 0.0
  %v662 = vmax.f32 %v660, 0.0
  %v664 = vsel %vm270, %v661, 0
  %v667 = vsel %vm270, %v662, 0
  %669 = vmatprep.subr.mxu0 0.0
  %670 = vmatpush1.msra.mxu0 0.0
  %671 = vmatprep.subr.mxu0 0.0
  %672 = vmatpush1.msra.mxu0 0.0
  %673 = vmatprep.subr.mxu0 0.0
  %674 = vmatpush1.msra.mxu0 0.0
  %675 = vmatprep.subr.mxu0 0.0
  %676 = vmatpush1.msra.mxu0 0.0
  %677 = vmatprep.subr.mxu0 0.0
  %678 = vmatpush1.msra.mxu0 0.0
  %679 = vmatprep.subr.mxu0 0.0
  %680 = vmatpush1.msra.mxu0 0.0
  %681 = vmatprep.subr.mxu0 0.0
  %682 = vmatpush1.msra.mxu0 0.0
  %683 = vmatprep.subr.mxu0 0.0
  %684 = vmatpush1.msra.mxu0 0.0
  %685 = vmatprep.subr.mxu0 0.0
  %686 = vmatpush1.msra.mxu0 0.0
  %687 = vmatprep.subr.mxu0 0.0
  %688 = vmatpush1.msra.mxu0 0.0
  %689 = vmatprep.subr.mxu0 0.0
  %690 = vmatpush1.msra.mxu0 0.0
  %691 = vmatprep.subr.mxu0 0.0
  %692 = vmatpush1.msra.mxu0 0.0
  %693 = vmatprep.subr.mxu0 0.0
  %694 = vmatpush1.msra.mxu0 0.0
  %695 = vmatprep.subr.mxu0 0.0
  %696 = vmatpush1.msra.mxu0 0.0
  %697 = vmatprep.subr.mxu0 0.0
  %698 = vmatpush1.msra.mxu0 %v42
  %699 = vmatprep.subr.mxu0 0.0
  %700 = vmatpush1.msra.mxu0 %v41
  %701 = vmatprep.subr.mxu0 0.0
  %702 = vmatpush2.msra.mxu0 0.0
  %703 = vmatprep.subr.mxu0 0.0
  %704 = vmatpush2.msra.mxu0 0.0
  %705 = vmatprep.subr.mxu0 0.0
  %706 = vmatpush2.msra.mxu0 0.0
  %707 = vmatprep.subr.mxu0 0.0
  %708 = vmatpush2.msra.mxu0 0.0
  %709 = vmatprep.subr.mxu0 0.0
  %710 = vmatpush2.msra.mxu0 0.0
  %711 = vmatprep.subr.mxu0 0.0
  %712 = vmatpush2.msra.mxu0 0.0
  %713 = vmatprep.subr.mxu0 0.0
  %714 = vmatpush2.msra.mxu0 0.0
  %715 = vmatprep.subr.mxu0 0.0
  %716 = vmatpush2.msra.mxu0 0.0
  %717 = vmatprep.subr.mxu0 0.0
  %718 = vmatpush2.msra.mxu0 0.0
  %719 = vmatprep.subr.mxu0 0.0
  %720 = vmatpush2.msra.mxu0 0.0
  %721 = vmatprep.subr.mxu0 0.0
  %722 = vmatpush2.msra.mxu0 0.0
  %723 = vmatprep.subr.mxu0 0.0
  %724 = vmatpush2.msra.mxu0 0.0
  %725 = vmatprep.subr.mxu0 0.0
  %726 = vmatpush2.msra.mxu0 0.0
  %727 = vmatprep.subr.mxu0 0.0
  %728 = vmatpush2.msra.mxu0 0.0
  %729 = vmatprep.subr.mxu0 0.0
  %730 = vmatpush2.msra.mxu0 0.0
  %731 = vmatprep.subr.mxu0 0.0
  %732 = vmatpush2.msra.mxu0 0.0
  %733 = vmatprep.mubr.f32.mxu0 0.0
  %734 = vmatmul.mubr.f32.gmra.mxu0 %v664
  %v735 = vpop.f32.mrf.mxu0
  %v736 = vadd.f32 0.0, %v735
  %v737 = vpop.f32.mrf.mxu0
  %738 = vmatprep.mubr.f32.mxu0 0.0
  %739 = vmatmul.mubr.f32.gmra.mxu0 %v667
  %v740 = vpop.f32.mrf.mxu0
  %v741 = vadd.f32 0.0, %v740
  %v742 = vpop.f32.mrf.mxu0
  %743 = vdwg.mxu0
  %744 = vmatprep.subr.mxu0 0.0
  %745 = vmatpush1.msra.mxu0 0.0
  %746 = vmatprep.subr.mxu0 0.0
  %747 = vmatpush1.msra.mxu0 0.0
  %748 = vmatprep.subr.mxu0 0.0
  %749 = vmatpush1.msra.mxu0 0.0
  %750 = vmatprep.subr.mxu0 0.0
  %751 = vmatpush1.msra.mxu0 0.0
  %752 = vmatprep.subr.mxu0 0.0
  %753 = vmatpush1.msra.mxu0 0.0
  %754 = vmatprep.subr.mxu0 0.0
  %755 = vmatpush1.msra.mxu0 0.0
  %756 = vmatprep.subr.mxu0 0.0
  %757 = vmatpush1.msra.mxu0 0.0
  %758 = vmatprep.subr.mxu0 0.0
  %759 = vmatpush1.msra.mxu0 0.0
  %760 = vmatprep.subr.mxu0 0.0
  %761 = vmatpush1.msra.mxu0 0.0
  %762 = vmatprep.subr.mxu0 0.0
  %763 = vmatpush1.msra.mxu0 0.0
  %764 = vmatprep.subr.mxu0 0.0
  %765 = vmatpush1.msra.mxu0 0.0
  %766 = vmatprep.subr.mxu0 0.0
  %767 = vmatpush1.msra.mxu0 0.0
  %768 = vmatprep.subr.mxu0 0.0
  %769 = vmatpush1.msra.mxu0 0.0
  %770 = vmatprep.subr.mxu0 0.0
  %771 = vmatpush1.msra.mxu0 0.0
  %772 = vmatprep.subr.mxu0 0.0
  %773 = vmatpush1.msra.mxu0 %v44
  %774 = vmatprep.subr.mxu0 0.0
  %775 = vmatpush1.msra.mxu0 %v43
  %776 = vmatprep.subr.mxu0 0.0
  %777 = vmatpush2.msra.mxu0 0.0
  %778 = vmatprep.subr.mxu0 0.0
  %779 = vmatpush2.msra.mxu0 0.0
  %780 = vmatprep.subr.mxu0 0.0
  %781 = vmatpush2.msra.mxu0 0.0
  %782 = vmatprep.subr.mxu0 0.0
  %783 = vmatpush2.msra.mxu0 0.0
  %784 = vmatprep.subr.mxu0 0.0
  %785 = vmatpush2.msra.mxu0 0.0
  %786 = vmatprep.subr.mxu0 0.0
  %787 = vmatpush2.msra.mxu0 0.0
  %788 = vmatprep.subr.mxu0 0.0
  %789 = vmatpush2.msra.mxu0 0.0
  %790 = vmatprep.subr.mxu0 0.0
  %791 = vmatpush2.msra.mxu0 0.0
  %792 = vmatprep.subr.mxu0 0.0
  %793 = vmatpush2.msra.mxu0 0.0
  %794 = vmatprep.subr.mxu0 0.0
  %795 = vmatpush2.msra.mxu0 0.0
  %796 = vmatprep.subr.mxu0 0.0
  %797 = vmatpush2.msra.mxu0 0.0
  %798 = vmatprep.subr.mxu0 0.0
  %799 = vmatpush2.msra.mxu0 0.0
  %800 = vmatprep.subr.mxu0 0.0
  %801 = vmatpush2.msra.mxu0 0.0
  %802 = vmatprep.subr.mxu0 0.0
  %803 = vmatpush2.msra.mxu0 0.0
  %804 = vmatprep.subr.mxu0 0.0
  %805 = vmatpush2.msra.mxu0 0.0
  %806 = vmatprep.subr.mxu0 0.0
  %807 = vmatpush2.msra.mxu0 0.0
  %808 = vmatprep.mubr.f32.mxu0 0.0
  %809 = vmatmul.mubr.f32.gmra.mxu0 %v664
  %v810 = vpop.f32.mrf.mxu0
  %v811 = vadd.f32 0.0, %v810
  %v812 = vpop.f32.mrf.mxu0
  %813 = vmatprep.mubr.f32.mxu0 0.0
  %814 = vmatmul.mubr.f32.gmra.mxu0 %v667
  %v815 = vpop.f32.mrf.mxu0
  %v816 = vadd.f32 0.0, %v815
  %v817 = vpop.f32.mrf.mxu0
  %818 = vdwg.mxu0
  %819 = vmatprep.subr.mxu0 0.0
  %820 = vmatpush1.msra.mxu0 0.0
  %821 = vmatprep.subr.mxu0 0.0
  %822 = vmatpush1.msra.mxu0 0.0
  %823 = vmatprep.subr.mxu0 0.0
  %824 = vmatpush1.msra.mxu0 0.0
  %825 = vmatprep.subr.mxu0 0.0
  %826 = vmatpush1.msra.mxu0 0.0
  %827 = vmatprep.subr.mxu0 0.0
  %828 = vmatpush1.msra.mxu0 0.0
  %829 = vmatprep.subr.mxu0 0.0
  %830 = vmatpush1.msra.mxu0 0.0
  %831 = vmatprep.subr.mxu0 0.0
  %832 = vmatpush1.msra.mxu0 0.0
  %833 = vmatprep.subr.mxu0 0.0
  %834 = vmatpush1.msra.mxu0 0.0
  %835 = vmatprep.subr.mxu0 0.0
  %836 = vmatpush1.msra.mxu0 0.0
  %837 = vmatprep.subr.mxu0 0.0
  %838 = vmatpush1.msra.mxu0 0.0
  %839 = vmatprep.subr.mxu0 0.0
  %840 = vmatpush1.msra.mxu0 0.0
  %841 = vmatprep.subr.mxu0 0.0
  %842 = vmatpush1.msra.mxu0 0.0
  %843 = vmatprep.subr.mxu0 0.0
  %844 = vmatpush1.msra.mxu0 0.0
  %845 = vmatprep.subr.mxu0 0.0
  %846 = vmatpush1.msra.mxu0 0.0
  %847 = vmatprep.subr.mxu0 0.0
  %848 = vmatpush1.msra.mxu0 %v46
  %849 = vmatprep.subr.mxu0 0.0
  %850 = vmatpush1.msra.mxu0 %v45
  %851 = vmatprep.subr.mxu0 0.0
  %852 = vmatpush2.msra.mxu0 0.0
  %853 = vmatprep.subr.mxu0 0.0
  %854 = vmatpush2.msra.mxu0 0.0
  %855 = vmatprep.subr.mxu0 0.0
  %856 = vmatpush2.msra.mxu0 0.0
  %857 = vmatprep.subr.mxu0 0.0
  %858 = vmatpush2.msra.mxu0 0.0
  %859 = vmatprep.subr.mxu0 0.0
  %860 = vmatpush2.msra.mxu0 0.0
  %861 = vmatprep.subr.mxu0 0.0
  %862 = vmatpush2.msra.mxu0 0.0
  %863 = vmatprep.subr.mxu0 0.0
  %864 = vmatpush2.msra.mxu0 0.0
  %865 = vmatprep.subr.mxu0 0.0
  %866 = vmatpush2.msra.mxu0 0.0
  %867 = vmatprep.subr.mxu0 0.0
  %868 = vmatpush2.msra.mxu0 0.0
  %869 = vmatprep.subr.mxu0 0.0
  %870 = vmatpush2.msra.mxu0 0.0
  %871 = vmatprep.subr.mxu0 0.0
  %872 = vmatpush2.msra.mxu0 0.0
  %873 = vmatprep.subr.mxu0 0.0
  %874 = vmatpush2.msra.mxu0 0.0
  %875 = vmatprep.subr.mxu0 0.0
  %876 = vmatpush2.msra.mxu0 0.0
  %877 = vmatprep.subr.mxu0 0.0
  %878 = vmatpush2.msra.mxu0 0.0
  %879 = vmatprep.subr.mxu0 0.0
  %880 = vmatpush2.msra.mxu0 0.0
  %881 = vmatprep.subr.mxu0 0.0
  %882 = vmatpush2.msra.mxu0 0.0
  %883 = vmatprep.mubr.f32.mxu0 0.0
  %884 = vmatmul.mubr.f32.gmra.mxu0 %v664
  %v885 = vpop.f32.mrf.mxu0
  %v886 = vadd.f32 0.0, %v885
  %v887 = vpop.f32.mrf.mxu0
  %888 = vmatprep.mubr.f32.mxu0 0.0
  %889 = vmatmul.mubr.f32.gmra.mxu0 %v667
  %v890 = vpop.f32.mrf.mxu0
  %v891 = vadd.f32 0.0, %v890
  %v892 = vpop.f32.mrf.mxu0
  %893 = vdwg.mxu0
  %vm894 = vcmask 72704
  %v896 = vsel %vm894, %v490, 0
  %v899 = vsel %vm894, %v491, 0
  %vm901 = vcmask 1040384
  %v903 = vsel %vm901, %v891, 0
  %905 = vmatprep.subr.mxu0 0.0
  %906 = vmatpush1.msra.mxu0 0.0
  %907 = vmatprep.subr.mxu0 0.0
  %908 = vmatpush1.msra.mxu0 0.0
  %909 = vmatprep.subr.mxu0 0.0
  %910 = vmatpush1.msra.mxu0 0.0
  %911 = vmatprep.subr.mxu0 0.0
  %912 = vmatpush1.msra.mxu0 0.0
  %913 = vmatprep.subr.mxu0 0.0
  %914 = vmatpush1.msra.mxu0 0.0
  %915 = vmatprep.subr.mxu0 0.0
  %916 = vmatpush1.msra.mxu0 0.0
  %917 = vmatprep.subr.mxu0 0.0
  %918 = vmatpush1.msra.mxu0 0.0
  %919 = vmatprep.subr.mxu0 0.0
  %920 = vmatpush1.msra.mxu0 0.0
  %921 = vmatprep.subr.mxu0 0.0
  %922 = vmatpush1.msra.mxu0 0.0
  %923 = vmatprep.subr.mxu0 0.0
  %924 = vmatpush1.msra.mxu0 0.0
  %925 = vmatprep.subr.mxu0 0.0
  %926 = vmatpush1.msra.mxu0 0.0
  %927 = vmatprep.subr.mxu0 0.0
  %928 = vmatpush1.msra.mxu0 0.0
  %929 = vmatprep.subr.mxu0 0.0
  %930 = vmatpush1.msra.mxu0 0.0
  %931 = vmatprep.subr.mxu0 0.0
  %932 = vmatpush1.msra.mxu0 0.0
  %933 = vmatprep.subr.mxu0 0.0
  %934 = vmatpush1.msra.mxu0 %v903
  %935 = vmatprep.subr.mxu0 0.0
  %936 = vmatpush1.msra.mxu0 %v886
  %937 = vmatprep.subr.mxu0 0.0
  %938 = vmatpush2.msra.mxu0 0.0
  %939 = vmatprep.subr.mxu0 0.0
  %940 = vmatpush2.msra.mxu0 0.0
  %941 = vmatprep.subr.mxu0 0.0
  %942 = vmatpush2.msra.mxu0 0.0
  %943 = vmatprep.subr.mxu0 0.0
  %944 = vmatpush2.msra.mxu0 0.0
  %945 = vmatprep.subr.mxu0 0.0
  %946 = vmatpush2.msra.mxu0 0.0
  %947 = vmatprep.subr.mxu0 0.0
  %948 = vmatpush2.msra.mxu0 0.0
  %949 = vmatprep.subr.mxu0 0.0
  %950 = vmatpush2.msra.mxu0 0.0
  %951 = vmatprep.subr.mxu0 0.0
  %952 = vmatpush2.msra.mxu0 0.0
  %953 = vmatprep.subr.mxu0 0.0
  %954 = vmatpush2.msra.mxu0 0.0
  %955 = vmatprep.subr.mxu0 0.0
  %956 = vmatpush2.msra.mxu0 0.0
  %957 = vmatprep.subr.mxu0 0.0
  %958 = vmatpush2.msra.mxu0 0.0
  %959 = vmatprep.subr.mxu0 0.0
  %960 = vmatpush2.msra.mxu0 0.0
  %961 = vmatprep.subr.mxu0 0.0
  %962 = vmatpush2.msra.mxu0 0.0
  %963 = vmatprep.subr.mxu0 0.0
  %964 = vmatpush2.msra.mxu0 0.0
  %965 = vmatprep.subr.mxu0 0.0
  %966 = vmatpush2.msra.mxu0 0.0
  %967 = vmatprep.subr.mxu0 0.0
  %968 = vmatpush2.msra.mxu0 0.0
  %969 = vmatprep.mubr.f32.mxu0 0.0
  %970 = vmatmul.mubr.f32.gmra.mxu0 %v896
  %v971 = vpop.f32.mrf.mxu0
  %v972 = vadd.f32 0.0, %v971
  %v973 = vpop.f32.mrf.mxu0
  %974 = vmatprep.mubr.f32.mxu0 0.0
  %975 = vmatmul.mubr.f32.gmra.mxu0 %v899
  %v976 = vpop.f32.mrf.mxu0
  %v977 = vadd.f32 0.0, %v976
  %v978 = vpop.f32.mrf.mxu0
  %979 = vdwg.mxu0
  %v980 = vsel %vm894, %v476, 0
  %v982 = vsel %vm894, %v477, 0
  %v985 = vsel %vm901, %v741, 0
  %987 = vmatprep.subr.mxu0 0.0
  %988 = vmatpush1.msra.mxu0 0.0
  %989 = vmatprep.subr.mxu0 0.0
  %990 = vmatpush1.msra.mxu0 0.0
  %991 = vmatprep.subr.mxu0 0.0
  %992 = vmatpush1.msra.mxu0 0.0
  %993 = vmatprep.subr.mxu0 0.0
  %994 = vmatpush1.msra.mxu0 0.0
  %995 = vmatprep.subr.mxu0 0.0
  %996 = vmatpush1.msra.mxu0 0.0
  %997 = vmatprep.subr.mxu0 0.0
  %998 = vmatpush1.msra.mxu0 0.0
  %999 = vmatprep.subr.mxu0 0.0
  %1000 = vmatpush1.msra.mxu0 0.0
  %1001 = vmatprep.subr.mxu0 0.0
  %1002 = vmatpush1.msra.mxu0 0.0
  %1003 = vmatprep.subr.mxu0 0.0
  %1004 = vmatpush1.msra.mxu0 0.0
  %1005 = vmatprep.subr.mxu0 0.0
  %1006 = vmatpush1.msra.mxu0 0.0
  %1007 = vmatprep.subr.mxu0 0.0
  %1008 = vmatpush1.msra.mxu0 0.0
  %1009 = vmatprep.subr.mxu0 0.0
  %1010 = vmatpush1.msra.mxu0 0.0
  %1011 = vmatprep.subr.mxu0 0.0
  %1012 = vmatpush1.msra.mxu0 0.0
  %1013 = vmatprep.subr.mxu0 0.0
  %1014 = vmatpush1.msra.mxu0 0.0
  %1015 = vmatprep.subr.mxu0 0.0
  %1016 = vmatpush1.msra.mxu0 %v985
  %1017 = vmatprep.subr.mxu0 0.0
  %1018 = vmatpush1.msra.mxu0 %v736
  %1019 = vmatprep.subr.mxu0 0.0
  %1020 = vmatpush2.msra.mxu0 0.0
  %1021 = vmatprep.subr.mxu0 0.0
  %1022 = vmatpush2.msra.mxu0 0.0
  %1023 = vmatprep.subr.mxu0 0.0
  %1024 = vmatpush2.msra.mxu0 0.0
  %1025 = vmatprep.subr.mxu0 0.0
  %1026 = vmatpush2.msra.mxu0 0.0
  %1027 = vmatprep.subr.mxu0 0.0
  %1028 = vmatpush2.msra.mxu0 0.0
  %1029 = vmatprep.subr.mxu0 0.0
  %1030 = vmatpush2.msra.mxu0 0.0
  %1031 = vmatprep.subr.mxu0 0.0
  %1032 = vmatpush2.msra.mxu0 0.0
  %1033 = vmatprep.subr.mxu0 0.0
  %1034 = vmatpush2.msra.mxu0 0.0
  %1035 = vmatprep.subr.mxu0 0.0
  %1036 = vmatpush2.msra.mxu0 0.0
  %1037 = vmatprep.subr.mxu0 0.0
  %1038 = vmatpush2.msra.mxu0 0.0
  %1039 = vmatprep.subr.mxu0 0.0
  %1040 = vmatpush2.msra.mxu0 0.0
  %1041 = vmatprep.subr.mxu0 0.0
  %1042 = vmatpush2.msra.mxu0 0.0
  %1043 = vmatprep.subr.mxu0 0.0
  %1044 = vmatpush2.msra.mxu0 0.0
  %1045 = vmatprep.subr.mxu0 0.0
  %1046 = vmatpush2.msra.mxu0 0.0
  %1047 = vmatprep.subr.mxu0 0.0
  %1048 = vmatpush2.msra.mxu0 0.0
  %1049 = vmatprep.subr.mxu0 0.0
  %1050 = vmatpush2.msra.mxu0 0.0
  %1051 = vmatprep.mubr.f32.mxu0 0.0
  %1052 = vmatmul.mubr.f32.gmra.mxu0 %v980
  %v1053 = vpop.f32.mrf.mxu0
  %v1054 = vadd.f32 %v811, %v1053
  %v1055 = vpop.f32.mrf.mxu0
  %1056 = vmatprep.mubr.f32.mxu0 0.0
  %1057 = vmatmul.mubr.f32.gmra.mxu0 %v982
  %v1058 = vpop.f32.mrf.mxu0
  %v1059 = vadd.f32 %v816, %v1058
  %v1060 = vpop.f32.mrf.mxu0
  %1061 = vdwg.mxu0
  %v1062 = vadd.f32 %v1054, %v972
  %v1063 = vadd.f32 %v1059, %v977
  %v1064 = vlaneseq
  %v1065 = vshrl.u32 %v1064, 7
  %v1066 = vsub.s32 2, %v1065
  %v1067 = vrot.slane %v29, %v1066
  %v1068 = vadd.f32 %v1062, %v1067
  %v1069 = vadd.f32 %v1063, %v1067
  %v1070 = vmax.f32 %v1068, 0.0
  %v1071 = vmax.f32 %v1069, 0.0
  %1073 = vset.pattern.permute.xlu0 0
  %1074 = vperm.xlu0 %1073, %v51
  %v1075 = vpop.permute.xlu0 %1074
  %1078 = vset.pattern.permute.xlu0 0
  %1079 = vperm.xlu0 %1078, %v52
  %v1080 = vpop.permute.xlu0 %1079
  %1083 = vset.pattern.permute.xlu0 0
  %1084 = vperm.xlu0 %1083, %v53
  %v1085 = vpop.permute.xlu0 %1084
  %1088 = vset.pattern.permute.xlu0 0
  %1089 = vperm.xlu0 %1088, %v54
  %v1090 = vpop.permute.xlu0 %1089
  %v1093 = vsel %vm894, %v47, 0
  %v1096 = vsel %vm894, %v48, 0
  %v1099 = vsel %vm894, %v49, 0
  %v1102 = vsel %vm894, %v50, 0
  %v1105 = vsel %vm901, %v1071, 0
  %1107 = vmatprep.subr.mxu0 0.0
  %1108 = vmatpush1.msra.mxu0 0.0
  %1109 = vmatprep.subr.mxu0 0.0
  %1110 = vmatpush1.msra.mxu0 0.0
  %1111 = vmatprep.subr.mxu0 0.0
  %1112 = vmatpush1.msra.mxu0 0.0
  %1113 = vmatprep.subr.mxu0 0.0
  %1114 = vmatpush1.msra.mxu0 0.0
  %1115 = vmatprep.subr.mxu0 0.0
  %1116 = vmatpush1.msra.mxu0 0.0
  %1117 = vmatprep.subr.mxu0 0.0
  %1118 = vmatpush1.msra.mxu0 0.0
  %1119 = vmatprep.subr.mxu0 0.0
  %1120 = vmatpush1.msra.mxu0 0.0
  %1121 = vmatprep.subr.mxu0 0.0
  %1122 = vmatpush1.msra.mxu0 0.0
  %1123 = vmatprep.subr.mxu0 0.0
  %1124 = vmatpush1.msra.mxu0 0.0
  %1125 = vmatprep.subr.mxu0 0.0
  %1126 = vmatpush1.msra.mxu0 0.0
  %1127 = vmatprep.subr.mxu0 0.0
  %1128 = vmatpush1.msra.mxu0 0.0
  %1129 = vmatprep.subr.mxu0 0.0
  %1130 = vmatpush1.msra.mxu0 0.0
  %1131 = vmatprep.subr.mxu0 0.0
  %1132 = vmatpush1.msra.mxu0 0.0
  %1133 = vmatprep.subr.mxu0 0.0
  %1134 = vmatpush1.msra.mxu0 0.0
  %1135 = vmatprep.subr.mxu0 0.0
  %1136 = vmatpush1.msra.mxu0 %v1105
  %1137 = vmatprep.subr.mxu0 0.0
  %1138 = vmatpush1.msra.mxu0 %v1070
  %1139 = vmatprep.subr.mxu0 0.0
  %1140 = vmatpush2.msra.mxu0 0.0
  %1141 = vmatprep.subr.mxu0 0.0
  %1142 = vmatpush2.msra.mxu0 0.0
  %1143 = vmatprep.subr.mxu0 0.0
  %1144 = vmatpush2.msra.mxu0 0.0
  %1145 = vmatprep.subr.mxu0 0.0
  %1146 = vmatpush2.msra.mxu0 0.0
  %1147 = vmatprep.subr.mxu0 0.0
  %1148 = vmatpush2.msra.mxu0 0.0
  %1149 = vmatprep.subr.mxu0 0.0
  %1150 = vmatpush2.msra.mxu0 0.0
  %1151 = vmatprep.subr.mxu0 0.0
  %1152 = vmatpush2.msra.mxu0 0.0
  %1153 = vmatprep.subr.mxu0 0.0
  %1154 = vmatpush2.msra.mxu0 0.0
  %1155 = vmatprep.subr.mxu0 0.0
  %1156 = vmatpush2.msra.mxu0 0.0
  %1157 = vmatprep.subr.mxu0 0.0
  %1158 = vmatpush2.msra.mxu0 0.0
  %1159 = vmatprep.subr.mxu0 0.0
  %1160 = vmatpush2.msra.mxu0 0.0
  %1161 = vmatprep.subr.mxu0 0.0
  %1162 = vmatpush2.msra.mxu0 0.0
  %1163 = vmatprep.subr.mxu0 0.0
  %1164 = vmatpush2.msra.mxu0 0.0
  %1165 = vmatprep.subr.mxu0 0.0
  %1166 = vmatpush2.msra.mxu0 0.0
  %1167 = vmatprep.subr.mxu0 0.0
  %1168 = vmatpush2.msra.mxu0 0.0
  %1169 = vmatprep.subr.mxu0 0.0
  %1170 = vmatpush2.msra.mxu0 0.0
  %1171 = vmatprep.mubr.f32.mxu0 0.0
  %1172 = vmatmul.mubr.f32.gmra.mxu0 %v1093
  %v1173 = vpop.f32.mrf.mxu0
  %v1174 = vadd.f32 %v1075, %v1173
  %v1175 = vpop.f32.mrf.mxu0
  %1176 = vmatprep.mubr.f32.mxu0 0.0
  %1177 = vmatmul.mubr.f32.gmra.mxu0 %v1096
  %v1178 = vpop.f32.mrf.mxu0
  %v1179 = vadd.f32 %v1080, %v1178
  %v1180 = vpop.f32.mrf.mxu0
  %1181 = vmatprep.mubr.f32.mxu0 0.0
  %1182 = vmatmul.mubr.f32.gmra.mxu0 %v1099
  %v1183 = vpop.f32.mrf.mxu0
  %v1184 = vadd.f32 %v1085, %v1183
  %v1185 = vpop.f32.mrf.mxu0
  %1186 = vmatprep.mubr.f32.mxu0 0.0
  %1187 = vmatmul.mubr.f32.gmra.mxu0 %v1102
  %v1188 = vpop.f32.mrf.mxu0
  %v1189 = vadd.f32 %v1090, %v1188
  %v1190 = vpop.f32.mrf.mxu0
  %1191 = vdwg.mxu0
  %vm1192 = vcmask 31744
  %1193 = vst.msk [vmem:[%s8] sm:$0xff] %vm1192, %v1174
  %1194 = vst.msk [vmem:[%s8 + $0x8] sm:$0xff] %vm1192, %v1179
  %1195 = vst.msk [vmem:[%s8 + $0x10] sm:$0xff] %vm1192, %v1184
  %1196 = vst.msk [vmem:[%s8 + $0x18] sm:$0xff] %vm1192, %v1189
  %1197 = vmatprep.subr.mxu0 0.0
  %1198 = vmatpush1.msra.mxu0 0.0
  %1199 = vmatprep.subr.mxu0 0.0
  %1200 = vmatpush1.msra.mxu0 0.0
  %1201 = vmatprep.subr.mxu0 0.0
  %1202 = vmatpush1.msra.mxu0 0.0
  %1203 = vmatprep.subr.mxu0 0.0
  %1204 = vmatpush1.msra.mxu0 0.0
  %1205 = vmatprep.subr.mxu0 0.0
  %1206 = vmatpush1.msra.mxu0 0.0
  %1207 = vmatprep.subr.mxu0 0.0
  %1208 = vmatpush1.msra.mxu0 0.0
  %1209 = vmatprep.subr.mxu0 0.0
  %1210 = vmatpush1.msra.mxu0 0.0
  %1211 = vmatprep.subr.mxu0 0.0
  %1212 = vmatpush1.msra.mxu0 0.0
  %1213 = vmatprep.subr.mxu0 0.0
  %1214 = vmatpush1.msra.mxu0 0.0
  %1215 = vmatprep.subr.mxu0 0.0
  %1216 = vmatpush1.msra.mxu0 0.0
  %1217 = vmatprep.subr.mxu0 0.0
  %1218 = vmatpush1.msra.mxu0 0.0
  %1219 = vmatprep.subr.mxu0 0.0
  %1220 = vmatpush1.msra.mxu0 0.0
  %1221 = vmatprep.subr.mxu0 0.0
  %1222 = vmatpush1.msra.mxu0 0.0
  %1223 = vmatprep.subr.mxu0 0.0
  %1224 = vmatpush1.msra.mxu0 0.0
  %1225 = vmatprep.subr.mxu0 0.0
  %1226 = vmatpush1.msra.mxu0 0.0
  %1227 = vmatprep.subr.mxu0 0.0
  %1228 = vmatpush1.msra.mxu0 %v452
  %1229 = vmatprep.subr.mxu0 0.0
  %1230 = vmatpush2.msra.mxu0 0.0
  %1231 = vmatprep.subr.mxu0 0.0
  %1232 = vmatpush2.msra.mxu0 0.0
  %1233 = vmatprep.subr.mxu0 0.0
  %1234 = vmatpush2.msra.mxu0 0.0
  %1235 = vmatprep.subr.mxu0 0.0
  %1236 = vmatpush2.msra.mxu0 0.0
  %1237 = vmatprep.subr.mxu0 0.0
  %1238 = vmatpush2.msra.mxu0 0.0
  %1239 = vmatprep.subr.mxu0 0.0
  %1240 = vmatpush2.msra.mxu0 0.0
  %1241 = vmatprep.subr.mxu0 0.0
  %1242 = vmatpush2.msra.mxu0 0.0
  %1243 = vmatprep.subr.mxu0 0.0
  %1244 = vmatpush2.msra.mxu0 0.0
  %1245 = vmatprep.subr.mxu0 0.0
  %1246 = vmatpush2.msra.mxu0 0.0
  %1247 = vmatprep.subr.mxu0 0.0
  %1248 = vmatpush2.msra.mxu0 0.0
  %1249 = vmatprep.subr.mxu0 0.0
  %1250 = vmatpush2.msra.mxu0 0.0
  %1251 = vmatprep.subr.mxu0 0.0
  %1252 = vmatpush2.msra.mxu0 0.0
  %1253 = vmatprep.subr.mxu0 0.0
  %1254 = vmatpush2.msra.mxu0 0.0
  %1255 = vmatprep.subr.mxu0 0.0
  %1256 = vmatpush2.msra.mxu0 0.0
  %1257 = vmatprep.subr.mxu0 0.0
  %1258 = vmatpush2.msra.mxu0 0.0
  %1259 = vmatprep.subr.mxu0 0.0
  %1260 = vmatpush2.msra.mxu0 0.0
  %1261 = vmatprep.mubr.f32.mxu0 0.0
  %1262 = vmatmul.mubr.f32.gmra.mxu0 %v494
  %v1263 = vpop.f32.mrf.mxu0
  %v1264 = vadd.f32 0.0, %v1263
  %v1265 = vpop.f32.mrf.mxu0
  %1266 = vmatprep.mubr.f32.mxu0 0.0
  %1267 = vmatmul.mubr.f32.gmra.mxu0 %v497
  %v1268 = vpop.f32.mrf.mxu0
  %v1269 = vadd.f32 0.0, %v1268
  %v1270 = vpop.f32.mrf.mxu0
  %1271 = vdwg.mxu0
  %1272 = vmatprep.subr.mxu0 0.0
  %1273 = vmatpush1.msra.mxu0 0.0
  %1274 = vmatprep.subr.mxu0 0.0
  %1275 = vmatpush1.msra.mxu0 0.0
  %1276 = vmatprep.subr.mxu0 0.0
  %1277 = vmatpush1.msra.mxu0 0.0
  %1278 = vmatprep.subr.mxu0 0.0
  %1279 = vmatpush1.msra.mxu0 0.0
  %1280 = vmatprep.subr.mxu0 0.0
  %1281 = vmatpush1.msra.mxu0 0.0
  %1282 = vmatprep.subr.mxu0 0.0
  %1283 = vmatpush1.msra.mxu0 0.0
  %1284 = vmatprep.subr.mxu0 0.0
  %1285 = vmatpush1.msra.mxu0 0.0
  %1286 = vmatprep.subr.mxu0 0.0
  %1287 = vmatpush1.msra.mxu0 0.0
  %1288 = vmatprep.subr.mxu0 0.0
  %1289 = vmatpush1.msra.mxu0 0.0
  %1290 = vmatprep.subr.mxu0 0.0
  %1291 = vmatpush1.msra.mxu0 0.0
  %1292 = vmatprep.subr.mxu0 0.0
  %1293 = vmatpush1.msra.mxu0 0.0
  %1294 = vmatprep.subr.mxu0 0.0
  %1295 = vmatpush1.msra.mxu0 0.0
  %1296 = vmatprep.subr.mxu0 0.0
  %1297 = vmatpush1.msra.mxu0 0.0
  %1298 = vmatprep.subr.mxu0 0.0
  %1299 = vmatpush1.msra.mxu0 0.0
  %1300 = vmatprep.subr.mxu0 0.0
  %1301 = vmatpush1.msra.mxu0 0.0
  %1302 = vmatprep.subr.mxu0 0.0
  %1303 = vmatpush1.msra.mxu0 %v355
  %1304 = vmatprep.subr.mxu0 0.0
  %1305 = vmatpush2.msra.mxu0 0.0
  %1306 = vmatprep.subr.mxu0 0.0
  %1307 = vmatpush2.msra.mxu0 0.0
  %1308 = vmatprep.subr.mxu0 0.0
  %1309 = vmatpush2.msra.mxu0 0.0
  %1310 = vmatprep.subr.mxu0 0.0
  %1311 = vmatpush2.msra.mxu0 0.0
  %1312 = vmatprep.subr.mxu0 0.0
  %1313 = vmatpush2.msra.mxu0 0.0
  %1314 = vmatprep.subr.mxu0 0.0
  %1315 = vmatpush2.msra.mxu0 0.0
  %1316 = vmatprep.subr.mxu0 0.0
  %1317 = vmatpush2.msra.mxu0 0.0
  %1318 = vmatprep.subr.mxu0 0.0
  %1319 = vmatpush2.msra.mxu0 0.0
  %1320 = vmatprep.subr.mxu0 0.0
  %1321 = vmatpush2.msra.mxu0 0.0
  %1322 = vmatprep.subr.mxu0 0.0
  %1323 = vmatpush2.msra.mxu0 0.0
  %1324 = vmatprep.subr.mxu0 0.0
  %1325 = vmatpush2.msra.mxu0 0.0
  %1326 = vmatprep.subr.mxu0 0.0
  %1327 = vmatpush2.msra.mxu0 0.0
  %1328 = vmatprep.subr.mxu0 0.0
  %1329 = vmatpush2.msra.mxu0 0.0
  %1330 = vmatprep.subr.mxu0 0.0
  %1331 = vmatpush2.msra.mxu0 0.0
  %1332 = vmatprep.subr.mxu0 0.0
  %1333 = vmatpush2.msra.mxu0 0.0
  %1334 = vmatprep.subr.mxu0 0.0
  %1335 = vmatpush2.msra.mxu0 0.0
  %1336 = vmatprep.mubr.f32.mxu0 0.0
  %1337 = vmatmul.mubr.f32.gmra.mxu0 %v575
  %v1338 = vpop.f32.mrf.mxu0
  %v1339 = vadd.f32 %v1264, %v1338
  %v1340 = vpop.f32.mrf.mxu0
  %1341 = vmatprep.mubr.f32.mxu0 0.0
  %1342 = vmatmul.mubr.f32.gmra.mxu0 %v578
  %v1343 = vpop.f32.mrf.mxu0
  %v1344 = vadd.f32 %v1269, %v1343
  %v1345 = vpop.f32.mrf.mxu0
  %1346 = vdwg.mxu0
  %v1347 = vadd.f32 %v1339, %v658
  %v1348 = vadd.f32 %v1344, %v658
  %v1349 = vmax.f32 %v1347, 0.0
  %v1350 = vmax.f32 %v1348, 0.0
  %v1352 = vsel %vm270, %v1349, 0
  %v1355 = vsel %vm270, %v1350, 0
  %1357 = vmatprep.subr.mxu0 0.0
  %1358 = vmatpush1.msra.mxu0 0.0
  %1359 = vmatprep.subr.mxu0 0.0
  %1360 = vmatpush1.msra.mxu0 0.0
  %1361 = vmatprep.subr.mxu0 0.0
  %1362 = vmatpush1.msra.mxu0 0.0
  %1363 = vmatprep.subr.mxu0 0.0
  %1364 = vmatpush1.msra.mxu0 0.0
  %1365 = vmatprep.subr.mxu0 0.0
  %1366 = vmatpush1.msra.mxu0 0.0
  %1367 = vmatprep.subr.mxu0 0.0
  %1368 = vmatpush1.msra.mxu0 0.0
  %1369 = vmatprep.subr.mxu0 0.0
  %1370 = vmatpush1.msra.mxu0 0.0
  %1371 = vmatprep.subr.mxu0 0.0
  %1372 = vmatpush1.msra.mxu0 0.0
  %1373 = vmatprep.subr.mxu0 0.0
  %1374 = vmatpush1.msra.mxu0 0.0
  %1375 = vmatprep.subr.mxu0 0.0
  %1376 = vmatpush1.msra.mxu0 0.0
  %1377 = vmatprep.subr.mxu0 0.0
  %1378 = vmatpush1.msra.mxu0 0.0
  %1379 = vmatprep.subr.mxu0 0.0
  %1380 = vmatpush1.msra.mxu0 0.0
  %1381 = vmatprep.subr.mxu0 0.0
  %1382 = vmatpush1.msra.mxu0 0.0
  %1383 = vmatprep.subr.mxu0 0.0
  %1384 = vmatpush1.msra.mxu0 0.0
  %1385 = vmatprep.subr.mxu0 0.0
  %1386 = vmatpush1.msra.mxu0 %v42
  %1387 = vmatprep.subr.mxu0 0.0
  %1388 = vmatpush1.msra.mxu0 %v41
  %1389 = vmatprep.subr.mxu0 0.0
  %1390 = vmatpush2.msra.mxu0 0.0
  %1391 = vmatprep.subr.mxu0 0.0
  %1392 = vmatpush2.msra.mxu0 0.0
  %1393 = vmatprep.subr.mxu0 0.0
  %1394 = vmatpush2.msra.mxu0 0.0
  %1395 = vmatprep.subr.mxu0 0.0
  %1396 = vmatpush2.msra.mxu0 0.0
  %1397 = vmatprep.subr.mxu0 0.0
  %1398 = vmatpush2.msra.mxu0 0.0
  %1399 = vmatprep.subr.mxu0 0.0
  %1400 = vmatpush2.msra.mxu0 0.0
  %1401 = vmatprep.subr.mxu0 0.0
  %1402 = vmatpush2.msra.mxu0 0.0
  %1403 = vmatprep.subr.mxu0 0.0
  %1404 = vmatpush2.msra.mxu0 0.0
  %1405 = vmatprep.subr.mxu0 0.0
  %1406 = vmatpush2.msra.mxu0 0.0
  %1407 = vmatprep.subr.mxu0 0.0
  %1408 = vmatpush2.msra.mxu0 0.0
  %1409 = vmatprep.subr.mxu0 0.0
  %1410 = vmatpush2.msra.mxu0 0.0
  %1411 = vmatprep.subr.mxu0 0.0
  %1412 = vmatpush2.msra.mxu0 0.0
  %1413 = vmatprep.subr.mxu0 0.0
  %1414 = vmatpush2.msra.mxu0 0.0
  %1415 = vmatprep.subr.mxu0 0.0
  %1416 = vmatpush2.msra.mxu0 0.0
  %1417 = vmatprep.subr.mxu0 0.0
  %1418 = vmatpush2.msra.mxu0 0.0
  %1419 = vmatprep.subr.mxu0 0.0
  %1420 = vmatpush2.msra.mxu0 0.0
  %1421 = vmatprep.mubr.f32.mxu0 0.0
  %1422 = vmatmul.mubr.f32.gmra.mxu0 %v1352
  %v1423 = vpop.f32.mrf.mxu0
  %v1424 = vadd.f32 0.0, %v1423
  %v1425 = vpop.f32.mrf.mxu0
  %1426 = vmatprep.mubr.f32.mxu0 0.0
  %1427 = vmatmul.mubr.f32.gmra.mxu0 %v1355
  %v1428 = vpop.f32.mrf.mxu0
  %v1429 = vadd.f32 0.0, %v1428
  %v1430 = vpop.f32.mrf.mxu0
  %1431 = vdwg.mxu0
  %1432 = vmatprep.subr.mxu0 0.0
  %1433 = vmatpush1.msra.mxu0 0.0
  %1434 = vmatprep.subr.mxu0 0.0
  %1435 = vmatpush1.msra.mxu0 0.0
  %1436 = vmatprep.subr.mxu0 0.0
  %1437 = vmatpush1.msra.mxu0 0.0
  %1438 = vmatprep.subr.mxu0 0.0
  %1439 = vmatpush1.msra.mxu0 0.0
  %1440 = vmatprep.subr.mxu0 0.0
  %1441 = vmatpush1.msra.mxu0 0.0
  %1442 = vmatprep.subr.mxu0 0.0
  %1443 = vmatpush1.msra.mxu0 0.0
  %1444 = vmatprep.subr.mxu0 0.0
  %1445 = vmatpush1.msra.mxu0 0.0
  %1446 = vmatprep.subr.mxu0 0.0
  %1447 = vmatpush1.msra.mxu0 0.0
  %1448 = vmatprep.subr.mxu0 0.0
  %1449 = vmatpush1.msra.mxu0 0.0
  %1450 = vmatprep.subr.mxu0 0.0
  %1451 = vmatpush1.msra.mxu0 0.0
  %1452 = vmatprep.subr.mxu0 0.0
  %1453 = vmatpush1.msra.mxu0 0.0
  %1454 = vmatprep.subr.mxu0 0.0
  %1455 = vmatpush1.msra.mxu0 0.0
  %1456 = vmatprep.subr.mxu0 0.0
  %1457 = vmatpush1.msra.mxu0 0.0
  %1458 = vmatprep.subr.mxu0 0.0
  %1459 = vmatpush1.msra.mxu0 0.0
  %1460 = vmatprep.subr.mxu0 0.0
  %1461 = vmatpush1.msra.mxu0 %v44
  %1462 = vmatprep.subr.mxu0 0.0
  %1463 = vmatpush1.msra.mxu0 %v43
  %1464 = vmatprep.subr.mxu0 0.0
  %1465 = vmatpush2.msra.mxu0 0.0
  %1466 = vmatprep.subr.mxu0 0.0
  %1467 = vmatpush2.msra.mxu0 0.0
  %1468 = vmatprep.subr.mxu0 0.0
  %1469 = vmatpush2.msra.mxu0 0.0
  %1470 = vmatprep.subr.mxu0 0.0
  %1471 = vmatpush2.msra.mxu0 0.0
  %1472 = vmatprep.subr.mxu0 0.0
  %1473 = vmatpush2.msra.mxu0 0.0
  %1474 = vmatprep.subr.mxu0 0.0
  %1475 = vmatpush2.msra.mxu0 0.0
  %1476 = vmatprep.subr.mxu0 0.0
  %1477 = vmatpush2.msra.mxu0 0.0
  %1478 = vmatprep.subr.mxu0 0.0
  %1479 = vmatpush2.msra.mxu0 0.0
  %1480 = vmatprep.subr.mxu0 0.0
  %1481 = vmatpush2.msra.mxu0 0.0
  %1482 = vmatprep.subr.mxu0 0.0
  %1483 = vmatpush2.msra.mxu0 0.0
  %1484 = vmatprep.subr.mxu0 0.0
  %1485 = vmatpush2.msra.mxu0 0.0
  %1486 = vmatprep.subr.mxu0 0.0
  %1487 = vmatpush2.msra.mxu0 0.0
  %1488 = vmatprep.subr.mxu0 0.0
  %1489 = vmatpush2.msra.mxu0 0.0
  %1490 = vmatprep.subr.mxu0 0.0
  %1491 = vmatpush2.msra.mxu0 0.0
  %1492 = vmatprep.subr.mxu0 0.0
  %1493 = vmatpush2.msra.mxu0 0.0
  %1494 = vmatprep.subr.mxu0 0.0
  %1495 = vmatpush2.msra.mxu0 0.0
  %1496 = vmatprep.mubr.f32.mxu0 0.0
  %1497 = vmatmul.mubr.f32.gmra.mxu0 %v1352
  %v1498 = vpop.f32.mrf.mxu0
  %v1499 = vadd.f32 0.0, %v1498
  %v1500 = vpop.f32.mrf.mxu0
  %1501 = vmatprep.mubr.f32.mxu0 0.0
  %1502 = vmatmul.mubr.f32.gmra.mxu0 %v1355
  %v1503 = vpop.f32.mrf.mxu0
  %v1504 = vadd.f32 0.0, %v1503
  %v1505 = vpop.f32.mrf.mxu0
  %1506 = vdwg.mxu0
  %1507 = vmatprep.subr.mxu0 0.0
  %1508 = vmatpush1.msra.mxu0 0.0
  %1509 = vmatprep.subr.mxu0 0.0
  %1510 = vmatpush1.msra.mxu0 0.0
  %1511 = vmatprep.subr.mxu0 0.0
  %1512 = vmatpush1.msra.mxu0 0.0
  %1513 = vmatprep.subr.mxu0 0.0
  %1514 = vmatpush1.msra.mxu0 0.0
  %1515 = vmatprep.subr.mxu0 0.0
  %1516 = vmatpush1.msra.mxu0 0.0
  %1517 = vmatprep.subr.mxu0 0.0
  %1518 = vmatpush1.msra.mxu0 0.0
  %1519 = vmatprep.subr.mxu0 0.0
  %1520 = vmatpush1.msra.mxu0 0.0
  %1521 = vmatprep.subr.mxu0 0.0
  %1522 = vmatpush1.msra.mxu0 0.0
  %1523 = vmatprep.subr.mxu0 0.0
  %1524 = vmatpush1.msra.mxu0 0.0
  %1525 = vmatprep.subr.mxu0 0.0
  %1526 = vmatpush1.msra.mxu0 0.0
  %1527 = vmatprep.subr.mxu0 0.0
  %1528 = vmatpush1.msra.mxu0 0.0
  %1529 = vmatprep.subr.mxu0 0.0
  %1530 = vmatpush1.msra.mxu0 0.0
  %1531 = vmatprep.subr.mxu0 0.0
  %1532 = vmatpush1.msra.mxu0 0.0
  %1533 = vmatprep.subr.mxu0 0.0
  %1534 = vmatpush1.msra.mxu0 0.0
  %1535 = vmatprep.subr.mxu0 0.0
  %1536 = vmatpush1.msra.mxu0 %v46
  %1537 = vmatprep.subr.mxu0 0.0
  %1538 = vmatpush1.msra.mxu0 %v45
  %1539 = vmatprep.subr.mxu0 0.0
  %1540 = vmatpush2.msra.mxu0 0.0
  %1541 = vmatprep.subr.mxu0 0.0
  %1542 = vmatpush2.msra.mxu0 0.0
  %1543 = vmatprep.subr.mxu0 0.0
  %1544 = vmatpush2.msra.mxu0 0.0
  %1545 = vmatprep.subr.mxu0 0.0
  %1546 = vmatpush2.msra.mxu0 0.0
  %1547 = vmatprep.subr.mxu0 0.0
  %1548 = vmatpush2.msra.mxu0 0.0
  %1549 = vmatprep.subr.mxu0 0.0
  %1550 = vmatpush2.msra.mxu0 0.0
  %1551 = vmatprep.subr.mxu0 0.0
  %1552 = vmatpush2.msra.mxu0 0.0
  %1553 = vmatprep.subr.mxu0 0.0
  %1554 = vmatpush2.msra.mxu0 0.0
  %1555 = vmatprep.subr.mxu0 0.0
  %1556 = vmatpush2.msra.mxu0 0.0
  %1557 = vmatprep.subr.mxu0 0.0
  %1558 = vmatpush2.msra.mxu0 0.0
  %1559 = vmatprep.subr.mxu0 0.0
  %1560 = vmatpush2.msra.mxu0 0.0
  %1561 = vmatprep.subr.mxu0 0.0
  %1562 = vmatpush2.msra.mxu0 0.0
  %1563 = vmatprep.subr.mxu0 0.0
  %1564 = vmatpush2.msra.mxu0 0.0
  %1565 = vmatprep.subr.mxu0 0.0
  %1566 = vmatpush2.msra.mxu0 0.0
  %1567 = vmatprep.subr.mxu0 0.0
  %1568 = vmatpush2.msra.mxu0 0.0
  %1569 = vmatprep.subr.mxu0 0.0
  %1570 = vmatpush2.msra.mxu0 0.0
  %1571 = vmatprep.mubr.f32.mxu0 0.0
  %1572 = vmatmul.mubr.f32.gmra.mxu0 %v1352
  %v1573 = vpop.f32.mrf.mxu0
  %v1574 = vadd.f32 0.0, %v1573
  %v1575 = vpop.f32.mrf.mxu0
  %1576 = vmatprep.mubr.f32.mxu0 0.0
  %1577 = vmatmul.mubr.f32.gmra.mxu0 %v1355
  %v1578 = vpop.f32.mrf.mxu0
  %v1579 = vadd.f32 0.0, %v1578
  %v1580 = vpop.f32.mrf.mxu0
  %1581 = vdwg.mxu0
  %v1583 = vsel %vm901, %v1579, 0
  %1585 = vmatprep.subr.mxu0 0.0
  %1586 = vmatpush1.msra.mxu0 0.0
  %1587 = vmatprep.subr.mxu0 0.0
  %1588 = vmatpush1.msra.mxu0 0.0
  %1589 = vmatprep.subr.mxu0 0.0
  %1590 = vmatpush1.msra.mxu0 0.0
  %1591 = vmatprep.subr.mxu0 0.0
  %1592 = vmatpush1.msra.mxu0 0.0
  %1593 = vmatprep.subr.mxu0 0.0
  %1594 = vmatpush1.msra.mxu0 0.0
  %1595 = vmatprep.subr.mxu0 0.0
  %1596 = vmatpush1.msra.mxu0 0.0
  %1597 = vmatprep.subr.mxu0 0.0
  %1598 = vmatpush1.msra.mxu0 0.0
  %1599 = vmatprep.subr.mxu0 0.0
  %1600 = vmatpush1.msra.mxu0 0.0
  %1601 = vmatprep.subr.mxu0 0.0
  %1602 = vmatpush1.msra.mxu0 0.0
  %1603 = vmatprep.subr.mxu0 0.0
  %1604 = vmatpush1.msra.mxu0 0.0
  %1605 = vmatprep.subr.mxu0 0.0
  %1606 = vmatpush1.msra.mxu0 0.0
  %1607 = vmatprep.subr.mxu0 0.0
  %1608 = vmatpush1.msra.mxu0 0.0
  %1609 = vmatprep.subr.mxu0 0.0
  %1610 = vmatpush1.msra.mxu0 0.0
  %1611 = vmatprep.subr.mxu0 0.0
  %1612 = vmatpush1.msra.mxu0 0.0
  %1613 = vmatprep.subr.mxu0 0.0
  %1614 = vmatpush1.msra.mxu0 %v1583
  %1615 = vmatprep.subr.mxu0 0.0
  %1616 = vmatpush1.msra.mxu0 %v1574
  %1617 = vmatprep.subr.mxu0 0.0
  %1618 = vmatpush2.msra.mxu0 0.0
  %1619 = vmatprep.subr.mxu0 0.0
  %1620 = vmatpush2.msra.mxu0 0.0
  %1621 = vmatprep.subr.mxu0 0.0
  %1622 = vmatpush2.msra.mxu0 0.0
  %1623 = vmatprep.subr.mxu0 0.0
  %1624 = vmatpush2.msra.mxu0 0.0
  %1625 = vmatprep.subr.mxu0 0.0
  %1626 = vmatpush2.msra.mxu0 0.0
  %1627 = vmatprep.subr.mxu0 0.0
  %1628 = vmatpush2.msra.mxu0 0.0
  %1629 = vmatprep.subr.mxu0 0.0
  %1630 = vmatpush2.msra.mxu0 0.0
  %1631 = vmatprep.subr.mxu0 0.0
  %1632 = vmatpush2.msra.mxu0 0.0
  %1633 = vmatprep.subr.mxu0 0.0
  %1634 = vmatpush2.msra.mxu0 0.0
  %1635 = vmatprep.subr.mxu0 0.0
  %1636 = vmatpush2.msra.mxu0 0.0
  %1637 = vmatprep.subr.mxu0 0.0
  %1638 = vmatpush2.msra.mxu0 0.0
  %1639 = vmatprep.subr.mxu0 0.0
  %1640 = vmatpush2.msra.mxu0 0.0
  %1641 = vmatprep.subr.mxu0 0.0
  %1642 = vmatpush2.msra.mxu0 0.0
  %1643 = vmatprep.subr.mxu0 0.0
  %1644 = vmatpush2.msra.mxu0 0.0
  %1645 = vmatprep.subr.mxu0 0.0
  %1646 = vmatpush2.msra.mxu0 0.0
  %1647 = vmatprep.subr.mxu0 0.0
  %1648 = vmatpush2.msra.mxu0 0.0
  %1649 = vmatprep.mubr.f32.mxu0 0.0
  %1650 = vmatmul.mubr.f32.gmra.mxu0 %v896
  %v1651 = vpop.f32.mrf.mxu0
  %v1652 = vadd.f32 0.0, %v1651
  %v1653 = vpop.f32.mrf.mxu0
  %1654 = vmatprep.mubr.f32.mxu0 0.0
  %1655 = vmatmul.mubr.f32.gmra.mxu0 %v899
  %v1656 = vpop.f32.mrf.mxu0
  %v1657 = vadd.f32 0.0, %v1656
  %v1658 = vpop.f32.mrf.mxu0
  %1659 = vdwg.mxu0
  %v1661 = vsel %vm901, %v1429, 0
  %1663 = vmatprep.subr.mxu0 0.0
  %1664 = vmatpush1.msra.mxu0 0.0
  %1665 = vmatprep.subr.mxu0 0.0
  %1666 = vmatpush1.msra.mxu0 0.0
  %1667 = vmatprep.subr.mxu0 0.0
  %1668 = vmatpush1.msra.mxu0 0.0
  %1669 = vmatprep.subr.mxu0 0.0
  %1670 = vmatpush1.msra.mxu0 0.0
  %1671 = vmatprep.subr.mxu0 0.0
  %1672 = vmatpush1.msra.mxu0 0.0
  %1673 = vmatprep.subr.mxu0 0.0
  %1674 = vmatpush1.msra.mxu0 0.0
  %1675 = vmatprep.subr.mxu0 0.0
  %1676 = vmatpush1.msra.mxu0 0.0
  %1677 = vmatprep.subr.mxu0 0.0
  %1678 = vmatpush1.msra.mxu0 0.0
  %1679 = vmatprep.subr.mxu0 0.0
  %1680 = vmatpush1.msra.mxu0 0.0
  %1681 = vmatprep.subr.mxu0 0.0
  %1682 = vmatpush1.msra.mxu0 0.0
  %1683 = vmatprep.subr.mxu0 0.0
  %1684 = vmatpush1.msra.mxu0 0.0
  %1685 = vmatprep.subr.mxu0 0.0
  %1686 = vmatpush1.msra.mxu0 0.0
  %1687 = vmatprep.subr.mxu0 0.0
  %1688 = vmatpush1.msra.mxu0 0.0
  %1689 = vmatprep.subr.mxu0 0.0
  %1690 = vmatpush1.msra.mxu0 0.0
  %1691 = vmatprep.subr.mxu0 0.0
  %1692 = vmatpush1.msra.mxu0 %v1661
  %1693 = vmatprep.subr.mxu0 0.0
  %1694 = vmatpush1.msra.mxu0 %v1424
  %1695 = vmatprep.subr.mxu0 0.0
  %1696 = vmatpush2.msra.mxu0 0.0
  %1697 = vmatprep.subr.mxu0 0.0
  %1698 = vmatpush2.msra.mxu0 0.0
  %1699 = vmatprep.subr.mxu0 0.0
  %1700 = vmatpush2.msra.mxu0 0.0
  %1701 = vmatprep.subr.mxu0 0.0
  %1702 = vmatpush2.msra.mxu0 0.0
  %1703 = vmatprep.subr.mxu0 0.0
  %1704 = vmatpush2.msra.mxu0 0.0
  %1705 = vmatprep.subr.mxu0 0.0
  %1706 = vmatpush2.msra.mxu0 0.0
  %1707 = vmatprep.subr.mxu0 0.0
  %1708 = vmatpush2.msra.mxu0 0.0
  %1709 = vmatprep.subr.mxu0 0.0
  %1710 = vmatpush2.msra.mxu0 0.0
  %1711 = vmatprep.subr.mxu0 0.0
  %1712 = vmatpush2.msra.mxu0 0.0
  %1713 = vmatprep.subr.mxu0 0.0
  %1714 = vmatpush2.msra.mxu0 0.0
  %1715 = vmatprep.subr.mxu0 0.0
  %1716 = vmatpush2.msra.mxu0 0.0
  %1717 = vmatprep.subr.mxu0 0.0
  %1718 = vmatpush2.msra.mxu0 0.0
  %1719 = vmatprep.subr.mxu0 0.0
  %1720 = vmatpush2.msra.mxu0 0.0
  %1721 = vmatprep.subr.mxu0 0.0
  %1722 = vmatpush2.msra.mxu0 0.0
  %1723 = vmatprep.subr.mxu0 0.0
  %1724 = vmatpush2.msra.mxu0 0.0
  %1725 = vmatprep.subr.mxu0 0.0
  %1726 = vmatpush2.msra.mxu0 0.0
  %1727 = vmatprep.mubr.f32.mxu0 0.0
  %1728 = vmatmul.mubr.f32.gmra.mxu0 %v980
  %v1729 = vpop.f32.mrf.mxu0
  %v1730 = vadd.f32 %v1499, %v1729
  %v1731 = vpop.f32.mrf.mxu0
  %1732 = vmatprep.mubr.f32.mxu0 0.0
  %1733 = vmatmul.mubr.f32.gmra.mxu0 %v982
  %v1734 = vpop.f32.mrf.mxu0
  %v1735 = vadd.f32 %v1504, %v1734
  %v1736 = vpop.f32.mrf.mxu0
  %1737 = vdwg.mxu0
  %v1738 = vadd.f32 %v1730, %v1652
  %v1739 = vadd.f32 %v1735, %v1657
  %v1740 = vadd.f32 %v1738, %v1067
  %v1741 = vadd.f32 %v1739, %v1067
  %v1742 = vmax.f32 %v1740, 0.0
  %v1743 = vmax.f32 %v1741, 0.0
  %v1745 = vsel %vm901, %v1743, 0
  %1747 = vmatprep.subr.mxu0 0.0
  %1748 = vmatpush1.msra.mxu0 0.0
  %1749 = vmatprep.subr.mxu0 0.0
  %1750 = vmatpush1.msra.mxu0 0.0
  %1751 = vmatprep.subr.mxu0 0.0
  %1752 = vmatpush1.msra.mxu0 0.0
  %1753 = vmatprep.subr.mxu0 0.0
  %1754 = vmatpush1.msra.mxu0 0.0
  %1755 = vmatprep.subr.mxu0 0.0
  %1756 = vmatpush1.msra.mxu0 0.0
  %1757 = vmatprep.subr.mxu0 0.0
  %1758 = vmatpush1.msra.mxu0 0.0
  %1759 = vmatprep.subr.mxu0 0.0
  %1760 = vmatpush1.msra.mxu0 0.0
  %1761 = vmatprep.subr.mxu0 0.0
  %1762 = vmatpush1.msra.mxu0 0.0
  %1763 = vmatprep.subr.mxu0 0.0
  %1764 = vmatpush1.msra.mxu0 0.0
  %1765 = vmatprep.subr.mxu0 0.0
  %1766 = vmatpush1.msra.mxu0 0.0
  %1767 = vmatprep.subr.mxu0 0.0
  %1768 = vmatpush1.msra.mxu0 0.0
  %1769 = vmatprep.subr.mxu0 0.0
  %1770 = vmatpush1.msra.mxu0 0.0
  %1771 = vmatprep.subr.mxu0 0.0
  %1772 = vmatpush1.msra.mxu0 0.0
  %1773 = vmatprep.subr.mxu0 0.0
  %1774 = vmatpush1.msra.mxu0 0.0
  %1775 = vmatprep.subr.mxu0 0.0
  %1776 = vmatpush1.msra.mxu0 %v1745
  %1777 = vmatprep.subr.mxu0 0.0
  %1778 = vmatpush1.msra.mxu0 %v1742
  %1779 = vmatprep.subr.mxu0 0.0
  %1780 = vmatpush2.msra.mxu0 0.0
  %1781 = vmatprep.subr.mxu0 0.0
  %1782 = vmatpush2.msra.mxu0 0.0
  %1783 = vmatprep.subr.mxu0 0.0
  %1784 = vmatpush2.msra.mxu0 0.0
  %1785 = vmatprep.subr.mxu0 0.0
  %1786 = vmatpush2.msra.mxu0 0.0
  %1787 = vmatprep.subr.mxu0 0.0
  %1788 = vmatpush2.msra.mxu0 0.0
  %1789 = vmatprep.subr.mxu0 0.0
  %1790 = vmatpush2.msra.mxu0 0.0
  %1791 = vmatprep.subr.mxu0 0.0
  %1792 = vmatpush2.msra.mxu0 0.0
  %1793 = vmatprep.subr.mxu0 0.0
  %1794 = vmatpush2.msra.mxu0 0.0
  %1795 = vmatprep.subr.mxu0 0.0
  %1796 = vmatpush2.msra.mxu0 0.0
  %1797 = vmatprep.subr.mxu0 0.0
  %1798 = vmatpush2.msra.mxu0 0.0
  %1799 = vmatprep.subr.mxu0 0.0
  %1800 = vmatpush2.msra.mxu0 0.0
  %1801 = vmatprep.subr.mxu0 0.0
  %1802 = vmatpush2.msra.mxu0 0.0
  %1803 = vmatprep.subr.mxu0 0.0
  %1804 = vmatpush2.msra.mxu0 0.0
  %1805 = vmatprep.subr.mxu0 0.0
  %1806 = vmatpush2.msra.mxu0 0.0
  %1807 = vmatprep.subr.mxu0 0.0
  %1808 = vmatpush2.msra.mxu0 0.0
  %1809 = vmatprep.subr.mxu0 0.0
  %1810 = vmatpush2.msra.mxu0 0.0
  %1811 = vmatprep.mubr.f32.mxu0 0.0
  %1812 = vmatmul.mubr.f32.gmra.mxu0 %v1093
  %v1813 = vpop.f32.mrf.mxu0
  %v1814 = vadd.f32 %v1075, %v1813
  %v1815 = vpop.f32.mrf.mxu0
  %1816 = vmatprep.mubr.f32.mxu0 0.0
  %1817 = vmatmul.mubr.f32.gmra.mxu0 %v1096
  %v1818 = vpop.f32.mrf.mxu0
  %v1819 = vadd.f32 %v1080, %v1818
  %v1820 = vpop.f32.mrf.mxu0
  %1821 = vmatprep.mubr.f32.mxu0 0.0
  %1822 = vmatmul.mubr.f32.gmra.mxu0 %v1099
  %v1823 = vpop.f32.mrf.mxu0
  %v1824 = vadd.f32 %v1085, %v1823
  %v1825 = vpop.f32.mrf.mxu0
  %1826 = vmatprep.mubr.f32.mxu0 0.0
  %1827 = vmatmul.mubr.f32.gmra.mxu0 %v1102
  %v1828 = vpop.f32.mrf.mxu0
  %v1829 = vadd.f32 %v1090, %v1828
  %v1830 = vpop.f32.mrf.mxu0
  %1831 = vdwg.mxu0
  %s1832 = scalar_lea.vmem %s8, 32
  %1833 = vst.msk [vmem:[%s1832] sm:$0xff] %vm1192, %v1814
  %1834 = vst.msk [vmem:[%s1832 + $0x8] sm:$0xff] %vm1192, %v1819
  %1835 = vst.msk [vmem:[%s1832 + $0x10] sm:$0xff] %vm1192, %v1824
  %1836 = vst.msk [vmem:[%s1832 + $0x18] sm:$0xff] %vm1192, %v1829
  %1837 = vmatprep.subr.mxu0 0.0
  %1838 = vmatpush1.msra.mxu0 0.0
  %1839 = vmatprep.subr.mxu0 0.0
  %1840 = vmatpush1.msra.mxu0 0.0
  %1841 = vmatprep.subr.mxu0 0.0
  %1842 = vmatpush1.msra.mxu0 0.0
  %1843 = vmatprep.subr.mxu0 0.0
  %1844 = vmatpush1.msra.mxu0 0.0
  %1845 = vmatprep.subr.mxu0 0.0
  %1846 = vmatpush1.msra.mxu0 0.0
  %1847 = vmatprep.subr.mxu0 0.0
  %1848 = vmatpush1.msra.mxu0 0.0
  %1849 = vmatprep.subr.mxu0 0.0
  %1850 = vmatpush1.msra.mxu0 0.0
  %1851 = vmatprep.subr.mxu0 0.0
  %1852 = vmatpush1.msra.mxu0 0.0
  %1853 = vmatprep.subr.mxu0 0.0
  %1854 = vmatpush1.msra.mxu0 0.0
  %1855 = vmatprep.subr.mxu0 0.0
  %1856 = vmatpush1.msra.mxu0 0.0
  %1857 = vmatprep.subr.mxu0 0.0
  %1858 = vmatpush1.msra.mxu0 0.0
  %1859 = vmatprep.subr.mxu0 0.0
  %1860 = vmatpush1.msra.mxu0 0.0
  %1861 = vmatprep.subr.mxu0 0.0
  %1862 = vmatpush1.msra.mxu0 0.0
  %1863 = vmatprep.subr.mxu0 0.0
  %1864 = vmatpush1.msra.mxu0 0.0
  %1865 = vmatprep.subr.mxu0 0.0
  %1866 = vmatpush1.msra.mxu0 0.0
  %1867 = vmatprep.subr.mxu0 0.0
  %1868 = vmatpush1.msra.mxu0 %v457
  %1869 = vmatprep.subr.mxu0 0.0
  %1870 = vmatpush2.msra.mxu0 0.0
  %1871 = vmatprep.subr.mxu0 0.0
  %1872 = vmatpush2.msra.mxu0 0.0
  %1873 = vmatprep.subr.mxu0 0.0
  %1874 = vmatpush2.msra.mxu0 0.0
  %1875 = vmatprep.subr.mxu0 0.0
  %1876 = vmatpush2.msra.mxu0 0.0
  %1877 = vmatprep.subr.mxu0 0.0
  %1878 = vmatpush2.msra.mxu0 0.0
  %1879 = vmatprep.subr.mxu0 0.0
  %1880 = vmatpush2.msra.mxu0 0.0
  %1881 = vmatprep.subr.mxu0 0.0
  %1882 = vmatpush2.msra.mxu0 0.0
  %1883 = vmatprep.subr.mxu0 0.0
  %1884 = vmatpush2.msra.mxu0 0.0
  %1885 = vmatprep.subr.mxu0 0.0
  %1886 = vmatpush2.msra.mxu0 0.0
  %1887 = vmatprep.subr.mxu0 0.0
  %1888 = vmatpush2.msra.mxu0 0.0
  %1889 = vmatprep.subr.mxu0 0.0
  %1890 = vmatpush2.msra.mxu0 0.0
  %1891 = vmatprep.subr.mxu0 0.0
  %1892 = vmatpush2.msra.mxu0 0.0
  %1893 = vmatprep.subr.mxu0 0.0
  %1894 = vmatpush2.msra.mxu0 0.0
  %1895 = vmatprep.subr.mxu0 0.0
  %1896 = vmatpush2.msra.mxu0 0.0
  %1897 = vmatprep.subr.mxu0 0.0
  %1898 = vmatpush2.msra.mxu0 0.0
  %1899 = vmatprep.subr.mxu0 0.0
  %1900 = vmatpush2.msra.mxu0 0.0
  %1901 = vmatprep.mubr.f32.mxu0 0.0
  %1902 = vmatmul.mubr.f32.gmra.mxu0 %v494
  %v1903 = vpop.f32.mrf.mxu0
  %v1904 = vadd.f32 0.0, %v1903
  %v1905 = vpop.f32.mrf.mxu0
  %1906 = vmatprep.mubr.f32.mxu0 0.0
  %1907 = vmatmul.mubr.f32.gmra.mxu0 %v497
  %v1908 = vpop.f32.mrf.mxu0
  %v1909 = vadd.f32 0.0, %v1908
  %v1910 = vpop.f32.mrf.mxu0
  %1911 = vdwg.mxu0
  %1912 = vmatprep.subr.mxu0 0.0
  %1913 = vmatpush1.msra.mxu0 0.0
  %1914 = vmatprep.subr.mxu0 0.0
  %1915 = vmatpush1.msra.mxu0 0.0
  %1916 = vmatprep.subr.mxu0 0.0
  %1917 = vmatpush1.msra.mxu0 0.0
  %1918 = vmatprep.subr.mxu0 0.0
  %1919 = vmatpush1.msra.mxu0 0.0
  %1920 = vmatprep.subr.mxu0 0.0
  %1921 = vmatpush1.msra.mxu0 0.0
  %1922 = vmatprep.subr.mxu0 0.0
  %1923 = vmatpush1.msra.mxu0 0.0
  %1924 = vmatprep.subr.mxu0 0.0
  %1925 = vmatpush1.msra.mxu0 0.0
  %1926 = vmatprep.subr.mxu0 0.0
  %1927 = vmatpush1.msra.mxu0 0.0
  %1928 = vmatprep.subr.mxu0 0.0
  %1929 = vmatpush1.msra.mxu0 0.0
  %1930 = vmatprep.subr.mxu0 0.0
  %1931 = vmatpush1.msra.mxu0 0.0
  %1932 = vmatprep.subr.mxu0 0.0
  %1933 = vmatpush1.msra.mxu0 0.0
  %1934 = vmatprep.subr.mxu0 0.0
  %1935 = vmatpush1.msra.mxu0 0.0
  %1936 = vmatprep.subr.mxu0 0.0
  %1937 = vmatpush1.msra.mxu0 0.0
  %1938 = vmatprep.subr.mxu0 0.0
  %1939 = vmatpush1.msra.mxu0 0.0
  %1940 = vmatprep.subr.mxu0 0.0
  %1941 = vmatpush1.msra.mxu0 0.0
  %1942 = vmatprep.subr.mxu0 0.0
  %1943 = vmatpush1.msra.mxu0 %v360
  %1944 = vmatprep.subr.mxu0 0.0
  %1945 = vmatpush2.msra.mxu0 0.0
  %1946 = vmatprep.subr.mxu0 0.0
  %1947 = vmatpush2.msra.mxu0 0.0
  %1948 = vmatprep.subr.mxu0 0.0
  %1949 = vmatpush2.msra.mxu0 0.0
  %1950 = vmatprep.subr.mxu0 0.0
  %1951 = vmatpush2.msra.mxu0 0.0
  %1952 = vmatprep.subr.mxu0 0.0
  %1953 = vmatpush2.msra.mxu0 0.0
  %1954 = vmatprep.subr.mxu0 0.0
  %1955 = vmatpush2.msra.mxu0 0.0
  %1956 = vmatprep.subr.mxu0 0.0
  %1957 = vmatpush2.msra.mxu0 0.0
  %1958 = vmatprep.subr.mxu0 0.0
  %1959 = vmatpush2.msra.mxu0 0.0
  %1960 = vmatprep.subr.mxu0 0.0
  %1961 = vmatpush2.msra.mxu0 0.0
  %1962 = vmatprep.subr.mxu0 0.0
  %1963 = vmatpush2.msra.mxu0 0.0
  %1964 = vmatprep.subr.mxu0 0.0
  %1965 = vmatpush2.msra.mxu0 0.0
  %1966 = vmatprep.subr.mxu0 0.0
  %1967 = vmatpush2.msra.mxu0 0.0
  %1968 = vmatprep.subr.mxu0 0.0
  %1969 = vmatpush2.msra.mxu0 0.0
  %1970 = vmatprep.subr.mxu0 0.0
  %1971 = vmatpush2.msra.mxu0 0.0
  %1972 = vmatprep.subr.mxu0 0.0
  %1973 = vmatpush2.msra.mxu0 0.0
  %1974 = vmatprep.subr.mxu0 0.0
  %1975 = vmatpush2.msra.mxu0 0.0
  %1976 = vmatprep.mubr.f32.mxu0 0.0
  %1977 = vmatmul.mubr.f32.gmra.mxu0 %v575
  %v1978 = vpop.f32.mrf.mxu0
  %v1979 = vadd.f32 %v1904, %v1978
  %v1980 = vpop.f32.mrf.mxu0
  %1981 = vmatprep.mubr.f32.mxu0 0.0
  %1982 = vmatmul.mubr.f32.gmra.mxu0 %v578
  %v1983 = vpop.f32.mrf.mxu0
  %v1984 = vadd.f32 %v1909, %v1983
  %v1985 = vpop.f32.mrf.mxu0
  %1986 = vdwg.mxu0
  %v1987 = vadd.f32 %v1979, %v658
  %v1988 = vadd.f32 %v1984, %v658
  %v1989 = vmax.f32 %v1987, 0.0
  %v1990 = vmax.f32 %v1988, 0.0
  %v1992 = vsel %vm270, %v1989, 0
  %v1995 = vsel %vm270, %v1990, 0
  %1997 = vmatprep.subr.mxu0 0.0
  %1998 = vmatpush1.msra.mxu0 0.0
  %1999 = vmatprep.subr.mxu0 0.0
  %2000 = vmatpush1.msra.mxu0 0.0
  %2001 = vmatprep.subr.mxu0 0.0
  %2002 = vmatpush1.msra.mxu0 0.0
  %2003 = vmatprep.subr.mxu0 0.0
  %2004 = vmatpush1.msra.mxu0 0.0
  %2005 = vmatprep.subr.mxu0 0.0
  %2006 = vmatpush1.msra.mxu0 0.0
  %2007 = vmatprep.subr.mxu0 0.0
  %2008 = vmatpush1.msra.mxu0 0.0
  %2009 = vmatprep.subr.mxu0 0.0
  %2010 = vmatpush1.msra.mxu0 0.0
  %2011 = vmatprep.subr.mxu0 0.0
  %2012 = vmatpush1.msra.mxu0 0.0
  %2013 = vmatprep.subr.mxu0 0.0
  %2014 = vmatpush1.msra.mxu0 0.0
  %2015 = vmatprep.subr.mxu0 0.0
  %2016 = vmatpush1.msra.mxu0 0.0
  %2017 = vmatprep.subr.mxu0 0.0
  %2018 = vmatpush1.msra.mxu0 0.0
  %2019 = vmatprep.subr.mxu0 0.0
  %2020 = vmatpush1.msra.mxu0 0.0
  %2021 = vmatprep.subr.mxu0 0.0
  %2022 = vmatpush1.msra.mxu0 0.0
  %2023 = vmatprep.subr.mxu0 0.0
  %2024 = vmatpush1.msra.mxu0 0.0
  %2025 = vmatprep.subr.mxu0 0.0
  %2026 = vmatpush1.msra.mxu0 %v42
  %2027 = vmatprep.subr.mxu0 0.0
  %2028 = vmatpush1.msra.mxu0 %v41
  %2029 = vmatprep.subr.mxu0 0.0
  %2030 = vmatpush2.msra.mxu0 0.0
  %2031 = vmatprep.subr.mxu0 0.0
  %2032 = vmatpush2.msra.mxu0 0.0
  %2033 = vmatprep.subr.mxu0 0.0
  %2034 = vmatpush2.msra.mxu0 0.0
  %2035 = vmatprep.subr.mxu0 0.0
  %2036 = vmatpush2.msra.mxu0 0.0
  %2037 = vmatprep.subr.mxu0 0.0
  %2038 = vmatpush2.msra.mxu0 0.0
  %2039 = vmatprep.subr.mxu0 0.0
  %2040 = vmatpush2.msra.mxu0 0.0
  %2041 = vmatprep.subr.mxu0 0.0
  %2042 = vmatpush2.msra.mxu0 0.0
  %2043 = vmatprep.subr.mxu0 0.0
  %2044 = vmatpush2.msra.mxu0 0.0
  %2045 = vmatprep.subr.mxu0 0.0
  %2046 = vmatpush2.msra.mxu0 0.0
  %2047 = vmatprep.subr.mxu0 0.0
  %2048 = vmatpush2.msra.mxu0 0.0
  %2049 = vmatprep.subr.mxu0 0.0
  %2050 = vmatpush2.msra.mxu0 0.0
  %2051 = vmatprep.subr.mxu0 0.0
  %2052 = vmatpush2.msra.mxu0 0.0
  %2053 = vmatprep.subr.mxu0 0.0
  %2054 = vmatpush2.msra.mxu0 0.0
  %2055 = vmatprep.subr.mxu0 0.0
  %2056 = vmatpush2.msra.mxu0 0.0
  %2057 = vmatprep.subr.mxu0 0.0
  %2058 = vmatpush2.msra.mxu0 0.0
  %2059 = vmatprep.subr.mxu0 0.0
  %2060 = vmatpush2.msra.mxu0 0.0
  %2061 = vmatprep.mubr.f32.mxu0 0.0
  %2062 = vmatmul.mubr.f32.gmra.mxu0 %v1992
  %v2063 = vpop.f32.mrf.mxu0
  %v2064 = vadd.f32 0.0, %v2063
  %v2065 = vpop.f32.mrf.mxu0
  %2066 = vmatprep.mubr.f32.mxu0 0.0
  %2067 = vmatmul.mubr.f32.gmra.mxu0 %v1995
  %v2068 = vpop.f32.mrf.mxu0
  %v2069 = vadd.f32 0.0, %v2068
  %v2070 = vpop.f32.mrf.mxu0
  %2071 = vdwg.mxu0
  %2072 = vmatprep.subr.mxu0 0.0
  %2073 = vmatpush1.msra.mxu0 0.0
  %2074 = vmatprep.subr.mxu0 0.0
  %2075 = vmatpush1.msra.mxu0 0.0
  %2076 = vmatprep.subr.mxu0 0.0
  %2077 = vmatpush1.msra.mxu0 0.0
  %2078 = vmatprep.subr.mxu0 0.0
  %2079 = vmatpush1.msra.mxu0 0.0
  %2080 = vmatprep.subr.mxu0 0.0
  %2081 = vmatpush1.msra.mxu0 0.0
  %2082 = vmatprep.subr.mxu0 0.0
  %2083 = vmatpush1.msra.mxu0 0.0
  %2084 = vmatprep.subr.mxu0 0.0
  %2085 = vmatpush1.msra.mxu0 0.0
  %2086 = vmatprep.subr.mxu0 0.0
  %2087 = vmatpush1.msra.mxu0 0.0
  %2088 = vmatprep.subr.mxu0 0.0
  %2089 = vmatpush1.msra.mxu0 0.0
  %2090 = vmatprep.subr.mxu0 0.0
  %2091 = vmatpush1.msra.mxu0 0.0
  %2092 = vmatprep.subr.mxu0 0.0
  %2093 = vmatpush1.msra.mxu0 0.0
  %2094 = vmatprep.subr.mxu0 0.0
  %2095 = vmatpush1.msra.mxu0 0.0
  %2096 = vmatprep.subr.mxu0 0.0
  %2097 = vmatpush1.msra.mxu0 0.0
  %2098 = vmatprep.subr.mxu0 0.0
  %2099 = vmatpush1.msra.mxu0 0.0
  %2100 = vmatprep.subr.mxu0 0.0
  %2101 = vmatpush1.msra.mxu0 %v44
  %2102 = vmatprep.subr.mxu0 0.0
  %2103 = vmatpush1.msra.mxu0 %v43
  %2104 = vmatprep.subr.mxu0 0.0
  %2105 = vmatpush2.msra.mxu0 0.0
  %2106 = vmatprep.subr.mxu0 0.0
  %2107 = vmatpush2.msra.mxu0 0.0
  %2108 = vmatprep.subr.mxu0 0.0
  %2109 = vmatpush2.msra.mxu0 0.0
  %2110 = vmatprep.subr.mxu0 0.0
  %2111 = vmatpush2.msra.mxu0 0.0
  %2112 = vmatprep.subr.mxu0 0.0
  %2113 = vmatpush2.msra.mxu0 0.0
  %2114 = vmatprep.subr.mxu0 0.0
  %2115 = vmatpush2.msra.mxu0 0.0
  %2116 = vmatprep.subr.mxu0 0.0
  %2117 = vmatpush2.msra.mxu0 0.0
  %2118 = vmatprep.subr.mxu0 0.0
  %2119 = vmatpush2.msra.mxu0 0.0
  %2120 = vmatprep.subr.mxu0 0.0
  %2121 = vmatpush2.msra.mxu0 0.0
  %2122 = vmatprep.subr.mxu0 0.0
  %2123 = vmatpush2.msra.mxu0 0.0
  %2124 = vmatprep.subr.mxu0 0.0
  %2125 = vmatpush2.msra.mxu0 0.0
  %2126 = vmatprep.subr.mxu0 0.0
  %2127 = vmatpush2.msra.mxu0 0.0
  %2128 = vmatprep.subr.mxu0 0.0
  %2129 = vmatpush2.msra.mxu0 0.0
  %2130 = vmatprep.subr.mxu0 0.0
  %2131 = vmatpush2.msra.mxu0 0.0
  %2132 = vmatprep.subr.mxu0 0.0
  %2133 = vmatpush2.msra.mxu0 0.0
  %2134 = vmatprep.subr.mxu0 0.0
  %2135 = vmatpush2.msra.mxu0 0.0
  %2136 = vmatprep.mubr.f32.mxu0 0.0
  %2137 = vmatmul.mubr.f32.gmra.mxu0 %v1992
  %v2138 = vpop.f32.mrf.mxu0
  %v2139 = vadd.f32 0.0, %v2138
  %v2140 = vpop.f32.mrf.mxu0
  %2141 = vmatprep.mubr.f32.mxu0 0.0
  %2142 = vmatmul.mubr.f32.gmra.mxu0 %v1995
  %v2143 = vpop.f32.mrf.mxu0
  %v2144 = vadd.f32 0.0, %v2143
  %v2145 = vpop.f32.mrf.mxu0
  %2146 = vdwg.mxu0
  %2147 = vmatprep.subr.mxu0 0.0
  %2148 = vmatpush1.msra.mxu0 0.0
  %2149 = vmatprep.subr.mxu0 0.0
  %2150 = vmatpush1.msra.mxu0 0.0
  %2151 = vmatprep.subr.mxu0 0.0
  %2152 = vmatpush1.msra.mxu0 0.0
  %2153 = vmatprep.subr.mxu0 0.0
  %2154 = vmatpush1.msra.mxu0 0.0
  %2155 = vmatprep.subr.mxu0 0.0
  %2156 = vmatpush1.msra.mxu0 0.0
  %2157 = vmatprep.subr.mxu0 0.0
  %2158 = vmatpush1.msra.mxu0 0.0
  %2159 = vmatprep.subr.mxu0 0.0
  %2160 = vmatpush1.msra.mxu0 0.0
  %2161 = vmatprep.subr.mxu0 0.0
  %2162 = vmatpush1.msra.mxu0 0.0
  %2163 = vmatprep.subr.mxu0 0.0
  %2164 = vmatpush1.msra.mxu0 0.0
  %2165 = vmatprep.subr.mxu0 0.0
  %2166 = vmatpush1.msra.mxu0 0.0
  %2167 = vmatprep.subr.mxu0 0.0
  %2168 = vmatpush1.msra.mxu0 0.0
  %2169 = vmatprep.subr.mxu0 0.0
  %2170 = vmatpush1.msra.mxu0 0.0
  %2171 = vmatprep.subr.mxu0 0.0
  %2172 = vmatpush1.msra.mxu0 0.0
  %2173 = vmatprep.subr.mxu0 0.0
  %2174 = vmatpush1.msra.mxu0 0.0
  %2175 = vmatprep.subr.mxu0 0.0
  %2176 = vmatpush1.msra.mxu0 %v46
  %2177 = vmatprep.subr.mxu0 0.0
  %2178 = vmatpush1.msra.mxu0 %v45
  %2179 = vmatprep.subr.mxu0 0.0
  %2180 = vmatpush2.msra.mxu0 0.0
  %2181 = vmatprep.subr.mxu0 0.0
  %2182 = vmatpush2.msra.mxu0 0.0
  %2183 = vmatprep.subr.mxu0 0.0
  %2184 = vmatpush2.msra.mxu0 0.0
  %2185 = vmatprep.subr.mxu0 0.0
  %2186 = vmatpush2.msra.mxu0 0.0
  %2187 = vmatprep.subr.mxu0 0.0
  %2188 = vmatpush2.msra.mxu0 0.0
  %2189 = vmatprep.subr.mxu0 0.0
  %2190 = vmatpush2.msra.mxu0 0.0
  %2191 = vmatprep.subr.mxu0 0.0
  %2192 = vmatpush2.msra.mxu0 0.0
  %2193 = vmatprep.subr.mxu0 0.0
  %2194 = vmatpush2.msra.mxu0 0.0
  %2195 = vmatprep.subr.mxu0 0.0
  %2196 = vmatpush2.msra.mxu0 0.0
  %2197 = vmatprep.subr.mxu0 0.0
  %2198 = vmatpush2.msra.mxu0 0.0
  %2199 = vmatprep.subr.mxu0 0.0
  %2200 = vmatpush2.msra.mxu0 0.0
  %2201 = vmatprep.subr.mxu0 0.0
  %2202 = vmatpush2.msra.mxu0 0.0
  %2203 = vmatprep.subr.mxu0 0.0
  %2204 = vmatpush2.msra.mxu0 0.0
  %2205 = vmatprep.subr.mxu0 0.0
  %2206 = vmatpush2.msra.mxu0 0.0
  %2207 = vmatprep.subr.mxu0 0.0
  %2208 = vmatpush2.msra.mxu0 0.0
  %2209 = vmatprep.subr.mxu0 0.0
  %2210 = vmatpush2.msra.mxu0 0.0
  %2211 = vmatprep.mubr.f32.mxu0 0.0
  %2212 = vmatmul.mubr.f32.gmra.mxu0 %v1992
  %v2213 = vpop.f32.mrf.mxu0
  %v2214 = vadd.f32 0.0, %v2213
  %v2215 = vpop.f32.mrf.mxu0
  %2216 = vmatprep.mubr.f32.mxu0 0.0
  %2217 = vmatmul.mubr.f32.gmra.mxu0 %v1995
  %v2218 = vpop.f32.mrf.mxu0
  %v2219 = vadd.f32 0.0, %v2218
  %v2220 = vpop.f32.mrf.mxu0
  %2221 = vdwg.mxu0
  %v2223 = vsel %vm901, %v2219, 0
  %2225 = vmatprep.subr.mxu0 0.0
  %2226 = vmatpush1.msra.mxu0 0.0
  %2227 = vmatprep.subr.mxu0 0.0
  %2228 = vmatpush1.msra.mxu0 0.0
  %2229 = vmatprep.subr.mxu0 0.0
  %2230 = vmatpush1.msra.mxu0 0.0
  %2231 = vmatprep.subr.mxu0 0.0
  %2232 = vmatpush1.msra.mxu0 0.0
  %2233 = vmatprep.subr.mxu0 0.0
  %2234 = vmatpush1.msra.mxu0 0.0
  %2235 = vmatprep.subr.mxu0 0.0
  %2236 = vmatpush1.msra.mxu0 0.0
  %2237 = vmatprep.subr.mxu0 0.0
  %2238 = vmatpush1.msra.mxu0 0.0
  %2239 = vmatprep.subr.mxu0 0.0
  %2240 = vmatpush1.msra.mxu0 0.0
  %2241 = vmatprep.subr.mxu0 0.0
  %2242 = vmatpush1.msra.mxu0 0.0
  %2243 = vmatprep.subr.mxu0 0.0
  %2244 = vmatpush1.msra.mxu0 0.0
  %2245 = vmatprep.subr.mxu0 0.0
  %2246 = vmatpush1.msra.mxu0 0.0
  %2247 = vmatprep.subr.mxu0 0.0
  %2248 = vmatpush1.msra.mxu0 0.0
  %2249 = vmatprep.subr.mxu0 0.0
  %2250 = vmatpush1.msra.mxu0 0.0
  %2251 = vmatprep.subr.mxu0 0.0
  %2252 = vmatpush1.msra.mxu0 0.0
  %2253 = vmatprep.subr.mxu0 0.0
  %2254 = vmatpush1.msra.mxu0 %v2223
  %2255 = vmatprep.subr.mxu0 0.0
  %2256 = vmatpush1.msra.mxu0 %v2214
  %2257 = vmatprep.subr.mxu0 0.0
  %2258 = vmatpush2.msra.mxu0 0.0
  %2259 = vmatprep.subr.mxu0 0.0
  %2260 = vmatpush2.msra.mxu0 0.0
  %2261 = vmatprep.subr.mxu0 0.0
  %2262 = vmatpush2.msra.mxu0 0.0
  %2263 = vmatprep.subr.mxu0 0.0
  %2264 = vmatpush2.msra.mxu0 0.0
  %2265 = vmatprep.subr.mxu0 0.0
  %2266 = vmatpush2.msra.mxu0 0.0
  %2267 = vmatprep.subr.mxu0 0.0
  %2268 = vmatpush2.msra.mxu0 0.0
  %2269 = vmatprep.subr.mxu0 0.0
  %2270 = vmatpush2.msra.mxu0 0.0
  %2271 = vmatprep.subr.mxu0 0.0
  %2272 = vmatpush2.msra.mxu0 0.0
  %2273 = vmatprep.subr.mxu0 0.0
  %2274 = vmatpush2.msra.mxu0 0.0
  %2275 = vmatprep.subr.mxu0 0.0
  %2276 = vmatpush2.msra.mxu0 0.0
  %2277 = vmatprep.subr.mxu0 0.0
  %2278 = vmatpush2.msra.mxu0 0.0
  %2279 = vmatprep.subr.mxu0 0.0
  %2280 = vmatpush2.msra.mxu0 0.0
  %2281 = vmatprep.subr.mxu0 0.0
  %2282 = vmatpush2.msra.mxu0 0.0
  %2283 = vmatprep.subr.mxu0 0.0
  %2284 = vmatpush2.msra.mxu0 0.0
  %2285 = vmatprep.subr.mxu0 0.0
  %2286 = vmatpush2.msra.mxu0 0.0
  %2287 = vmatprep.subr.mxu0 0.0
  %2288 = vmatpush2.msra.mxu0 0.0
  %2289 = vmatprep.mubr.f32.mxu0 0.0
  %2290 = vmatmul.mubr.f32.gmra.mxu0 %v896
  %v2291 = vpop.f32.mrf.mxu0
  %v2292 = vadd.f32 0.0, %v2291
  %v2293 = vpop.f32.mrf.mxu0
  %2294 = vmatprep.mubr.f32.mxu0 0.0
  %2295 = vmatmul.mubr.f32.gmra.mxu0 %v899
  %v2296 = vpop.f32.mrf.mxu0
  %v2297 = vadd.f32 0.0, %v2296
  %v2298 = vpop.f32.mrf.mxu0
  %2299 = vdwg.mxu0
  %v2301 = vsel %vm901, %v2069, 0
  %2303 = vmatprep.subr.mxu0 0.0
  %2304 = vmatpush1.msra.mxu0 0.0
  %2305 = vmatprep.subr.mxu0 0.0
  %2306 = vmatpush1.msra.mxu0 0.0
  %2307 = vmatprep.subr.mxu0 0.0
  %2308 = vmatpush1.msra.mxu0 0.0
  %2309 = vmatprep.subr.mxu0 0.0
  %2310 = vmatpush1.msra.mxu0 0.0
  %2311 = vmatprep.subr.mxu0 0.0
  %2312 = vmatpush1.msra.mxu0 0.0
  %2313 = vmatprep.subr.mxu0 0.0
  %2314 = vmatpush1.msra.mxu0 0.0
  %2315 = vmatprep.subr.mxu0 0.0
  %2316 = vmatpush1.msra.mxu0 0.0
  %2317 = vmatprep.subr.mxu0 0.0
  %2318 = vmatpush1.msra.mxu0 0.0
  %2319 = vmatprep.subr.mxu0 0.0
  %2320 = vmatpush1.msra.mxu0 0.0
  %2321 = vmatprep.subr.mxu0 0.0
  %2322 = vmatpush1.msra.mxu0 0.0
  %2323 = vmatprep.subr.mxu0 0.0
  %2324 = vmatpush1.msra.mxu0 0.0
  %2325 = vmatprep.subr.mxu0 0.0
  %2326 = vmatpush1.msra.mxu0 0.0
  %2327 = vmatprep.subr.mxu0 0.0
  %2328 = vmatpush1.msra.mxu0 0.0
  %2329 = vmatprep.subr.mxu0 0.0
  %2330 = vmatpush1.msra.mxu0 0.0
  %2331 = vmatprep.subr.mxu0 0.0
  %2332 = vmatpush1.msra.mxu0 %v2301
  %2333 = vmatprep.subr.mxu0 0.0
  %2334 = vmatpush1.msra.mxu0 %v2064
  %2335 = vmatprep.subr.mxu0 0.0
  %2336 = vmatpush2.msra.mxu0 0.0
  %2337 = vmatprep.subr.mxu0 0.0
  %2338 = vmatpush2.msra.mxu0 0.0
  %2339 = vmatprep.subr.mxu0 0.0
  %2340 = vmatpush2.msra.mxu0 0.0
  %2341 = vmatprep.subr.mxu0 0.0
  %2342 = vmatpush2.msra.mxu0 0.0
  %2343 = vmatprep.subr.mxu0 0.0
  %2344 = vmatpush2.msra.mxu0 0.0
  %2345 = vmatprep.subr.mxu0 0.0
  %2346 = vmatpush2.msra.mxu0 0.0
  %2347 = vmatprep.subr.mxu0 0.0
  %2348 = vmatpush2.msra.mxu0 0.0
  %2349 = vmatprep.subr.mxu0 0.0
  %2350 = vmatpush2.msra.mxu0 0.0
  %2351 = vmatprep.subr.mxu0 0.0
  %2352 = vmatpush2.msra.mxu0 0.0
  %2353 = vmatprep.subr.mxu0 0.0
  %2354 = vmatpush2.msra.mxu0 0.0
  %2355 = vmatprep.subr.mxu0 0.0
  %2356 = vmatpush2.msra.mxu0 0.0
  %2357 = vmatprep.subr.mxu0 0.0
  %2358 = vmatpush2.msra.mxu0 0.0
  %2359 = vmatprep.subr.mxu0 0.0
  %2360 = vmatpush2.msra.mxu0 0.0
  %2361 = vmatprep.subr.mxu0 0.0
  %2362 = vmatpush2.msra.mxu0 0.0
  %2363 = vmatprep.subr.mxu0 0.0
  %2364 = vmatpush2.msra.mxu0 0.0
  %2365 = vmatprep.subr.mxu0 0.0
  %2366 = vmatpush2.msra.mxu0 0.0
  %2367 = vmatprep.mubr.f32.mxu0 0.0
  %2368 = vmatmul.mubr.f32.gmra.mxu0 %v980
  %v2369 = vpop.f32.mrf.mxu0
  %v2370 = vadd.f32 %v2139, %v2369
  %v2371 = vpop.f32.mrf.mxu0
  %2372 = vmatprep.mubr.f32.mxu0 0.0
  %2373 = vmatmul.mubr.f32.gmra.mxu0 %v982
  %v2374 = vpop.f32.mrf.mxu0
  %v2375 = vadd.f32 %v2144, %v2374
  %v2376 = vpop.f32.mrf.mxu0
  %2377 = vdwg.mxu0
  %v2378 = vadd.f32 %v2370, %v2292
  %v2379 = vadd.f32 %v2375, %v2297
  %v2380 = vadd.f32 %v2378, %v1067
  %v2381 = vadd.f32 %v2379, %v1067
  %v2382 = vmax.f32 %v2380, 0.0
  %v2383 = vmax.f32 %v2381, 0.0
  %v2385 = vsel %vm901, %v2383, 0
  %2387 = vmatprep.subr.mxu0 0.0
  %2388 = vmatpush1.msra.mxu0 0.0
  %2389 = vmatprep.subr.mxu0 0.0
  %2390 = vmatpush1.msra.mxu0 0.0
  %2391 = vmatprep.subr.mxu0 0.0
  %2392 = vmatpush1.msra.mxu0 0.0
  %2393 = vmatprep.subr.mxu0 0.0
  %2394 = vmatpush1.msra.mxu0 0.0
  %2395 = vmatprep.subr.mxu0 0.0
  %2396 = vmatpush1.msra.mxu0 0.0
  %2397 = vmatprep.subr.mxu0 0.0
  %2398 = vmatpush1.msra.mxu0 0.0
  %2399 = vmatprep.subr.mxu0 0.0
  %2400 = vmatpush1.msra.mxu0 0.0
  %2401 = vmatprep.subr.mxu0 0.0
  %2402 = vmatpush1.msra.mxu0 0.0
  %2403 = vmatprep.subr.mxu0 0.0
  %2404 = vmatpush1.msra.mxu0 0.0
  %2405 = vmatprep.subr.mxu0 0.0
  %2406 = vmatpush1.msra.mxu0 0.0
  %2407 = vmatprep.subr.mxu0 0.0
  %2408 = vmatpush1.msra.mxu0 0.0
  %2409 = vmatprep.subr.mxu0 0.0
  %2410 = vmatpush1.msra.mxu0 0.0
  %2411 = vmatprep.subr.mxu0 0.0
  %2412 = vmatpush1.msra.mxu0 0.0
  %2413 = vmatprep.subr.mxu0 0.0
  %2414 = vmatpush1.msra.mxu0 0.0
  %2415 = vmatprep.subr.mxu0 0.0
  %2416 = vmatpush1.msra.mxu0 %v2385
  %2417 = vmatprep.subr.mxu0 0.0
  %2418 = vmatpush1.msra.mxu0 %v2382
  %2419 = vmatprep.subr.mxu0 0.0
  %2420 = vmatpush2.msra.mxu0 0.0
  %2421 = vmatprep.subr.mxu0 0.0
  %2422 = vmatpush2.msra.mxu0 0.0
  %2423 = vmatprep.subr.mxu0 0.0
  %2424 = vmatpush2.msra.mxu0 0.0
  %2425 = vmatprep.subr.mxu0 0.0
  %2426 = vmatpush2.msra.mxu0 0.0
  %2427 = vmatprep.subr.mxu0 0.0
  %2428 = vmatpush2.msra.mxu0 0.0
  %2429 = vmatprep.subr.mxu0 0.0
  %2430 = vmatpush2.msra.mxu0 0.0
  %2431 = vmatprep.subr.mxu0 0.0
  %2432 = vmatpush2.msra.mxu0 0.0
  %2433 = vmatprep.subr.mxu0 0.0
  %2434 = vmatpush2.msra.mxu0 0.0
  %2435 = vmatprep.subr.mxu0 0.0
  %2436 = vmatpush2.msra.mxu0 0.0
  %2437 = vmatprep.subr.mxu0 0.0
  %2438 = vmatpush2.msra.mxu0 0.0
  %2439 = vmatprep.subr.mxu0 0.0
  %2440 = vmatpush2.msra.mxu0 0.0
  %2441 = vmatprep.subr.mxu0 0.0
  %2442 = vmatpush2.msra.mxu0 0.0
  %2443 = vmatprep.subr.mxu0 0.0
  %2444 = vmatpush2.msra.mxu0 0.0
  %2445 = vmatprep.subr.mxu0 0.0
  %2446 = vmatpush2.msra.mxu0 0.0
  %2447 = vmatprep.subr.mxu0 0.0
  %2448 = vmatpush2.msra.mxu0 0.0
  %2449 = vmatprep.subr.mxu0 0.0
  %2450 = vmatpush2.msra.mxu0 0.0
  %2451 = vmatprep.mubr.f32.mxu0 0.0
  %2452 = vmatmul.mubr.f32.gmra.mxu0 %v1093
  %v2453 = vpop.f32.mrf.mxu0
  %v2454 = vadd.f32 %v1075, %v2453
  %v2455 = vpop.f32.mrf.mxu0
  %2456 = vmatprep.mubr.f32.mxu0 0.0
  %2457 = vmatmul.mubr.f32.gmra.mxu0 %v1096
  %v2458 = vpop.f32.mrf.mxu0
  %v2459 = vadd.f32 %v1080, %v2458
  %v2460 = vpop.f32.mrf.mxu0
  %2461 = vmatprep.mubr.f32.mxu0 0.0
  %2462 = vmatmul.mubr.f32.gmra.mxu0 %v1099
  %v2463 = vpop.f32.mrf.mxu0
  %v2464 = vadd.f32 %v1085, %v2463
  %v2465 = vpop.f32.mrf.mxu0
  %2466 = vmatprep.mubr.f32.mxu0 0.0
  %2467 = vmatmul.mubr.f32.gmra.mxu0 %v1102
  %v2468 = vpop.f32.mrf.mxu0
  %v2469 = vadd.f32 %v1090, %v2468
  %v2470 = vpop.f32.mrf.mxu0
  %2471 = vdwg.mxu0
  %s2472 = scalar_lea.vmem %s8, 64
  %2473 = vst.msk [vmem:[%s2472] sm:$0xff] %vm1192, %v2454
  %2474 = vst.msk [vmem:[%s2472 + $0x8] sm:$0xff] %vm1192, %v2459
  %2475 = vst.msk [vmem:[%s2472 + $0x10] sm:$0xff] %vm1192, %v2464
  %2476 = vst.msk [vmem:[%s2472 + $0x18] sm:$0xff] %vm1192, %v2469
  %2477 = vmatprep.subr.mxu0 0.0
  %2478 = vmatpush1.msra.mxu0 0.0
  %2479 = vmatprep.subr.mxu0 0.0
  %2480 = vmatpush1.msra.mxu0 0.0
  %2481 = vmatprep.subr.mxu0 0.0
  %2482 = vmatpush1.msra.mxu0 0.0
  %2483 = vmatprep.subr.mxu0 0.0
  %2484 = vmatpush1.msra.mxu0 0.0
  %2485 = vmatprep.subr.mxu0 0.0
  %2486 = vmatpush1.msra.mxu0 0.0
  %2487 = vmatprep.subr.mxu0 0.0
  %2488 = vmatpush1.msra.mxu0 0.0
  %2489 = vmatprep.subr.mxu0 0.0
  %2490 = vmatpush1.msra.mxu0 0.0
  %2491 = vmatprep.subr.mxu0 0.0
  %2492 = vmatpush1.msra.mxu0 0.0
  %2493 = vmatprep.subr.mxu0 0.0
  %2494 = vmatpush1.msra.mxu0 0.0
  %2495 = vmatprep.subr.mxu0 0.0
  %2496 = vmatpush1.msra.mxu0 0.0
  %2497 = vmatprep.subr.mxu0 0.0
  %2498 = vmatpush1.msra.mxu0 0.0
  %2499 = vmatprep.subr.mxu0 0.0
  %2500 = vmatpush1.msra.mxu0 0.0
  %2501 = vmatprep.subr.mxu0 0.0
  %2502 = vmatpush1.msra.mxu0 0.0
  %2503 = vmatprep.subr.mxu0 0.0
  %2504 = vmatpush1.msra.mxu0 0.0
  %2505 = vmatprep.subr.mxu0 0.0
  %2506 = vmatpush1.msra.mxu0 0.0
  %2507 = vmatprep.subr.mxu0 0.0
  %2508 = vmatpush1.msra.mxu0 %v462
  %2509 = vmatprep.subr.mxu0 0.0
  %2510 = vmatpush2.msra.mxu0 0.0
  %2511 = vmatprep.subr.mxu0 0.0
  %2512 = vmatpush2.msra.mxu0 0.0
  %2513 = vmatprep.subr.mxu0 0.0
  %2514 = vmatpush2.msra.mxu0 0.0
  %2515 = vmatprep.subr.mxu0 0.0
  %2516 = vmatpush2.msra.mxu0 0.0
  %2517 = vmatprep.subr.mxu0 0.0
  %2518 = vmatpush2.msra.mxu0 0.0
  %2519 = vmatprep.subr.mxu0 0.0
  %2520 = vmatpush2.msra.mxu0 0.0
  %2521 = vmatprep.subr.mxu0 0.0
  %2522 = vmatpush2.msra.mxu0 0.0
  %2523 = vmatprep.subr.mxu0 0.0
  %2524 = vmatpush2.msra.mxu0 0.0
  %2525 = vmatprep.subr.mxu0 0.0
  %2526 = vmatpush2.msra.mxu0 0.0
  %2527 = vmatprep.subr.mxu0 0.0
  %2528 = vmatpush2.msra.mxu0 0.0
  %2529 = vmatprep.subr.mxu0 0.0
  %2530 = vmatpush2.msra.mxu0 0.0
  %2531 = vmatprep.subr.mxu0 0.0
  %2532 = vmatpush2.msra.mxu0 0.0
  %2533 = vmatprep.subr.mxu0 0.0
  %2534 = vmatpush2.msra.mxu0 0.0
  %2535 = vmatprep.subr.mxu0 0.0
  %2536 = vmatpush2.msra.mxu0 0.0
  %2537 = vmatprep.subr.mxu0 0.0
  %2538 = vmatpush2.msra.mxu0 0.0
  %2539 = vmatprep.subr.mxu0 0.0
  %2540 = vmatpush2.msra.mxu0 0.0
  %2541 = vmatprep.mubr.f32.mxu0 0.0
  %2542 = vmatmul.mubr.f32.gmra.mxu0 %v494
  %v2543 = vpop.f32.mrf.mxu0
  %v2544 = vadd.f32 0.0, %v2543
  %v2545 = vpop.f32.mrf.mxu0
  %2546 = vmatprep.mubr.f32.mxu0 0.0
  %2547 = vmatmul.mubr.f32.gmra.mxu0 %v497
  %v2548 = vpop.f32.mrf.mxu0
  %v2549 = vadd.f32 0.0, %v2548
  %v2550 = vpop.f32.mrf.mxu0
  %2551 = vdwg.mxu0
  %2552 = vmatprep.subr.mxu0 0.0
  %2553 = vmatpush1.msra.mxu0 0.0
  %2554 = vmatprep.subr.mxu0 0.0
  %2555 = vmatpush1.msra.mxu0 0.0
  %2556 = vmatprep.subr.mxu0 0.0
  %2557 = vmatpush1.msra.mxu0 0.0
  %2558 = vmatprep.subr.mxu0 0.0
  %2559 = vmatpush1.msra.mxu0 0.0
  %2560 = vmatprep.subr.mxu0 0.0
  %2561 = vmatpush1.msra.mxu0 0.0
  %2562 = vmatprep.subr.mxu0 0.0
  %2563 = vmatpush1.msra.mxu0 0.0
  %2564 = vmatprep.subr.mxu0 0.0
  %2565 = vmatpush1.msra.mxu0 0.0
  %2566 = vmatprep.subr.mxu0 0.0
  %2567 = vmatpush1.msra.mxu0 0.0
  %2568 = vmatprep.subr.mxu0 0.0
  %2569 = vmatpush1.msra.mxu0 0.0
  %2570 = vmatprep.subr.mxu0 0.0
  %2571 = vmatpush1.msra.mxu0 0.0
  %2572 = vmatprep.subr.mxu0 0.0
  %2573 = vmatpush1.msra.mxu0 0.0
  %2574 = vmatprep.subr.mxu0 0.0
  %2575 = vmatpush1.msra.mxu0 0.0
  %2576 = vmatprep.subr.mxu0 0.0
  %2577 = vmatpush1.msra.mxu0 0.0
  %2578 = vmatprep.subr.mxu0 0.0
  %2579 = vmatpush1.msra.mxu0 0.0
  %2580 = vmatprep.subr.mxu0 0.0
  %2581 = vmatpush1.msra.mxu0 0.0
  %2582 = vmatprep.subr.mxu0 0.0
  %2583 = vmatpush1.msra.mxu0 %v365
  %2584 = vmatprep.subr.mxu0 0.0
  %2585 = vmatpush2.msra.mxu0 0.0
  %2586 = vmatprep.subr.mxu0 0.0
  %2587 = vmatpush2.msra.mxu0 0.0
  %2588 = vmatprep.subr.mxu0 0.0
  %2589 = vmatpush2.msra.mxu0 0.0
  %2590 = vmatprep.subr.mxu0 0.0
  %2591 = vmatpush2.msra.mxu0 0.0
  %2592 = vmatprep.subr.mxu0 0.0
  %2593 = vmatpush2.msra.mxu0 0.0
  %2594 = vmatprep.subr.mxu0 0.0
  %2595 = vmatpush2.msra.mxu0 0.0
  %2596 = vmatprep.subr.mxu0 0.0
  %2597 = vmatpush2.msra.mxu0 0.0
  %2598 = vmatprep.subr.mxu0 0.0
  %2599 = vmatpush2.msra.mxu0 0.0
  %2600 = vmatprep.subr.mxu0 0.0
  %2601 = vmatpush2.msra.mxu0 0.0
  %2602 = vmatprep.subr.mxu0 0.0
  %2603 = vmatpush2.msra.mxu0 0.0
  %2604 = vmatprep.subr.mxu0 0.0
  %2605 = vmatpush2.msra.mxu0 0.0
  %2606 = vmatprep.subr.mxu0 0.0
  %2607 = vmatpush2.msra.mxu0 0.0
  %2608 = vmatprep.subr.mxu0 0.0
  %2609 = vmatpush2.msra.mxu0 0.0
  %2610 = vmatprep.subr.mxu0 0.0
  %2611 = vmatpush2.msra.mxu0 0.0
  %2612 = vmatprep.subr.mxu0 0.0
  %2613 = vmatpush2.msra.mxu0 0.0
  %2614 = vmatprep.subr.mxu0 0.0
  %2615 = vmatpush2.msra.mxu0 0.0
  %2616 = vmatprep.mubr.f32.mxu0 0.0
  %2617 = vmatmul.mubr.f32.gmra.mxu0 %v575
  %v2618 = vpop.f32.mrf.mxu0
  %v2619 = vadd.f32 %v2544, %v2618
  %v2620 = vpop.f32.mrf.mxu0
  %2621 = vmatprep.mubr.f32.mxu0 0.0
  %2622 = vmatmul.mubr.f32.gmra.mxu0 %v578
  %v2623 = vpop.f32.mrf.mxu0
  %v2624 = vadd.f32 %v2549, %v2623
  %v2625 = vpop.f32.mrf.mxu0
  %2626 = vdwg.mxu0
  %v2627 = vadd.f32 %v2619, %v658
  %v2628 = vadd.f32 %v2624, %v658
  %v2629 = vmax.f32 %v2627, 0.0
  %v2630 = vmax.f32 %v2628, 0.0
  %v2632 = vsel %vm270, %v2629, 0
  %v2635 = vsel %vm270, %v2630, 0
  %2637 = vmatprep.subr.mxu0 0.0
  %2638 = vmatpush1.msra.mxu0 0.0
  %2639 = vmatprep.subr.mxu0 0.0
  %2640 = vmatpush1.msra.mxu0 0.0
  %2641 = vmatprep.subr.mxu0 0.0
  %2642 = vmatpush1.msra.mxu0 0.0
  %2643 = vmatprep.subr.mxu0 0.0
  %2644 = vmatpush1.msra.mxu0 0.0
  %2645 = vmatprep.subr.mxu0 0.0
  %2646 = vmatpush1.msra.mxu0 0.0
  %2647 = vmatprep.subr.mxu0 0.0
  %2648 = vmatpush1.msra.mxu0 0.0
  %2649 = vmatprep.subr.mxu0 0.0
  %2650 = vmatpush1.msra.mxu0 0.0
  %2651 = vmatprep.subr.mxu0 0.0
  %2652 = vmatpush1.msra.mxu0 0.0
  %2653 = vmatprep.subr.mxu0 0.0
  %2654 = vmatpush1.msra.mxu0 0.0
  %2655 = vmatprep.subr.mxu0 0.0
  %2656 = vmatpush1.msra.mxu0 0.0
  %2657 = vmatprep.subr.mxu0 0.0
  %2658 = vmatpush1.msra.mxu0 0.0
  %2659 = vmatprep.subr.mxu0 0.0
  %2660 = vmatpush1.msra.mxu0 0.0
  %2661 = vmatprep.subr.mxu0 0.0
  %2662 = vmatpush1.msra.mxu0 0.0
  %2663 = vmatprep.subr.mxu0 0.0
  %2664 = vmatpush1.msra.mxu0 0.0
  %2665 = vmatprep.subr.mxu0 0.0
  %2666 = vmatpush1.msra.mxu0 %v42
  %2667 = vmatprep.subr.mxu0 0.0
  %2668 = vmatpush1.msra.mxu0 %v41
  %2669 = vmatprep.subr.mxu0 0.0
  %2670 = vmatpush2.msra.mxu0 0.0
  %2671 = vmatprep.subr.mxu0 0.0
  %2672 = vmatpush2.msra.mxu0 0.0
  %2673 = vmatprep.subr.mxu0 0.0
  %2674 = vmatpush2.msra.mxu0 0.0
  %2675 = vmatprep.subr.mxu0 0.0
  %2676 = vmatpush2.msra.mxu0 0.0
  %2677 = vmatprep.subr.mxu0 0.0
  %2678 = vmatpush2.msra.mxu0 0.0
  %2679 = vmatprep.subr.mxu0 0.0
  %2680 = vmatpush2.msra.mxu0 0.0
  %2681 = vmatprep.subr.mxu0 0.0
  %2682 = vmatpush2.msra.mxu0 0.0
  %2683 = vmatprep.subr.mxu0 0.0
  %2684 = vmatpush2.msra.mxu0 0.0
  %2685 = vmatprep.subr.mxu0 0.0
  %2686 = vmatpush2.msra.mxu0 0.0
  %2687 = vmatprep.subr.mxu0 0.0
  %2688 = vmatpush2.msra.mxu0 0.0
  %2689 = vmatprep.subr.mxu0 0.0
  %2690 = vmatpush2.msra.mxu0 0.0
  %2691 = vmatprep.subr.mxu0 0.0
  %2692 = vmatpush2.msra.mxu0 0.0
  %2693 = vmatprep.subr.mxu0 0.0
  %2694 = vmatpush2.msra.mxu0 0.0
  %2695 = vmatprep.subr.mxu0 0.0
  %2696 = vmatpush2.msra.mxu0 0.0
  %2697 = vmatprep.subr.mxu0 0.0
  %2698 = vmatpush2.msra.mxu0 0.0
  %2699 = vmatprep.subr.mxu0 0.0
  %2700 = vmatpush2.msra.mxu0 0.0
  %2701 = vmatprep.mubr.f32.mxu0 0.0
  %2702 = vmatmul.mubr.f32.gmra.mxu0 %v2632
  %v2703 = vpop.f32.mrf.mxu0
  %v2704 = vadd.f32 0.0, %v2703
  %v2705 = vpop.f32.mrf.mxu0
  %2706 = vmatprep.mubr.f32.mxu0 0.0
  %2707 = vmatmul.mubr.f32.gmra.mxu0 %v2635
  %v2708 = vpop.f32.mrf.mxu0
  %v2709 = vadd.f32 0.0, %v2708
  %v2710 = vpop.f32.mrf.mxu0
  %2711 = vdwg.mxu0
  %2712 = vmatprep.subr.mxu0 0.0
  %2713 = vmatpush1.msra.mxu0 0.0
  %2714 = vmatprep.subr.mxu0 0.0
  %2715 = vmatpush1.msra.mxu0 0.0
  %2716 = vmatprep.subr.mxu0 0.0
  %2717 = vmatpush1.msra.mxu0 0.0
  %2718 = vmatprep.subr.mxu0 0.0
  %2719 = vmatpush1.msra.mxu0 0.0
  %2720 = vmatprep.subr.mxu0 0.0
  %2721 = vmatpush1.msra.mxu0 0.0
  %2722 = vmatprep.subr.mxu0 0.0
  %2723 = vmatpush1.msra.mxu0 0.0
  %2724 = vmatprep.subr.mxu0 0.0
  %2725 = vmatpush1.msra.mxu0 0.0
  %2726 = vmatprep.subr.mxu0 0.0
  %2727 = vmatpush1.msra.mxu0 0.0
  %2728 = vmatprep.subr.mxu0 0.0
  %2729 = vmatpush1.msra.mxu0 0.0
  %2730 = vmatprep.subr.mxu0 0.0
  %2731 = vmatpush1.msra.mxu0 0.0
  %2732 = vmatprep.subr.mxu0 0.0
  %2733 = vmatpush1.msra.mxu0 0.0
  %2734 = vmatprep.subr.mxu0 0.0
  %2735 = vmatpush1.msra.mxu0 0.0
  %2736 = vmatprep.subr.mxu0 0.0
  %2737 = vmatpush1.msra.mxu0 0.0
  %2738 = vmatprep.subr.mxu0 0.0
  %2739 = vmatpush1.msra.mxu0 0.0
  %2740 = vmatprep.subr.mxu0 0.0
  %2741 = vmatpush1.msra.mxu0 %v44
  %2742 = vmatprep.subr.mxu0 0.0
  %2743 = vmatpush1.msra.mxu0 %v43
  %2744 = vmatprep.subr.mxu0 0.0
  %2745 = vmatpush2.msra.mxu0 0.0
  %2746 = vmatprep.subr.mxu0 0.0
  %2747 = vmatpush2.msra.mxu0 0.0
  %2748 = vmatprep.subr.mxu0 0.0
  %2749 = vmatpush2.msra.mxu0 0.0
  %2750 = vmatprep.subr.mxu0 0.0
  %2751 = vmatpush2.msra.mxu0 0.0
  %2752 = vmatprep.subr.mxu0 0.0
  %2753 = vmatpush2.msra.mxu0 0.0
  %2754 = vmatprep.subr.mxu0 0.0
  %2755 = vmatpush2.msra.mxu0 0.0
  %2756 = vmatprep.subr.mxu0 0.0
  %2757 = vmatpush2.msra.mxu0 0.0
  %2758 = vmatprep.subr.mxu0 0.0
  %2759 = vmatpush2.msra.mxu0 0.0
  %2760 = vmatprep.subr.mxu0 0.0
  %2761 = vmatpush2.msra.mxu0 0.0
  %2762 = vmatprep.subr.mxu0 0.0
  %2763 = vmatpush2.msra.mxu0 0.0
  %2764 = vmatprep.subr.mxu0 0.0
  %2765 = vmatpush2.msra.mxu0 0.0
  %2766 = vmatprep.subr.mxu0 0.0
  %2767 = vmatpush2.msra.mxu0 0.0
  %2768 = vmatprep.subr.mxu0 0.0
  %2769 = vmatpush2.msra.mxu0 0.0
  %2770 = vmatprep.subr.mxu0 0.0
  %2771 = vmatpush2.msra.mxu0 0.0
  %2772 = vmatprep.subr.mxu0 0.0
  %2773 = vmatpush2.msra.mxu0 0.0
  %2774 = vmatprep.subr.mxu0 0.0
  %2775 = vmatpush2.msra.mxu0 0.0
  %2776 = vmatprep.mubr.f32.mxu0 0.0
  %2777 = vmatmul.mubr.f32.gmra.mxu0 %v2632
  %v2778 = vpop.f32.mrf.mxu0
  %v2779 = vadd.f32 0.0, %v2778
  %v2780 = vpop.f32.mrf.mxu0
  %2781 = vmatprep.mubr.f32.mxu0 0.0
  %2782 = vmatmul.mubr.f32.gmra.mxu0 %v2635
  %v2783 = vpop.f32.mrf.mxu0
  %v2784 = vadd.f32 0.0, %v2783
  %v2785 = vpop.f32.mrf.mxu0
  %2786 = vdwg.mxu0
  %2787 = vmatprep.subr.mxu0 0.0
  %2788 = vmatpush1.msra.mxu0 0.0
  %2789 = vmatprep.subr.mxu0 0.0
  %2790 = vmatpush1.msra.mxu0 0.0
  %2791 = vmatprep.subr.mxu0 0.0
  %2792 = vmatpush1.msra.mxu0 0.0
  %2793 = vmatprep.subr.mxu0 0.0
  %2794 = vmatpush1.msra.mxu0 0.0
  %2795 = vmatprep.subr.mxu0 0.0
  %2796 = vmatpush1.msra.mxu0 0.0
  %2797 = vmatprep.subr.mxu0 0.0
  %2798 = vmatpush1.msra.mxu0 0.0
  %2799 = vmatprep.subr.mxu0 0.0
  %2800 = vmatpush1.msra.mxu0 0.0
  %2801 = vmatprep.subr.mxu0 0.0
  %2802 = vmatpush1.msra.mxu0 0.0
  %2803 = vmatprep.subr.mxu0 0.0
  %2804 = vmatpush1.msra.mxu0 0.0
  %2805 = vmatprep.subr.mxu0 0.0
  %2806 = vmatpush1.msra.mxu0 0.0
  %2807 = vmatprep.subr.mxu0 0.0
  %2808 = vmatpush1.msra.mxu0 0.0
  %2809 = vmatprep.subr.mxu0 0.0
  %2810 = vmatpush1.msra.mxu0 0.0
  %2811 = vmatprep.subr.mxu0 0.0
  %2812 = vmatpush1.msra.mxu0 0.0
  %2813 = vmatprep.subr.mxu0 0.0
  %2814 = vmatpush1.msra.mxu0 0.0
  %2815 = vmatprep.subr.mxu0 0.0
  %2816 = vmatpush1.msra.mxu0 %v46
  %2817 = vmatprep.subr.mxu0 0.0
  %2818 = vmatpush1.msra.mxu0 %v45
  %2819 = vmatprep.subr.mxu0 0.0
  %2820 = vmatpush2.msra.mxu0 0.0
  %2821 = vmatprep.subr.mxu0 0.0
  %2822 = vmatpush2.msra.mxu0 0.0
  %2823 = vmatprep.subr.mxu0 0.0
  %2824 = vmatpush2.msra.mxu0 0.0
  %2825 = vmatprep.subr.mxu0 0.0
  %2826 = vmatpush2.msra.mxu0 0.0
  %2827 = vmatprep.subr.mxu0 0.0
  %2828 = vmatpush2.msra.mxu0 0.0
  %2829 = vmatprep.subr.mxu0 0.0
  %2830 = vmatpush2.msra.mxu0 0.0
  %2831 = vmatprep.subr.mxu0 0.0
  %2832 = vmatpush2.msra.mxu0 0.0
  %2833 = vmatprep.subr.mxu0 0.0
  %2834 = vmatpush2.msra.mxu0 0.0
  %2835 = vmatprep.subr.mxu0 0.0
  %2836 = vmatpush2.msra.mxu0 0.0
  %2837 = vmatprep.subr.mxu0 0.0
  %2838 = vmatpush2.msra.mxu0 0.0
  %2839 = vmatprep.subr.mxu0 0.0
  %2840 = vmatpush2.msra.mxu0 0.0
  %2841 = vmatprep.subr.mxu0 0.0
  %2842 = vmatpush2.msra.mxu0 0.0
  %2843 = vmatprep.subr.mxu0 0.0
  %2844 = vmatpush2.msra.mxu0 0.0
  %2845 = vmatprep.subr.mxu0 0.0
  %2846 = vmatpush2.msra.mxu0 0.0
  %2847 = vmatprep.subr.mxu0 0.0
  %2848 = vmatpush2.msra.mxu0 0.0
  %2849 = vmatprep.subr.mxu0 0.0
  %2850 = vmatpush2.msra.mxu0 0.0
  %2851 = vmatprep.mubr.f32.mxu0 0.0
  %2852 = vmatmul.mubr.f32.gmra.mxu0 %v2632
  %v2853 = vpop.f32.mrf.mxu0
  %v2854 = vadd.f32 0.0, %v2853
  %v2855 = vpop.f32.mrf.mxu0
  %2856 = vmatprep.mubr.f32.mxu0 0.0
  %2857 = vmatmul.mubr.f32.gmra.mxu0 %v2635
  %v2858 = vpop.f32.mrf.mxu0
  %v2859 = vadd.f32 0.0, %v2858
  %v2860 = vpop.f32.mrf.mxu0
  %2861 = vdwg.mxu0
  %v2863 = vsel %vm901, %v2859, 0
  %2865 = vmatprep.subr.mxu0 0.0
  %2866 = vmatpush1.msra.mxu0 0.0
  %2867 = vmatprep.subr.mxu0 0.0
  %2868 = vmatpush1.msra.mxu0 0.0
  %2869 = vmatprep.subr.mxu0 0.0
  %2870 = vmatpush1.msra.mxu0 0.0
  %2871 = vmatprep.subr.mxu0 0.0
  %2872 = vmatpush1.msra.mxu0 0.0
  %2873 = vmatprep.subr.mxu0 0.0
  %2874 = vmatpush1.msra.mxu0 0.0
  %2875 = vmatprep.subr.mxu0 0.0
  %2876 = vmatpush1.msra.mxu0 0.0
  %2877 = vmatprep.subr.mxu0 0.0
  %2878 = vmatpush1.msra.mxu0 0.0
  %2879 = vmatprep.subr.mxu0 0.0
  %2880 = vmatpush1.msra.mxu0 0.0
  %2881 = vmatprep.subr.mxu0 0.0
  %2882 = vmatpush1.msra.mxu0 0.0
  %2883 = vmatprep.subr.mxu0 0.0
  %2884 = vmatpush1.msra.mxu0 0.0
  %2885 = vmatprep.subr.mxu0 0.0
  %2886 = vmatpush1.msra.mxu0 0.0
  %2887 = vmatprep.subr.mxu0 0.0
  %2888 = vmatpush1.msra.mxu0 0.0
  %2889 = vmatprep.subr.mxu0 0.0
  %2890 = vmatpush1.msra.mxu0 0.0
  %2891 = vmatprep.subr.mxu0 0.0
  %2892 = vmatpush1.msra.mxu0 0.0
  %2893 = vmatprep.subr.mxu0 0.0
  %2894 = vmatpush1.msra.mxu0 %v2863
  %2895 = vmatprep.subr.mxu0 0.0
  %2896 = vmatpush1.msra.mxu0 %v2854
  %2897 = vmatprep.subr.mxu0 0.0
  %2898 = vmatpush2.msra.mxu0 0.0
  %2899 = vmatprep.subr.mxu0 0.0
  %2900 = vmatpush2.msra.mxu0 0.0
  %2901 = vmatprep.subr.mxu0 0.0
  %2902 = vmatpush2.msra.mxu0 0.0
  %2903 = vmatprep.subr.mxu0 0.0
  %2904 = vmatpush2.msra.mxu0 0.0
  %2905 = vmatprep.subr.mxu0 0.0
  %2906 = vmatpush2.msra.mxu0 0.0
  %2907 = vmatprep.subr.mxu0 0.0
  %2908 = vmatpush2.msra.mxu0 0.0
  %2909 = vmatprep.subr.mxu0 0.0
  %2910 = vmatpush2.msra.mxu0 0.0
  %2911 = vmatprep.subr.mxu0 0.0
  %2912 = vmatpush2.msra.mxu0 0.0
  %2913 = vmatprep.subr.mxu0 0.0
  %2914 = vmatpush2.msra.mxu0 0.0
  %2915 = vmatprep.subr.mxu0 0.0
  %2916 = vmatpush2.msra.mxu0 0.0
  %2917 = vmatprep.subr.mxu0 0.0
  %2918 = vmatpush2.msra.mxu0 0.0
  %2919 = vmatprep.subr.mxu0 0.0
  %2920 = vmatpush2.msra.mxu0 0.0
  %2921 = vmatprep.subr.mxu0 0.0
  %2922 = vmatpush2.msra.mxu0 0.0
  %2923 = vmatprep.subr.mxu0 0.0
  %2924 = vmatpush2.msra.mxu0 0.0
  %2925 = vmatprep.subr.mxu0 0.0
  %2926 = vmatpush2.msra.mxu0 0.0
  %2927 = vmatprep.subr.mxu0 0.0
  %2928 = vmatpush2.msra.mxu0 0.0
  %2929 = vmatprep.mubr.f32.mxu0 0.0
  %2930 = vmatmul.mubr.f32.gmra.mxu0 %v896
  %v2931 = vpop.f32.mrf.mxu0
  %v2932 = vadd.f32 0.0, %v2931
  %v2933 = vpop.f32.mrf.mxu0
  %2934 = vmatprep.mubr.f32.mxu0 0.0
  %2935 = vmatmul.mubr.f32.gmra.mxu0 %v899
  %v2936 = vpop.f32.mrf.mxu0
  %v2937 = vadd.f32 0.0, %v2936
  %v2938 = vpop.f32.mrf.mxu0
  %2939 = vdwg.mxu0
  %v2941 = vsel %vm901, %v2709, 0
  %2943 = vmatprep.subr.mxu0 0.0
  %2944 = vmatpush1.msra.mxu0 0.0
  %2945 = vmatprep.subr.mxu0 0.0
  %2946 = vmatpush1.msra.mxu0 0.0
  %2947 = vmatprep.subr.mxu0 0.0
  %2948 = vmatpush1.msra.mxu0 0.0
  %2949 = vmatprep.subr.mxu0 0.0
  %2950 = vmatpush1.msra.mxu0 0.0
  %2951 = vmatprep.subr.mxu0 0.0
  %2952 = vmatpush1.msra.mxu0 0.0
  %2953 = vmatprep.subr.mxu0 0.0
  %2954 = vmatpush1.msra.mxu0 0.0
  %2955 = vmatprep.subr.mxu0 0.0
  %2956 = vmatpush1.msra.mxu0 0.0
  %2957 = vmatprep.subr.mxu0 0.0
  %2958 = vmatpush1.msra.mxu0 0.0
  %2959 = vmatprep.subr.mxu0 0.0
  %2960 = vmatpush1.msra.mxu0 0.0
  %2961 = vmatprep.subr.mxu0 0.0
  %2962 = vmatpush1.msra.mxu0 0.0
  %2963 = vmatprep.subr.mxu0 0.0
  %2964 = vmatpush1.msra.mxu0 0.0
  %2965 = vmatprep.subr.mxu0 0.0
  %2966 = vmatpush1.msra.mxu0 0.0
  %2967 = vmatprep.subr.mxu0 0.0
  %2968 = vmatpush1.msra.mxu0 0.0
  %2969 = vmatprep.subr.mxu0 0.0
  %2970 = vmatpush1.msra.mxu0 0.0
  %2971 = vmatprep.subr.mxu0 0.0
  %2972 = vmatpush1.msra.mxu0 %v2941
  %2973 = vmatprep.subr.mxu0 0.0
  %2974 = vmatpush1.msra.mxu0 %v2704
  %2975 = vmatprep.subr.mxu0 0.0
  %2976 = vmatpush2.msra.mxu0 0.0
  %2977 = vmatprep.subr.mxu0 0.0
  %2978 = vmatpush2.msra.mxu0 0.0
  %2979 = vmatprep.subr.mxu0 0.0
  %2980 = vmatpush2.msra.mxu0 0.0
  %2981 = vmatprep.subr.mxu0 0.0
  %2982 = vmatpush2.msra.mxu0 0.0
  %2983 = vmatprep.subr.mxu0 0.0
  %2984 = vmatpush2.msra.mxu0 0.0
  %2985 = vmatprep.subr.mxu0 0.0
  %2986 = vmatpush2.msra.mxu0 0.0
  %2987 = vmatprep.subr.mxu0 0.0
  %2988 = vmatpush2.msra.mxu0 0.0
  %2989 = vmatprep.subr.mxu0 0.0
  %2990 = vmatpush2.msra.mxu0 0.0
  %2991 = vmatprep.subr.mxu0 0.0
  %2992 = vmatpush2.msra.mxu0 0.0
  %2993 = vmatprep.subr.mxu0 0.0
  %2994 = vmatpush2.msra.mxu0 0.0
  %2995 = vmatprep.subr.mxu0 0.0
  %2996 = vmatpush2.msra.mxu0 0.0
  %2997 = vmatprep.subr.mxu0 0.0
  %2998 = vmatpush2.msra.mxu0 0.0
  %2999 = vmatprep.subr.mxu0 0.0
  %3000 = vmatpush2.msra.mxu0 0.0
  %3001 = vmatprep.subr.mxu0 0.0
  %3002 = vmatpush2.msra.mxu0 0.0
  %3003 = vmatprep.subr.mxu0 0.0
  %3004 = vmatpush2.msra.mxu0 0.0
  %3005 = vmatprep.subr.mxu0 0.0
  %3006 = vmatpush2.msra.mxu0 0.0
  %3007 = vmatprep.mubr.f32.mxu0 0.0
  %3008 = vmatmul.mubr.f32.gmra.mxu0 %v980
  %v3009 = vpop.f32.mrf.mxu0
  %v3010 = vadd.f32 %v2779, %v3009
  %v3011 = vpop.f32.mrf.mxu0
  %3012 = vmatprep.mubr.f32.mxu0 0.0
  %3013 = vmatmul.mubr.f32.gmra.mxu0 %v982
  %v3014 = vpop.f32.mrf.mxu0
  %v3015 = vadd.f32 %v2784, %v3014
  %v3016 = vpop.f32.mrf.mxu0
  %3017 = vdwg.mxu0
  %v3018 = vadd.f32 %v3010, %v2932
  %v3019 = vadd.f32 %v3015, %v2937
  %v3020 = vadd.f32 %v3018, %v1067
  %v3021 = vadd.f32 %v3019, %v1067
  %v3022 = vmax.f32 %v3020, 0.0
  %v3023 = vmax.f32 %v3021, 0.0
  %v3025 = vsel %vm901, %v3023, 0
  %3027 = vmatprep.subr.mxu0 0.0
  %3028 = vmatpush1.msra.mxu0 0.0
  %3029 = vmatprep.subr.mxu0 0.0
  %3030 = vmatpush1.msra.mxu0 0.0
  %3031 = vmatprep.subr.mxu0 0.0
  %3032 = vmatpush1.msra.mxu0 0.0
  %3033 = vmatprep.subr.mxu0 0.0
  %3034 = vmatpush1.msra.mxu0 0.0
  %3035 = vmatprep.subr.mxu0 0.0
  %3036 = vmatpush1.msra.mxu0 0.0
  %3037 = vmatprep.subr.mxu0 0.0
  %3038 = vmatpush1.msra.mxu0 0.0
  %3039 = vmatprep.subr.mxu0 0.0
  %3040 = vmatpush1.msra.mxu0 0.0
  %3041 = vmatprep.subr.mxu0 0.0
  %3042 = vmatpush1.msra.mxu0 0.0
  %3043 = vmatprep.subr.mxu0 0.0
  %3044 = vmatpush1.msra.mxu0 0.0
  %3045 = vmatprep.subr.mxu0 0.0
  %3046 = vmatpush1.msra.mxu0 0.0
  %3047 = vmatprep.subr.mxu0 0.0
  %3048 = vmatpush1.msra.mxu0 0.0
  %3049 = vmatprep.subr.mxu0 0.0
  %3050 = vmatpush1.msra.mxu0 0.0
  %3051 = vmatprep.subr.mxu0 0.0
  %3052 = vmatpush1.msra.mxu0 0.0
  %3053 = vmatprep.subr.mxu0 0.0
  %3054 = vmatpush1.msra.mxu0 0.0
  %3055 = vmatprep.subr.mxu0 0.0
  %3056 = vmatpush1.msra.mxu0 %v3025
  %3057 = vmatprep.subr.mxu0 0.0
  %3058 = vmatpush1.msra.mxu0 %v3022
  %3059 = vmatprep.subr.mxu0 0.0
  %3060 = vmatpush2.msra.mxu0 0.0
  %3061 = vmatprep.subr.mxu0 0.0
  %3062 = vmatpush2.msra.mxu0 0.0
  %3063 = vmatprep.subr.mxu0 0.0
  %3064 = vmatpush2.msra.mxu0 0.0
  %3065 = vmatprep.subr.mxu0 0.0
  %3066 = vmatpush2.msra.mxu0 0.0
  %3067 = vmatprep.subr.mxu0 0.0
  %3068 = vmatpush2.msra.mxu0 0.0
  %3069 = vmatprep.subr.mxu0 0.0
  %3070 = vmatpush2.msra.mxu0 0.0
  %3071 = vmatprep.subr.mxu0 0.0
  %3072 = vmatpush2.msra.mxu0 0.0
  %3073 = vmatprep.subr.mxu0 0.0
  %3074 = vmatpush2.msra.mxu0 0.0
  %3075 = vmatprep.subr.mxu0 0.0
  %3076 = vmatpush2.msra.mxu0 0.0
  %3077 = vmatprep.subr.mxu0 0.0
  %3078 = vmatpush2.msra.mxu0 0.0
  %3079 = vmatprep.subr.mxu0 0.0
  %3080 = vmatpush2.msra.mxu0 0.0
  %3081 = vmatprep.subr.mxu0 0.0
  %3082 = vmatpush2.msra.mxu0 0.0
  %3083 = vmatprep.subr.mxu0 0.0
  %3084 = vmatpush2.msra.mxu0 0.0
  %3085 = vmatprep.subr.mxu0 0.0
  %3086 = vmatpush2.msra.mxu0 0.0
  %3087 = vmatprep.subr.mxu0 0.0
  %3088 = vmatpush2.msra.mxu0 0.0
  %3089 = vmatprep.subr.mxu0 0.0
  %3090 = vmatpush2.msra.mxu0 0.0
  %3091 = vmatprep.mubr.f32.mxu0 0.0
  %3092 = vmatmul.mubr.f32.gmra.mxu0 %v1093
  %v3093 = vpop.f32.mrf.mxu0
  %v3094 = vadd.f32 %v1075, %v3093
  %v3095 = vpop.f32.mrf.mxu0
  %3096 = vmatprep.mubr.f32.mxu0 0.0
  %3097 = vmatmul.mubr.f32.gmra.mxu0 %v1096
  %v3098 = vpop.f32.mrf.mxu0
  %v3099 = vadd.f32 %v1080, %v3098
  %v3100 = vpop.f32.mrf.mxu0
  %3101 = vmatprep.mubr.f32.mxu0 0.0
  %3102 = vmatmul.mubr.f32.gmra.mxu0 %v1099
  %v3103 = vpop.f32.mrf.mxu0
  %v3104 = vadd.f32 %v1085, %v3103
  %v3105 = vpop.f32.mrf.mxu0
  %3106 = vmatprep.mubr.f32.mxu0 0.0
  %3107 = vmatmul.mubr.f32.gmra.mxu0 %v1102
  %v3108 = vpop.f32.mrf.mxu0
  %v3109 = vadd.f32 %v1090, %v3108
  %v3110 = vpop.f32.mrf.mxu0
  %3111 = vdwg.mxu0
  %s3112 = scalar_lea.vmem %s8, 96
  %3113 = vst.msk [vmem:[%s3112] sm:$0xff] %vm1192, %v3094
  %3114 = vst.msk [vmem:[%s3112 + $0x8] sm:$0xff] %vm1192, %v3099
  %3115 = vst.msk [vmem:[%s3112 + $0x10] sm:$0xff] %vm1192, %v3104
  %3116 = vst.msk [vmem:[%s3112 + $0x18] sm:$0xff] %vm1192, %v3109
  // Predicated region
  $region34: #{signal_reduce_forward.1} parent=0 // pred_check
    _
  $region35: #{signal_reduce_forward.1} parent=0 // pred_check_branch
    %3118 = sbr.rel (0) target = $region37
  $region36: #{signal_reduce_forward.1} parent=0 // pred_region
    _
  $region37: #{signal_reduce_forward.1} parent=0 // pred_fallthru
    _
  // Predicated region
  $region38: #{signal_reduce_forward.1} parent=0 // pred_check
    _
  $region39: #{signal_reduce_forward.1} parent=0 // pred_check_branch
    %3120 = sbr.rel (0) target = $region41
  $region40: #{signal_reduce_forward.1} parent=0 // pred_region
    _
  $region41: #{signal_reduce_forward.1} parent=0 // pred_fallthru
    _

</llo_original>
